<compile_context>
chip_gen: v5e
topology: v5e:2x2
jax: 0.10.0
libtpu: 0.0.40
codegen_flags: <defaults>
</compile_context>

<pallas_src>
from functools import partial

import numpy as np
import jax
import jax.numpy as jnp
from jax import lax
from jax.experimental import pallas as pl
from jax.experimental.pallas import tpu as pltpu


def _lstm_fc_kernel(x_ref, mask_ref,
                    wih0_ref, whh0_ref, b0_ref,
                    w1_ref, b1_ref,
                    wfc_ref, bfc_ref,
                    pred_ref,
                    g0_ref, hs_ref,
                    *, seq_len, batch):
    """Whole stacked-LSTM + FC head in one invocation (time-major, flattened).

    Shapes (all f32):
      x_ref    : (S*B, D)      time-major flattened input
      mask_ref : (S*B, 1)      1.0 where t < lengths[b] else 0.0
      wih0_ref : (D, 4H)   whh0_ref : (H, 4H)   b0_ref : (1, 4H)
      w1_ref   : (2H, 4H)  == [W_ih1 ; W_hh1]   b1_ref : (1, 4H)
      wfc_ref  : (H, O)    bfc_ref  : (1, O)
      pred_ref : (S*B, O)
      g0_ref   : (S*B, 4H) scratch — precomputed layer-0 input projection
      hs_ref   : (S*B, H)  scratch — layer-1 hidden states (lane-dense)
    PyTorch LSTM gate order: i, f, g, o.
    """
    S, B = seq_len, batch
    H = whh0_ref.shape[0]

    # ---- Prologue: layer-0 input projection for every time step at once ----
    g0_ref[...] = (jnp.dot(x_ref[...], wih0_ref[...],
                           preferred_element_type=jnp.float32)
                   + b0_ref[...])

    # Hoist the layer-1 bias broadcast out of the unrolled recurrence
    # (JAX does not CSE broadcast_in_dim inside unrolled loops).
    b1 = jnp.broadcast_to(b1_ref[...], (B, 4 * H))

    def gate_act(g):
        i = jax.nn.sigmoid(g[:, 0 * H:1 * H])
        f = jax.nn.sigmoid(g[:, 1 * H:2 * H])
        c_in = jnp.tanh(g[:, 2 * H:3 * H])
        o = jax.nn.sigmoid(g[:, 3 * H:4 * H])
        return i, f, c_in, o

    def step(t, carry):
        h1, c1, h2, c2 = carry

        # Layer 0: only the recurrent matmul is on the serial chain; the input
        # part (incl. bias) was precomputed in the prologue.
        g0 = g0_ref[pl.ds(t * B, B), :] + jnp.dot(
            h1, whh0_ref[...], preferred_element_type=jnp.float32)
        i0, f0, ci0, o0 = gate_act(g0)
        c1 = f0 * c1 + i0 * ci0
        h1 = o0 * jnp.tanh(c1)

        # Layer 1: fused [h1_t ; h2_{t-1}] @ [W_ih1 ; W_hh1].
        g1 = jnp.dot(jnp.concatenate([h1, h2], axis=1), w1_ref[...],
                     preferred_element_type=jnp.float32) + b1
        i1, f1, ci1, o1 = gate_act(g1)
        c2 = f1 * c2 + i1 * ci1
        h2 = o1 * jnp.tanh(c2)

        # Lane-dense (B, 128) store of the layer-1 hidden state for step t.
        hs_ref[pl.ds(t * B, B), :] = h2
        return (h1, c1, h2, c2)

    z = jnp.zeros((B, H), jnp.float32)
    lax.fori_loop(0, S, step, (z, z, z, z), unroll=True)

    # ---- Epilogue: pad_packed zero-padding + FC head, one matmul ----
    # pad_packed_sequence zeroes positions t >= lengths[b]; the FC layer is
    # then applied to those zero rows (giving just its bias), exactly as
    # `self.fc(output.view(b*s, -1))` does in the PyTorch module.
    masked = hs_ref[...] * mask_ref[...]                    # (S*B, H) * (S*B, 1)
    pred_ref[...] = (jnp.dot(masked, wfc_ref[...],
                             preferred_element_type=jnp.float32)
                     + bfc_ref[...])


def lstm_forward(x_bsd, lengths, params):
    """x_bsd: (B, S, D_in) float32, lengths: (B,) int32 -> (B, S, O) float32."""
    B, S, D = x_bsd.shape
    H = params["whh0"].shape[0]
    O = params["wfc"].shape[1]

    # Time-major, flattened: row t*B + b == x[b, t, :].
    x_flat = jnp.transpose(x_bsd, (1, 0, 2)).reshape(S * B, D)
    mask = (jnp.arange(S)[:, None] < lengths[None, :]).astype(jnp.float32)
    mask_flat = mask.reshape(S * B, 1)

    # Pre-stack layer-1 weights so the kernel does one fused (B,2H)@(2H,4H).
    w1 = jnp.concatenate([params["wih1"], params["whh1"]], axis=0)  # (2H, 4H)

    vmem = pl.BlockSpec(memory_space=pltpu.MemorySpace.VMEM)
    pred_flat = pl.pallas_call(
        partial(_lstm_fc_kernel, seq_len=S, batch=B),
        out_shape=jax.ShapeDtypeStruct((S * B, O), jnp.float32),
        in_specs=[vmem] * 9,
        out_specs=vmem,
        scratch_shapes=[
            pltpu.VMEM((S * B, 4 * H), jnp.float32),   # g0: input projections
            pltpu.VMEM((S * B, H), jnp.float32),       # hs: layer-1 hiddens
        ],
    )(x_flat, mask_flat,
      params["wih0"], params["whh0"], params["b0"],
      w1, params["b1"],
      params["wfc"], params["bfc"])

    return jnp.transpose(pred_flat.reshape(S, B, O), (1, 0, 2))    # (B, S, O)


def lstm_reference(x_bsd, lengths, params):
    """Pure-JAX reference matching PyTorch packed-LSTM + FC semantics."""
    B, S, D = x_bsd.shape
    H = params["whh0"].shape[0]
    x = jnp.transpose(x_bsd, (1, 0, 2))                            # (S, B, D)

    def cell(x_t, h, c, wih, whh, b):
        g = x_t @ wih + h @ whh + b
        i = jax.nn.sigmoid(g[:, 0 * H:1 * H])
        f = jax.nn.sigmoid(g[:, 1 * H:2 * H])
        gg = jnp.tanh(g[:, 2 * H:3 * H])
        o = jax.nn.sigmoid(g[:, 3 * H:4 * H])
        c = f * c + i * gg
        h = o * jnp.tanh(c)
        return h, c

    def step(carry, x_t):
        h1, c1, h2, c2 = carry
        h1, c1 = cell(x_t, h1, c1, params["wih0"], params["whh0"], params["b0"])
        h2, c2 = cell(h1, h2, c2, params["wih1"], params["whh1"], params["b1"])
        return (h1, c1, h2, c2), h2

    z = jnp.zeros((B, H), jnp.float32)
    _, hs = lax.scan(step, (z, z, z, z), x)                        # (S, B, H)
    mask = (jnp.arange(S)[:, None] < lengths[None, :]).astype(jnp.float32)
    hs = hs * mask[:, :, None]
    pred = hs @ params["wfc"] + params["bfc"]                      # (S, B, O)
    return jnp.transpose(pred, (1, 0, 2))


def init_params(key, input_size, hidden_size, output_size):
    """Deterministic PyTorch-style uniform(-1/sqrt(H), 1/sqrt(H)) init."""
    k = 1.0 / np.sqrt(hidden_size)
    keys = jax.random.split(key, 12)
    u = lambda kk, shp: jax.random.uniform(kk, shp, jnp.float32, -k, k)
    H, D, O = hidden_size, input_size, output_size
    # nn.LSTM parameters, pre-transposed to (in, 4H); biases combined.
    wih0 = u(keys[0], (4 * H, D)).T
    whh0 = u(keys[1], (4 * H, H)).T
    b0 = (u(keys[2], (4 * H,)) + u(keys[3], (4 * H,)))[None, :]
    wih1 = u(keys[4], (4 * H, H)).T
    whh1 = u(keys[5], (4 * H, H)).T
    b1 = (u(keys[6], (4 * H,)) + u(keys[7], (4 * H,)))[None, :]
    # nn.Linear(H, O), pre-transposed to (H, O).
    kf = 1.0 / np.sqrt(H)
    wfc = jax.random.uniform(keys[8], (O, H), jnp.float32, -kf, kf).T
    bfc = jax.random.uniform(keys[9], (O,), jnp.float32, -kf, kf)[None, :]
    return dict(wih0=wih0, whh0=whh0, b0=b0,
                wih1=wih1, whh1=whh1, b1=b1,
                wfc=wfc, bfc=bfc)


if __name__ == "__main__":
    # Small shapes consistent with the module (scaled-down LSTM dims).
    B, S, D_IN, HIDDEN, OUT = 2, 8, 64, 128, 27
    key = jax.random.PRNGKey(0)
    k_x, k_p = jax.random.split(key)

    x = jax.random.normal(k_x, (B, S, D_IN), jnp.float32)
    # max(lengths) == S so pad_packed_sequence pads back to full seq length
    # (required for the `.view(b * s, -1)` in the PyTorch forward to be valid).
    lengths = jnp.array([S, 5], dtype=jnp.int32)
    params = init_params(k_p, D_IN, HIDDEN, OUT)

    pred = jax.block_until_ready(lstm_forward(x, lengths, params))
    ref = jax.block_until_ready(lstm_reference(x, lengths, params))

    assert pred.shape == (B, S, OUT), pred.shape
    np.testing.assert_allclose(np.asarray(pred), np.asarray(ref),
                               rtol=1e-4, atol=1e-4)
    print("KERNEL_OK")
</pallas_src>

<mosaic_0001>
module attributes {stable_mosaic.version = 11 : i64} {
  func.func @_lstm_fc_kernel(%arg0: memref<16x64xf32, #tpu.memory_space<vmem>>, %arg1: memref<16x1xf32, #tpu.memory_space<vmem>>, %arg2: memref<64x512xf32, #tpu.memory_space<vmem>>, %arg3: memref<128x512xf32, #tpu.memory_space<vmem>>, %arg4: memref<1x512xf32, #tpu.memory_space<vmem>>, %arg5: memref<256x512xf32, #tpu.memory_space<vmem>>, %arg6: memref<1x512xf32, #tpu.memory_space<vmem>>, %arg7: memref<128x27xf32, #tpu.memory_space<vmem>>, %arg8: memref<1x27xf32, #tpu.memory_space<vmem>>, %arg9: memref<16x27xf32, #tpu.memory_space<vmem>>, %arg10: memref<16x512xf32, #tpu.memory_space<vmem>>, %arg11: memref<16x128xf32, #tpu.memory_space<vmem>>) attributes {dimension_semantics = [], scalar_prefetch = 0 : i64, scratch_operands = 2 : i64, tpu.core_type = #tpu.core_type<tc>} {
    %c0 = arith.constant 0 : index
    %c0_0 = arith.constant 0 : index
    %0 = vector.load %arg0[%c0, %c0_0] : memref<16x64xf32, #tpu.memory_space<vmem>>, vector<16x64xf32>
    %c0_1 = arith.constant 0 : index
    %c0_2 = arith.constant 0 : index
    %1 = vector.load %arg2[%c0_1, %c0_2] : memref<64x512xf32, #tpu.memory_space<vmem>>, vector<64x512xf32>
    %cst = arith.constant dense<0.000000e+00> : vector<16x512xf32>
    %2 = tpu.matmul %0, %1, %cst {dimension_numbers = #tpu.dot_dimension_numbers<[1], [0], [0], [1], [0, 0, 1, 1], [], []>} : vector<16x64xf32>, vector<64x512xf32>, vector<16x512xf32> -> vector<16x512xf32>
    %c0_3 = arith.constant 0 : index
    %c0_4 = arith.constant 0 : index
    %3 = vector.load %arg4[%c0_3, %c0_4] : memref<1x512xf32, #tpu.memory_space<vmem>>, vector<1x512xf32>
    %4 = vector.broadcast %3 : vector<1x512xf32> to vector<16x512xf32>
    %5 = arith.addf %2, %4 : vector<16x512xf32>
    %c0_5 = arith.constant 0 : index
    %c0_6 = arith.constant 0 : index
    %6 = vector.load %arg10[%c0_5, %c0_6] : memref<16x512xf32, #tpu.memory_space<vmem>>, vector<16x512xf32>
    tpu.vector_store %arg10[%c0_5, %c0_6], %5 {strides = array<i32>} : memref<16x512xf32, #tpu.memory_space<vmem>>, vector<16x512xf32>,
    %c0_7 = arith.constant 0 : index
    %c0_8 = arith.constant 0 : index
    %7 = vector.load %arg6[%c0_7, %c0_8] : memref<1x512xf32, #tpu.memory_space<vmem>>, vector<1x512xf32>
    %8 = vector.shape_cast %7 : vector<1x512xf32> to vector<1x512xf32>
    %9 = vector.broadcast %8 : vector<1x512xf32> to vector<2x512xf32>
    %cst_9 = arith.constant 0.000000e+00 : f32
    %10 = vector.broadcast %cst_9 : f32 to vector<2x128xf32>
    %c0_i32 = arith.constant 0 : i32
    %c2_i32 = arith.constant 2 : i32
    %11 = arith.muli %c0_i32, %c2_i32 : i32
    %12 = arith.index_cast %11 : i32 to index
    %c0_10 = arith.constant 0 : index
    %13 = vector.load %arg10[%12, %c0_10] : memref<16x512xf32, #tpu.memory_space<vmem>>, vector<2x512xf32>
    %c0_11 = arith.constant 0 : index
    %c0_12 = arith.constant 0 : index
    %14 = vector.load %arg3[%c0_11, %c0_12] : memref<128x512xf32, #tpu.memory_space<vmem>>, vector<128x512xf32>
    %cst_13 = arith.constant dense<0.000000e+00> : vector<2x512xf32>
    %15 = tpu.matmul %10, %14, %cst_13 {dimension_numbers = #tpu.dot_dimension_numbers<[1], [0], [0], [1], [0, 0, 1, 1], [], []>} : vector<2x128xf32>, vector<128x512xf32>, vector<2x512xf32> -> vector<2x512xf32>
    %16 = arith.addf %13, %15 : vector<2x512xf32>
    %17 = vector.extract_strided_slice %16 {offsets = [0, 0], sizes = [2, 128], strides = [1, 1]} : vector<2x512xf32> to vector<2x128xf32>
    %18 = arith.negf %17 : vector<2x128xf32>
    %19 = math.exp %18 : vector<2x128xf32>
    %cst_14 = arith.constant 1.000000e+00 : f32
    %20 = vector.broadcast %cst_14 : f32 to vector<2x128xf32>
    %21 = arith.addf %20, %19 : vector<2x128xf32>
    %22 = arith.divf %20, %21 : vector<2x128xf32>
    %23 = vector.extract_strided_slice %16 {offsets = [0, 128], sizes = [2, 128], strides = [1, 1]} : vector<2x512xf32> to vector<2x128xf32>
    %24 = arith.negf %23 : vector<2x128xf32>
    %25 = math.exp %24 : vector<2x128xf32>
    %cst_15 = arith.constant 1.000000e+00 : f32
    %26 = vector.broadcast %cst_15 : f32 to vector<2x128xf32>
    %27 = arith.addf %26, %25 : vector<2x128xf32>
    %28 = arith.divf %26, %27 : vector<2x128xf32>
    %29 = vector.extract_strided_slice %16 {offsets = [0, 256], sizes = [2, 128], strides = [1, 1]} : vector<2x512xf32> to vector<2x128xf32>
    %30 = math.tanh %29 : vector<2x128xf32>
    %31 = vector.extract_strided_slice %16 {offsets = [0, 384], sizes = [2, 128], strides = [1, 1]} : vector<2x512xf32> to vector<2x128xf32>
    %32 = arith.negf %31 : vector<2x128xf32>
    %33 = math.exp %32 : vector<2x128xf32>
    %cst_16 = arith.constant 1.000000e+00 : f32
    %34 = vector.broadcast %cst_16 : f32 to vector<2x128xf32>
    %35 = arith.addf %34, %33 : vector<2x128xf32>
    %36 = arith.divf %34, %35 : vector<2x128xf32>
    %37 = arith.mulf %28, %10 : vector<2x128xf32>
    %38 = arith.mulf %22, %30 : vector<2x128xf32>
    %39 = arith.addf %37, %38 : vector<2x128xf32>
    %40 = math.tanh %39 : vector<2x128xf32>
    %41 = arith.mulf %36, %40 : vector<2x128xf32>
    %42 = tpu.concatenate %41, %10 in 1 : vector<2x128xf32>, vector<2x128xf32> -> vector<2x256xf32>
    %c0_17 = arith.constant 0 : index
    %c0_18 = arith.constant 0 : index
    %43 = vector.load %arg5[%c0_17, %c0_18] : memref<256x512xf32, #tpu.memory_space<vmem>>, vector<256x512xf32>
    %cst_19 = arith.constant dense<0.000000e+00> : vector<2x512xf32>
    %44 = tpu.matmul %42, %43, %cst_19 {dimension_numbers = #tpu.dot_dimension_numbers<[1], [0], [0], [1], [0, 0, 1, 1], [], []>} : vector<2x256xf32>, vector<256x512xf32>, vector<2x512xf32> -> vector<2x512xf32>
    %45 = arith.addf %44, %9 : vector<2x512xf32>
    %46 = vector.extract_strided_slice %45 {offsets = [0, 0], sizes = [2, 128], strides = [1, 1]} : vector<2x512xf32> to vector<2x128xf32>
    %47 = arith.negf %46 : vector<2x128xf32>
    %48 = math.exp %47 : vector<2x128xf32>
    %cst_20 = arith.constant 1.000000e+00 : f32
    %49 = vector.broadcast %cst_20 : f32 to vector<2x128xf32>
    %50 = arith.addf %49, %48 : vector<2x128xf32>
    %51 = arith.divf %49, %50 : vector<2x128xf32>
    %52 = vector.extract_strided_slice %45 {offsets = [0, 128], sizes = [2, 128], strides = [1, 1]} : vector<2x512xf32> to vector<2x128xf32>
    %53 = arith.negf %52 : vector<2x128xf32>
    %54 = math.exp %53 : vector<2x128xf32>
    %cst_21 = arith.constant 1.000000e+00 : f32
    %55 = vector.broadcast %cst_21 : f32 to vector<2x128xf32>
    %56 = arith.addf %55, %54 : vector<2x128xf32>
    %57 = arith.divf %55, %56 : vector<2x128xf32>
    %58 = vector.extract_strided_slice %45 {offsets = [0, 256], sizes = [2, 128], strides = [1, 1]} : vector<2x512xf32> to vector<2x128xf32>
    %59 = math.tanh %58 : vector<2x128xf32>
    %60 = vector.extract_strided_slice %45 {offsets = [0, 384], sizes = [2, 128], strides = [1, 1]} : vector<2x512xf32> to vector<2x128xf32>
    %61 = arith.negf %60 : vector<2x128xf32>
    %62 = math.exp %61 : vector<2x128xf32>
    %cst_22 = arith.constant 1.000000e+00 : f32
    %63 = vector.broadcast %cst_22 : f32 to vector<2x128xf32>
    %64 = arith.addf %63, %62 : vector<2x128xf32>
    %65 = arith.divf %63, %64 : vector<2x128xf32>
    %66 = arith.mulf %57, %10 : vector<2x128xf32>
    %67 = arith.mulf %51, %59 : vector<2x128xf32>
    %68 = arith.addf %66, %67 : vector<2x128xf32>
    %69 = math.tanh %68 : vector<2x128xf32>
    %70 = arith.mulf %65, %69 : vector<2x128xf32>
    %c2_i32_23 = arith.constant 2 : i32
    %71 = arith.muli %c0_i32, %c2_i32_23 : i32
    %72 = arith.index_cast %71 : i32 to index
    %c0_24 = arith.constant 0 : index
    %73 = vector.load %arg11[%72, %c0_24] : memref<16x128xf32, #tpu.memory_space<vmem>>, vector<2x128xf32>
    tpu.vector_store %arg11[%72, %c0_24], %70 {strides = array<i32>} : memref<16x128xf32, #tpu.memory_space<vmem>>, vector<2x128xf32>,
    %c1_i32 = arith.constant 1 : i32
    %c2_i32_25 = arith.constant 2 : i32
    %74 = arith.muli %c1_i32, %c2_i32_25 : i32
    %75 = arith.index_cast %74 : i32 to index
    %c0_26 = arith.constant 0 : index
    %76 = vector.load %arg10[%75, %c0_26] : memref<16x512xf32, #tpu.memory_space<vmem>>, vector<2x512xf32>
    %c0_27 = arith.constant 0 : index
    %c0_28 = arith.constant 0 : index
    %77 = vector.load %arg3[%c0_27, %c0_28] : memref<128x512xf32, #tpu.memory_space<vmem>>, vector<128x512xf32>
    %cst_29 = arith.constant dense<0.000000e+00> : vector<2x512xf32>
    %78 = tpu.matmul %41, %77, %cst_29 {dimension_numbers = #tpu.dot_dimension_numbers<[1], [0], [0], [1], [0, 0, 1, 1], [], []>} : vector<2x128xf32>, vector<128x512xf32>, vector<2x512xf32> -> vector<2x512xf32>
    %79 = arith.addf %76, %78 : vector<2x512xf32>
    %80 = vector.extract_strided_slice %79 {offsets = [0, 0], sizes = [2, 128], strides = [1, 1]} : vector<2x512xf32> to vector<2x128xf32>
    %81 = arith.negf %80 : vector<2x128xf32>
    %82 = math.exp %81 : vector<2x128xf32>
    %cst_30 = arith.constant 1.000000e+00 : f32
    %83 = vector.broadcast %cst_30 : f32 to vector<2x128xf32>
    %84 = arith.addf %83, %82 : vector<2x128xf32>
    %85 = arith.divf %83, %84 : vector<2x128xf32>
    %86 = vector.extract_strided_slice %79 {offsets = [0, 128], sizes = [2, 128], strides = [1, 1]} : vector<2x512xf32> to vector<2x128xf32>
    %87 = arith.negf %86 : vector<2x128xf32>
    %88 = math.exp %87 : vector<2x128xf32>
    %cst_31 = arith.constant 1.000000e+00 : f32
    %89 = vector.broadcast %cst_31 : f32 to vector<2x128xf32>
    %90 = arith.addf %89, %88 : vector<2x128xf32>
    %91 = arith.divf %89, %90 : vector<2x128xf32>
    %92 = vector.extract_strided_slice %79 {offsets = [0, 256], sizes = [2, 128], strides = [1, 1]} : vector<2x512xf32> to vector<2x128xf32>
    %93 = math.tanh %92 : vector<2x128xf32>
    %94 = vector.extract_strided_slice %79 {offsets = [0, 384], sizes = [2, 128], strides = [1, 1]} : vector<2x512xf32> to vector<2x128xf32>
    %95 = arith.negf %94 : vector<2x128xf32>
    %96 = math.exp %95 : vector<2x128xf32>
    %cst_32 = arith.constant 1.000000e+00 : f32
    %97 = vector.broadcast %cst_32 : f32 to vector<2x128xf32>
    %98 = arith.addf %97, %96 : vector<2x128xf32>
    %99 = arith.divf %97, %98 : vector<2x128xf32>
    %100 = arith.mulf %91, %39 : vector<2x128xf32>
    %101 = arith.mulf %85, %93 : vector<2x128xf32>
    %102 = arith.addf %100, %101 : vector<2x128xf32>
    %103 = math.tanh %102 : vector<2x128xf32>
    %104 = arith.mulf %99, %103 : vector<2x128xf32>
    %105 = tpu.concatenate %104, %70 in 1 : vector<2x128xf32>, vector<2x128xf32> -> vector<2x256xf32>
    %c0_33 = arith.constant 0 : index
    %c0_34 = arith.constant 0 : index
    %106 = vector.load %arg5[%c0_33, %c0_34] : memref<256x512xf32, #tpu.memory_space<vmem>>, vector<256x512xf32>
    %cst_35 = arith.constant dense<0.000000e+00> : vector<2x512xf32>
    %107 = tpu.matmul %105, %106, %cst_35 {dimension_numbers = #tpu.dot_dimension_numbers<[1], [0], [0], [1], [0, 0, 1, 1], [], []>} : vector<2x256xf32>, vector<256x512xf32>, vector<2x512xf32> -> vector<2x512xf32>
    %108 = arith.addf %107, %9 : vector<2x512xf32>
    %109 = vector.extract_strided_slice %108 {offsets = [0, 0], sizes = [2, 128], strides = [1, 1]} : vector<2x512xf32> to vector<2x128xf32>
    %110 = arith.negf %109 : vector<2x128xf32>
    %111 = math.exp %110 : vector<2x128xf32>
    %cst_36 = arith.constant 1.000000e+00 : f32
    %112 = vector.broadcast %cst_36 : f32 to vector<2x128xf32>
    %113 = arith.addf %112, %111 : vector<2x128xf32>
    %114 = arith.divf %112, %113 : vector<2x128xf32>
    %115 = vector.extract_strided_slice %108 {offsets = [0, 128], sizes = [2, 128], strides = [1, 1]} : vector<2x512xf32> to vector<2x128xf32>
    %116 = arith.negf %115 : vector<2x128xf32>
    %117 = math.exp %116 : vector<2x128xf32>
    %cst_37 = arith.constant 1.000000e+00 : f32
    %118 = vector.broadcast %cst_37 : f32 to vector<2x128xf32>
    %119 = arith.addf %118, %117 : vector<2x128xf32>
    %120 = arith.divf %118, %119 : vector<2x128xf32>
    %121 = vector.extract_strided_slice %108 {offsets = [0, 256], sizes = [2, 128], strides = [1, 1]} : vector<2x512xf32> to vector<2x128xf32>
    %122 = math.tanh %121 : vector<2x128xf32>
    %123 = vector.extract_strided_slice %108 {offsets = [0, 384], sizes = [2, 128], strides = [1, 1]} : vector<2x512xf32> to vector<2x128xf32>
    %124 = arith.negf %123 : vector<2x128xf32>
    %125 = math.exp %124 : vector<2x128xf32>
    %cst_38 = arith.constant 1.000000e+00 : f32
    %126 = vector.broadcast %cst_38 : f32 to vector<2x128xf32>
    %127 = arith.addf %126, %125 : vector<2x128xf32>
    %128 = arith.divf %126, %127 : vector<2x128xf32>
    %129 = arith.mulf %120, %68 : vector<2x128xf32>
    %130 = arith.mulf %114, %122 : vector<2x128xf32>
    %131 = arith.addf %129, %130 : vector<2x128xf32>
    %132 = math.tanh %131 : vector<2x128xf32>
    %133 = arith.mulf %128, %132 : vector<2x128xf32>
    %c2_i32_39 = arith.constant 2 : i32
    %134 = arith.muli %c1_i32, %c2_i32_39 : i32
    %135 = arith.index_cast %134 : i32 to index
    %c0_40 = arith.constant 0 : index
    %136 = vector.load %arg11[%135, %c0_40] : memref<16x128xf32, #tpu.memory_space<vmem>>, vector<2x128xf32>
    tpu.vector_store %arg11[%135, %c0_40], %133 {strides = array<i32>} : memref<16x128xf32, #tpu.memory_space<vmem>>, vector<2x128xf32>,
    %c2_i32_41 = arith.constant 2 : i32
    %c2_i32_42 = arith.constant 2 : i32
    %137 = arith.muli %c2_i32_41, %c2_i32_42 : i32
    %138 = arith.index_cast %137 : i32 to index
    %c0_43 = arith.constant 0 : index
    %139 = vector.load %arg10[%138, %c0_43] : memref<16x512xf32, #tpu.memory_space<vmem>>, vector<2x512xf32>
    %c0_44 = arith.constant 0 : index
    %c0_45 = arith.constant 0 : index
    %140 = vector.load %arg3[%c0_44, %c0_45] : memref<128x512xf32, #tpu.memory_space<vmem>>, vector<128x512xf32>
    %cst_46 = arith.constant dense<0.000000e+00> : vector<2x512xf32>
    %141 = tpu.matmul %104, %140, %cst_46 {dimension_numbers = #tpu.dot_dimension_numbers<[1], [0], [0], [1], [0, 0, 1, 1], [], []>} : vector<2x128xf32>, vector<128x512xf32>, vector<2x512xf32> -> vector<2x512xf32>
    %142 = arith.addf %139, %141 : vector<2x512xf32>
    %143 = vector.extract_strided_slice %142 {offsets = [0, 0], sizes = [2, 128], strides = [1, 1]} : vector<2x512xf32> to vector<2x128xf32>
    %144 = arith.negf %143 : vector<2x128xf32>
    %145 = math.exp %144 : vector<2x128xf32>
    %cst_47 = arith.constant 1.000000e+00 : f32
    %146 = vector.broadcast %cst_47 : f32 to vector<2x128xf32>
    %147 = arith.addf %146, %145 : vector<2x128xf32>
    %148 = arith.divf %146, %147 : vector<2x128xf32>
    %149 = vector.extract_strided_slice %142 {offsets = [0, 128], sizes = [2, 128], strides = [1, 1]} : vector<2x512xf32> to vector<2x128xf32>
    %150 = arith.negf %149 : vector<2x128xf32>
    %151 = math.exp %150 : vector<2x128xf32>
    %cst_48 = arith.constant 1.000000e+00 : f32
    %152 = vector.broadcast %cst_48 : f32 to vector<2x128xf32>
    %153 = arith.addf %152, %151 : vector<2x128xf32>
    %154 = arith.divf %152, %153 : vector<2x128xf32>
    %155 = vector.extract_strided_slice %142 {offsets = [0, 256], sizes = [2, 128], strides = [1, 1]} : vector<2x512xf32> to vector<2x128xf32>
    %156 = math.tanh %155 : vector<2x128xf32>
    %157 = vector.extract_strided_slice %142 {offsets = [0, 384], sizes = [2, 128], strides = [1, 1]} : vector<2x512xf32> to vector<2x128xf32>
    %158 = arith.negf %157 : vector<2x128xf32>
    %159 = math.exp %158 : vector<2x128xf32>
    %cst_49 = arith.constant 1.000000e+00 : f32
    %160 = vector.broadcast %cst_49 : f32 to vector<2x128xf32>
    %161 = arith.addf %160, %159 : vector<2x128xf32>
    %162 = arith.divf %160, %161 : vector<2x128xf32>
    %163 = arith.mulf %154, %102 : vector<2x128xf32>
    %164 = arith.mulf %148, %156 : vector<2x128xf32>
    %165 = arith.addf %163, %164 : vector<2x128xf32>
    %166 = math.tanh %165 : vector<2x128xf32>
    %167 = arith.mulf %162, %166 : vector<2x128xf32>
    %168 = tpu.concatenate %167, %133 in 1 : vector<2x128xf32>, vector<2x128xf32> -> vector<2x256xf32>
    %c0_50 = arith.constant 0 : index
    %c0_51 = arith.constant 0 : index
    %169 = vector.load %arg5[%c0_50, %c0_51] : memref<256x512xf32, #tpu.memory_space<vmem>>, vector<256x512xf32>
    %cst_52 = arith.constant dense<0.000000e+00> : vector<2x512xf32>
    %170 = tpu.matmul %168, %169, %cst_52 {dimension_numbers = #tpu.dot_dimension_numbers<[1], [0], [0], [1], [0, 0, 1, 1], [], []>} : vector<2x256xf32>, vector<256x512xf32>, vector<2x512xf32> -> vector<2x512xf32>
    %171 = arith.addf %170, %9 : vector<2x512xf32>
    %172 = vector.extract_strided_slice %171 {offsets = [0, 0], sizes = [2, 128], strides = [1, 1]} : vector<2x512xf32> to vector<2x128xf32>
    %173 = arith.negf %172 : vector<2x128xf32>
    %174 = math.exp %173 : vector<2x128xf32>
    %cst_53 = arith.constant 1.000000e+00 : f32
    %175 = vector.broadcast %cst_53 : f32 to vector<2x128xf32>
    %176 = arith.addf %175, %174 : vector<2x128xf32>
    %177 = arith.divf %175, %176 : vector<2x128xf32>
    %178 = vector.extract_strided_slice %171 {offsets = [0, 128], sizes = [2, 128], strides = [1, 1]} : vector<2x512xf32> to vector<2x128xf32>
    %179 = arith.negf %178 : vector<2x128xf32>
    %180 = math.exp %179 : vector<2x128xf32>
    %cst_54 = arith.constant 1.000000e+00 : f32
    %181 = vector.broadcast %cst_54 : f32 to vector<2x128xf32>
    %182 = arith.addf %181, %180 : vector<2x128xf32>
    %183 = arith.divf %181, %182 : vector<2x128xf32>
    %184 = vector.extract_strided_slice %171 {offsets = [0, 256], sizes = [2, 128], strides = [1, 1]} : vector<2x512xf32> to vector<2x128xf32>
    %185 = math.tanh %184 : vector<2x128xf32>
    %186 = vector.extract_strided_slice %171 {offsets = [0, 384], sizes = [2, 128], strides = [1, 1]} : vector<2x512xf32> to vector<2x128xf32>
    %187 = arith.negf %186 : vector<2x128xf32>
    %188 = math.exp %187 : vector<2x128xf32>
    %cst_55 = arith.constant 1.000000e+00 : f32
    %189 = vector.broadcast %cst_55 : f32 to vector<2x128xf32>
    %190 = arith.addf %189, %188 : vector<2x128xf32>
    %191 = arith.divf %189, %190 : vector<2x128xf32>
    %192 = arith.mulf %183, %131 : vector<2x128xf32>
    %193 = arith.mulf %177, %185 : vector<2x128xf32>
    %194 = arith.addf %192, %193 : vector<2x128xf32>
    %195 = math.tanh %194 : vector<2x128xf32>
    %196 = arith.mulf %191, %195 : vector<2x128xf32>
    %c2_i32_56 = arith.constant 2 : i32
    %197 = arith.muli %c2_i32_41, %c2_i32_56 : i32
    %198 = arith.index_cast %197 : i32 to index
    %c0_57 = arith.constant 0 : index
    %199 = vector.load %arg11[%198, %c0_57] : memref<16x128xf32, #tpu.memory_space<vmem>>, vector<2x128xf32>
    tpu.vector_store %arg11[%198, %c0_57], %196 {strides = array<i32>} : memref<16x128xf32, #tpu.memory_space<vmem>>, vector<2x128xf32>,
    %c3_i32 = arith.constant 3 : i32
    %c2_i32_58 = arith.constant 2 : i32
    %200 = arith.muli %c3_i32, %c2_i32_58 : i32
    %201 = arith.index_cast %200 : i32 to index
    %c0_59 = arith.constant 0 : index
    %202 = vector.load %arg10[%201, %c0_59] : memref<16x512xf32, #tpu.memory_space<vmem>>, vector<2x512xf32>
    %c0_60 = arith.constant 0 : index
    %c0_61 = arith.constant 0 : index
    %203 = vector.load %arg3[%c0_60, %c0_61] : memref<128x512xf32, #tpu.memory_space<vmem>>, vector<128x512xf32>
    %cst_62 = arith.constant dense<0.000000e+00> : vector<2x512xf32>
    %204 = tpu.matmul %167, %203, %cst_62 {dimension_numbers = #tpu.dot_dimension_numbers<[1], [0], [0], [1], [0, 0, 1, 1], [], []>} : vector<2x128xf32>, vector<128x512xf32>, vector<2x512xf32> -> vector<2x512xf32>
    %205 = arith.addf %202, %204 : vector<2x512xf32>
    %206 = vector.extract_strided_slice %205 {offsets = [0, 0], sizes = [2, 128], strides = [1, 1]} : vector<2x512xf32> to vector<2x128xf32>
    %207 = arith.negf %206 : vector<2x128xf32>
    %208 = math.exp %207 : vector<2x128xf32>
    %cst_63 = arith.constant 1.000000e+00 : f32
    %209 = vector.broadcast %cst_63 : f32 to vector<2x128xf32>
    %210 = arith.addf %209, %208 : vector<2x128xf32>
    %211 = arith.divf %209, %210 : vector<2x128xf32>
    %212 = vector.extract_strided_slice %205 {offsets = [0, 128], sizes = [2, 128], strides = [1, 1]} : vector<2x512xf32> to vector<2x128xf32>
    %213 = arith.negf %212 : vector<2x128xf32>
    %214 = math.exp %213 : vector<2x128xf32>
    %cst_64 = arith.constant 1.000000e+00 : f32
    %215 = vector.broadcast %cst_64 : f32 to vector<2x128xf32>
    %216 = arith.addf %215, %214 : vector<2x128xf32>
    %217 = arith.divf %215, %216 : vector<2x128xf32>
    %218 = vector.extract_strided_slice %205 {offsets = [0, 256], sizes = [2, 128], strides = [1, 1]} : vector<2x512xf32> to vector<2x128xf32>
    %219 = math.tanh %218 : vector<2x128xf32>
    %220 = vector.extract_strided_slice %205 {offsets = [0, 384], sizes = [2, 128], strides = [1, 1]} : vector<2x512xf32> to vector<2x128xf32>
    %221 = arith.negf %220 : vector<2x128xf32>
    %222 = math.exp %221 : vector<2x128xf32>
    %cst_65 = arith.constant 1.000000e+00 : f32
    %223 = vector.broadcast %cst_65 : f32 to vector<2x128xf32>
    %224 = arith.addf %223, %222 : vector<2x128xf32>
    %225 = arith.divf %223, %224 : vector<2x128xf32>
    %226 = arith.mulf %217, %165 : vector<2x128xf32>
    %227 = arith.mulf %211, %219 : vector<2x128xf32>
    %228 = arith.addf %226, %227 : vector<2x128xf32>
    %229 = math.tanh %228 : vector<2x128xf32>
    %230 = arith.mulf %225, %229 : vector<2x128xf32>
    %231 = tpu.concatenate %230, %196 in 1 : vector<2x128xf32>, vector<2x128xf32> -> vector<2x256xf32>
    %c0_66 = arith.constant 0 : index
    %c0_67 = arith.constant 0 : index
    %232 = vector.load %arg5[%c0_66, %c0_67] : memref<256x512xf32, #tpu.memory_space<vmem>>, vector<256x512xf32>
    %cst_68 = arith.constant dense<0.000000e+00> : vector<2x512xf32>
    %233 = tpu.matmul %231, %232, %cst_68 {dimension_numbers = #tpu.dot_dimension_numbers<[1], [0], [0], [1], [0, 0, 1, 1], [], []>} : vector<2x256xf32>, vector<256x512xf32>, vector<2x512xf32> -> vector<2x512xf32>
    %234 = arith.addf %233, %9 : vector<2x512xf32>
    %235 = vector.extract_strided_slice %234 {offsets = [0, 0], sizes = [2, 128], strides = [1, 1]} : vector<2x512xf32> to vector<2x128xf32>
    %236 = arith.negf %235 : vector<2x128xf32>
    %237 = math.exp %236 : vector<2x128xf32>
    %cst_69 = arith.constant 1.000000e+00 : f32
    %238 = vector.broadcast %cst_69 : f32 to vector<2x128xf32>
    %239 = arith.addf %238, %237 : vector<2x128xf32>
    %240 = arith.divf %238, %239 : vector<2x128xf32>
    %241 = vector.extract_strided_slice %234 {offsets = [0, 128], sizes = [2, 128], strides = [1, 1]} : vector<2x512xf32> to vector<2x128xf32>
    %242 = arith.negf %241 : vector<2x128xf32>
    %243 = math.exp %242 : vector<2x128xf32>
    %cst_70 = arith.constant 1.000000e+00 : f32
    %244 = vector.broadcast %cst_70 : f32 to vector<2x128xf32>
    %245 = arith.addf %244, %243 : vector<2x128xf32>
    %246 = arith.divf %244, %245 : vector<2x128xf32>
    %247 = vector.extract_strided_slice %234 {offsets = [0, 256], sizes = [2, 128], strides = [1, 1]} : vector<2x512xf32> to vector<2x128xf32>
    %248 = math.tanh %247 : vector<2x128xf32>
    %249 = vector.extract_strided_slice %234 {offsets = [0, 384], sizes = [2, 128], strides = [1, 1]} : vector<2x512xf32> to vector<2x128xf32>
    %250 = arith.negf %249 : vector<2x128xf32>
    %251 = math.exp %250 : vector<2x128xf32>
    %cst_71 = arith.constant 1.000000e+00 : f32
    %252 = vector.broadcast %cst_71 : f32 to vector<2x128xf32>
    %253 = arith.addf %252, %251 : vector<2x128xf32>
    %254 = arith.divf %252, %253 : vector<2x128xf32>
    %255 = arith.mulf %246, %194 : vector<2x128xf32>
    %256 = arith.mulf %240, %248 : vector<2x128xf32>
    %257 = arith.addf %255, %256 : vector<2x128xf32>
    %258 = math.tanh %257 : vector<2x128xf32>
    %259 = arith.mulf %254, %258 : vector<2x128xf32>
    %c2_i32_72 = arith.constant 2 : i32
    %260 = arith.muli %c3_i32, %c2_i32_72 : i32
    %261 = arith.index_cast %260 : i32 to index
    %c0_73 = arith.constant 0 : index
    %262 = vector.load %arg11[%261, %c0_73] : memref<16x128xf32, #tpu.memory_space<vmem>>, vector<2x128xf32>
    tpu.vector_store %arg11[%261, %c0_73], %259 {strides = array<i32>} : memref<16x128xf32, #tpu.memory_space<vmem>>, vector<2x128xf32>,
    %c4_i32 = arith.constant 4 : i32
    %c2_i32_74 = arith.constant 2 : i32
    %263 = arith.muli %c4_i32, %c2_i32_74 : i32
    %264 = arith.index_cast %263 : i32 to index
    %c0_75 = arith.constant 0 : index
    %265 = vector.load %arg10[%264, %c0_75] : memref<16x512xf32, #tpu.memory_space<vmem>>, vector<2x512xf32>
    %c0_76 = arith.constant 0 : index
    %c0_77 = arith.constant 0 : index
    %266 = vector.load %arg3[%c0_76, %c0_77] : memref<128x512xf32, #tpu.memory_space<vmem>>, vector<128x512xf32>
    %cst_78 = arith.constant dense<0.000000e+00> : vector<2x512xf32>
    %267 = tpu.matmul %230, %266, %cst_78 {dimension_numbers = #tpu.dot_dimension_numbers<[1], [0], [0], [1], [0, 0, 1, 1], [], []>} : vector<2x128xf32>, vector<128x512xf32>, vector<2x512xf32> -> vector<2x512xf32>
    %268 = arith.addf %265, %267 : vector<2x512xf32>
    %269 = vector.extract_strided_slice %268 {offsets = [0, 0], sizes = [2, 128], strides = [1, 1]} : vector<2x512xf32> to vector<2x128xf32>
    %270 = arith.negf %269 : vector<2x128xf32>
    %271 = math.exp %270 : vector<2x128xf32>
    %cst_79 = arith.constant 1.000000e+00 : f32
    %272 = vector.broadcast %cst_79 : f32 to vector<2x128xf32>
    %273 = arith.addf %272, %271 : vector<2x128xf32>
    %274 = arith.divf %272, %273 : vector<2x128xf32>
    %275 = vector.extract_strided_slice %268 {offsets = [0, 128], sizes = [2, 128], strides = [1, 1]} : vector<2x512xf32> to vector<2x128xf32>
    %276 = arith.negf %275 : vector<2x128xf32>
    %277 = math.exp %276 : vector<2x128xf32>
    %cst_80 = arith.constant 1.000000e+00 : f32
    %278 = vector.broadcast %cst_80 : f32 to vector<2x128xf32>
    %279 = arith.addf %278, %277 : vector<2x128xf32>
    %280 = arith.divf %278, %279 : vector<2x128xf32>
    %281 = vector.extract_strided_slice %268 {offsets = [0, 256], sizes = [2, 128], strides = [1, 1]} : vector<2x512xf32> to vector<2x128xf32>
    %282 = math.tanh %281 : vector<2x128xf32>
    %283 = vector.extract_strided_slice %268 {offsets = [0, 384], sizes = [2, 128], strides = [1, 1]} : vector<2x512xf32> to vector<2x128xf32>
    %284 = arith.negf %283 : vector<2x128xf32>
    %285 = math.exp %284 : vector<2x128xf32>
    %cst_81 = arith.constant 1.000000e+00 : f32
    %286 = vector.broadcast %cst_81 : f32 to vector<2x128xf32>
    %287 = arith.addf %286, %285 : vector<2x128xf32>
    %288 = arith.divf %286, %287 : vector<2x128xf32>
    %289 = arith.mulf %280, %228 : vector<2x128xf32>
    %290 = arith.mulf %274, %282 : vector<2x128xf32>
    %291 = arith.addf %289, %290 : vector<2x128xf32>
    %292 = math.tanh %291 : vector<2x128xf32>
    %293 = arith.mulf %288, %292 : vector<2x128xf32>
    %294 = tpu.concatenate %293, %259 in 1 : vector<2x128xf32>, vector<2x128xf32> -> vector<2x256xf32>
    %c0_82 = arith.constant 0 : index
    %c0_83 = arith.constant 0 : index
    %295 = vector.load %arg5[%c0_82, %c0_83] : memref<256x512xf32, #tpu.memory_space<vmem>>, vector<256x512xf32>
    %cst_84 = arith.constant dense<0.000000e+00> : vector<2x512xf32>
    %296 = tpu.matmul %294, %295, %cst_84 {dimension_numbers = #tpu.dot_dimension_numbers<[1], [0], [0], [1], [0, 0, 1, 1], [], []>} : vector<2x256xf32>, vector<256x512xf32>, vector<2x512xf32> -> vector<2x512xf32>
    %297 = arith.addf %296, %9 : vector<2x512xf32>
    %298 = vector.extract_strided_slice %297 {offsets = [0, 0], sizes = [2, 128], strides = [1, 1]} : vector<2x512xf32> to vector<2x128xf32>
    %299 = arith.negf %298 : vector<2x128xf32>
    %300 = math.exp %299 : vector<2x128xf32>
    %cst_85 = arith.constant 1.000000e+00 : f32
    %301 = vector.broadcast %cst_85 : f32 to vector<2x128xf32>
    %302 = arith.addf %301, %300 : vector<2x128xf32>
    %303 = arith.divf %301, %302 : vector<2x128xf32>
    %304 = vector.extract_strided_slice %297 {offsets = [0, 128], sizes = [2, 128], strides = [1, 1]} : vector<2x512xf32> to vector<2x128xf32>
    %305 = arith.negf %304 : vector<2x128xf32>
    %306 = math.exp %305 : vector<2x128xf32>
    %cst_86 = arith.constant 1.000000e+00 : f32
    %307 = vector.broadcast %cst_86 : f32 to vector<2x128xf32>
    %308 = arith.addf %307, %306 : vector<2x128xf32>
    %309 = arith.divf %307, %308 : vector<2x128xf32>
    %310 = vector.extract_strided_slice %297 {offsets = [0, 256], sizes = [2, 128], strides = [1, 1]} : vector<2x512xf32> to vector<2x128xf32>
    %311 = math.tanh %310 : vector<2x128xf32>
    %312 = vector.extract_strided_slice %297 {offsets = [0, 384], sizes = [2, 128], strides = [1, 1]} : vector<2x512xf32> to vector<2x128xf32>
    %313 = arith.negf %312 : vector<2x128xf32>
    %314 = math.exp %313 : vector<2x128xf32>
    %cst_87 = arith.constant 1.000000e+00 : f32
    %315 = vector.broadcast %cst_87 : f32 to vector<2x128xf32>
    %316 = arith.addf %315, %314 : vector<2x128xf32>
    %317 = arith.divf %315, %316 : vector<2x128xf32>
    %318 = arith.mulf %309, %257 : vector<2x128xf32>
    %319 = arith.mulf %303, %311 : vector<2x128xf32>
    %320 = arith.addf %318, %319 : vector<2x128xf32>
    %321 = math.tanh %320 : vector<2x128xf32>
    %322 = arith.mulf %317, %321 : vector<2x128xf32>
    %c2_i32_88 = arith.constant 2 : i32
    %323 = arith.muli %c4_i32, %c2_i32_88 : i32
    %324 = arith.index_cast %323 : i32 to index
    %c0_89 = arith.constant 0 : index
    %325 = vector.load %arg11[%324, %c0_89] : memref<16x128xf32, #tpu.memory_space<vmem>>, vector<2x128xf32>
    tpu.vector_store %arg11[%324, %c0_89], %322 {strides = array<i32>} : memref<16x128xf32, #tpu.memory_space<vmem>>, vector<2x128xf32>,
    %c5_i32 = arith.constant 5 : i32
    %c2_i32_90 = arith.constant 2 : i32
    %326 = arith.muli %c5_i32, %c2_i32_90 : i32
    %327 = arith.index_cast %326 : i32 to index
    %c0_91 = arith.constant 0 : index
    %328 = vector.load %arg10[%327, %c0_91] : memref<16x512xf32, #tpu.memory_space<vmem>>, vector<2x512xf32>
    %c0_92 = arith.constant 0 : index
    %c0_93 = arith.constant 0 : index
    %329 = vector.load %arg3[%c0_92, %c0_93] : memref<128x512xf32, #tpu.memory_space<vmem>>, vector<128x512xf32>
    %cst_94 = arith.constant dense<0.000000e+00> : vector<2x512xf32>
    %330 = tpu.matmul %293, %329, %cst_94 {dimension_numbers = #tpu.dot_dimension_numbers<[1], [0], [0], [1], [0, 0, 1, 1], [], []>} : vector<2x128xf32>, vector<128x512xf32>, vector<2x512xf32> -> vector<2x512xf32>
    %331 = arith.addf %328, %330 : vector<2x512xf32>
    %332 = vector.extract_strided_slice %331 {offsets = [0, 0], sizes = [2, 128], strides = [1, 1]} : vector<2x512xf32> to vector<2x128xf32>
    %333 = arith.negf %332 : vector<2x128xf32>
    %334 = math.exp %333 : vector<2x128xf32>
    %cst_95 = arith.constant 1.000000e+00 : f32
    %335 = vector.broadcast %cst_95 : f32 to vector<2x128xf32>
    %336 = arith.addf %335, %334 : vector<2x128xf32>
    %337 = arith.divf %335, %336 : vector<2x128xf32>
    %338 = vector.extract_strided_slice %331 {offsets = [0, 128], sizes = [2, 128], strides = [1, 1]} : vector<2x512xf32> to vector<2x128xf32>
    %339 = arith.negf %338 : vector<2x128xf32>
    %340 = math.exp %339 : vector<2x128xf32>
    %cst_96 = arith.constant 1.000000e+00 : f32
    %341 = vector.broadcast %cst_96 : f32 to vector<2x128xf32>
    %342 = arith.addf %341, %340 : vector<2x128xf32>
    %343 = arith.divf %341, %342 : vector<2x128xf32>
    %344 = vector.extract_strided_slice %331 {offsets = [0, 256], sizes = [2, 128], strides = [1, 1]} : vector<2x512xf32> to vector<2x128xf32>
    %345 = math.tanh %344 : vector<2x128xf32>
    %346 = vector.extract_strided_slice %331 {offsets = [0, 384], sizes = [2, 128], strides = [1, 1]} : vector<2x512xf32> to vector<2x128xf32>
    %347 = arith.negf %346 : vector<2x128xf32>
    %348 = math.exp %347 : vector<2x128xf32>
    %cst_97 = arith.constant 1.000000e+00 : f32
    %349 = vector.broadcast %cst_97 : f32 to vector<2x128xf32>
    %350 = arith.addf %349, %348 : vector<2x128xf32>
    %351 = arith.divf %349, %350 : vector<2x128xf32>
    %352 = arith.mulf %343, %291 : vector<2x128xf32>
    %353 = arith.mulf %337, %345 : vector<2x128xf32>
    %354 = arith.addf %352, %353 : vector<2x128xf32>
    %355 = math.tanh %354 : vector<2x128xf32>
    %356 = arith.mulf %351, %355 : vector<2x128xf32>
    %357 = tpu.concatenate %356, %322 in 1 : vector<2x128xf32>, vector<2x128xf32> -> vector<2x256xf32>
    %c0_98 = arith.constant 0 : index
    %c0_99 = arith.constant 0 : index
    %358 = vector.load %arg5[%c0_98, %c0_99] : memref<256x512xf32, #tpu.memory_space<vmem>>, vector<256x512xf32>
    %cst_100 = arith.constant dense<0.000000e+00> : vector<2x512xf32>
    %359 = tpu.matmul %357, %358, %cst_100 {dimension_numbers = #tpu.dot_dimension_numbers<[1], [0], [0], [1], [0, 0, 1, 1], [], []>} : vector<2x256xf32>, vector<256x512xf32>, vector<2x512xf32> -> vector<2x512xf32>
    %360 = arith.addf %359, %9 : vector<2x512xf32>
    %361 = vector.extract_strided_slice %360 {offsets = [0, 0], sizes = [2, 128], strides = [1, 1]} : vector<2x512xf32> to vector<2x128xf32>
    %362 = arith.negf %361 : vector<2x128xf32>
    %363 = math.exp %362 : vector<2x128xf32>
    %cst_101 = arith.constant 1.000000e+00 : f32
    %364 = vector.broadcast %cst_101 : f32 to vector<2x128xf32>
    %365 = arith.addf %364, %363 : vector<2x128xf32>
    %366 = arith.divf %364, %365 : vector<2x128xf32>
    %367 = vector.extract_strided_slice %360 {offsets = [0, 128], sizes = [2, 128], strides = [1, 1]} : vector<2x512xf32> to vector<2x128xf32>
    %368 = arith.negf %367 : vector<2x128xf32>
    %369 = math.exp %368 : vector<2x128xf32>
    %cst_102 = arith.constant 1.000000e+00 : f32
    %370 = vector.broadcast %cst_102 : f32 to vector<2x128xf32>
    %371 = arith.addf %370, %369 : vector<2x128xf32>
    %372 = arith.divf %370, %371 : vector<2x128xf32>
    %373 = vector.extract_strided_slice %360 {offsets = [0, 256], sizes = [2, 128], strides = [1, 1]} : vector<2x512xf32> to vector<2x128xf32>
    %374 = math.tanh %373 : vector<2x128xf32>
    %375 = vector.extract_strided_slice %360 {offsets = [0, 384], sizes = [2, 128], strides = [1, 1]} : vector<2x512xf32> to vector<2x128xf32>
    %376 = arith.negf %375 : vector<2x128xf32>
    %377 = math.exp %376 : vector<2x128xf32>
    %cst_103 = arith.constant 1.000000e+00 : f32
    %378 = vector.broadcast %cst_103 : f32 to vector<2x128xf32>
    %379 = arith.addf %378, %377 : vector<2x128xf32>
    %380 = arith.divf %378, %379 : vector<2x128xf32>
    %381 = arith.mulf %372, %320 : vector<2x128xf32>
    %382 = arith.mulf %366, %374 : vector<2x128xf32>
    %383 = arith.addf %381, %382 : vector<2x128xf32>
    %384 = math.tanh %383 : vector<2x128xf32>
    %385 = arith.mulf %380, %384 : vector<2x128xf32>
    %c2_i32_104 = arith.constant 2 : i32
    %386 = arith.muli %c5_i32, %c2_i32_104 : i32
    %387 = arith.index_cast %386 : i32 to index
    %c0_105 = arith.constant 0 : index
    %388 = vector.load %arg11[%387, %c0_105] : memref<16x128xf32, #tpu.memory_space<vmem>>, vector<2x128xf32>
    tpu.vector_store %arg11[%387, %c0_105], %385 {strides = array<i32>} : memref<16x128xf32, #tpu.memory_space<vmem>>, vector<2x128xf32>,
    %c6_i32 = arith.constant 6 : i32
    %c2_i32_106 = arith.constant 2 : i32
    %389 = arith.muli %c6_i32, %c2_i32_106 : i32
    %390 = arith.index_cast %389 : i32 to index
    %c0_107 = arith.constant 0 : index
    %391 = vector.load %arg10[%390, %c0_107] : memref<16x512xf32, #tpu.memory_space<vmem>>, vector<2x512xf32>
    %c0_108 = arith.constant 0 : index
    %c0_109 = arith.constant 0 : index
    %392 = vector.load %arg3[%c0_108, %c0_109] : memref<128x512xf32, #tpu.memory_space<vmem>>, vector<128x512xf32>
    %cst_110 = arith.constant dense<0.000000e+00> : vector<2x512xf32>
    %393 = tpu.matmul %356, %392, %cst_110 {dimension_numbers = #tpu.dot_dimension_numbers<[1], [0], [0], [1], [0, 0, 1, 1], [], []>} : vector<2x128xf32>, vector<128x512xf32>, vector<2x512xf32> -> vector<2x512xf32>
    %394 = arith.addf %391, %393 : vector<2x512xf32>
    %395 = vector.extract_strided_slice %394 {offsets = [0, 0], sizes = [2, 128], strides = [1, 1]} : vector<2x512xf32> to vector<2x128xf32>
    %396 = arith.negf %395 : vector<2x128xf32>
    %397 = math.exp %396 : vector<2x128xf32>
    %cst_111 = arith.constant 1.000000e+00 : f32
    %398 = vector.broadcast %cst_111 : f32 to vector<2x128xf32>
    %399 = arith.addf %398, %397 : vector<2x128xf32>
    %400 = arith.divf %398, %399 : vector<2x128xf32>
    %401 = vector.extract_strided_slice %394 {offsets = [0, 128], sizes = [2, 128], strides = [1, 1]} : vector<2x512xf32> to vector<2x128xf32>
    %402 = arith.negf %401 : vector<2x128xf32>
    %403 = math.exp %402 : vector<2x128xf32>
    %cst_112 = arith.constant 1.000000e+00 : f32
    %404 = vector.broadcast %cst_112 : f32 to vector<2x128xf32>
    %405 = arith.addf %404, %403 : vector<2x128xf32>
    %406 = arith.divf %404, %405 : vector<2x128xf32>
    %407 = vector.extract_strided_slice %394 {offsets = [0, 256], sizes = [2, 128], strides = [1, 1]} : vector<2x512xf32> to vector<2x128xf32>
    %408 = math.tanh %407 : vector<2x128xf32>
    %409 = vector.extract_strided_slice %394 {offsets = [0, 384], sizes = [2, 128], strides = [1, 1]} : vector<2x512xf32> to vector<2x128xf32>
    %410 = arith.negf %409 : vector<2x128xf32>
    %411 = math.exp %410 : vector<2x128xf32>
    %cst_113 = arith.constant 1.000000e+00 : f32
    %412 = vector.broadcast %cst_113 : f32 to vector<2x128xf32>
    %413 = arith.addf %412, %411 : vector<2x128xf32>
    %414 = arith.divf %412, %413 : vector<2x128xf32>
    %415 = arith.mulf %406, %354 : vector<2x128xf32>
    %416 = arith.mulf %400, %408 : vector<2x128xf32>
    %417 = arith.addf %415, %416 : vector<2x128xf32>
    %418 = math.tanh %417 : vector<2x128xf32>
    %419 = arith.mulf %414, %418 : vector<2x128xf32>
    %420 = tpu.concatenate %419, %385 in 1 : vector<2x128xf32>, vector<2x128xf32> -> vector<2x256xf32>
    %c0_114 = arith.constant 0 : index
    %c0_115 = arith.constant 0 : index
    %421 = vector.load %arg5[%c0_114, %c0_115] : memref<256x512xf32, #tpu.memory_space<vmem>>, vector<256x512xf32>
    %cst_116 = arith.constant dense<0.000000e+00> : vector<2x512xf32>
    %422 = tpu.matmul %420, %421, %cst_116 {dimension_numbers = #tpu.dot_dimension_numbers<[1], [0], [0], [1], [0, 0, 1, 1], [], []>} : vector<2x256xf32>, vector<256x512xf32>, vector<2x512xf32> -> vector<2x512xf32>
    %423 = arith.addf %422, %9 : vector<2x512xf32>
    %424 = vector.extract_strided_slice %423 {offsets = [0, 0], sizes = [2, 128], strides = [1, 1]} : vector<2x512xf32> to vector<2x128xf32>
    %425 = arith.negf %424 : vector<2x128xf32>
    %426 = math.exp %425 : vector<2x128xf32>
    %cst_117 = arith.constant 1.000000e+00 : f32
    %427 = vector.broadcast %cst_117 : f32 to vector<2x128xf32>
    %428 = arith.addf %427, %426 : vector<2x128xf32>
    %429 = arith.divf %427, %428 : vector<2x128xf32>
    %430 = vector.extract_strided_slice %423 {offsets = [0, 128], sizes = [2, 128], strides = [1, 1]} : vector<2x512xf32> to vector<2x128xf32>
    %431 = arith.negf %430 : vector<2x128xf32>
    %432 = math.exp %431 : vector<2x128xf32>
    %cst_118 = arith.constant 1.000000e+00 : f32
    %433 = vector.broadcast %cst_118 : f32 to vector<2x128xf32>
    %434 = arith.addf %433, %432 : vector<2x128xf32>
    %435 = arith.divf %433, %434 : vector<2x128xf32>
    %436 = vector.extract_strided_slice %423 {offsets = [0, 256], sizes = [2, 128], strides = [1, 1]} : vector<2x512xf32> to vector<2x128xf32>
    %437 = math.tanh %436 : vector<2x128xf32>
    %438 = vector.extract_strided_slice %423 {offsets = [0, 384], sizes = [2, 128], strides = [1, 1]} : vector<2x512xf32> to vector<2x128xf32>
    %439 = arith.negf %438 : vector<2x128xf32>
    %440 = math.exp %439 : vector<2x128xf32>
    %cst_119 = arith.constant 1.000000e+00 : f32
    %441 = vector.broadcast %cst_119 : f32 to vector<2x128xf32>
    %442 = arith.addf %441, %440 : vector<2x128xf32>
    %443 = arith.divf %441, %442 : vector<2x128xf32>
    %444 = arith.mulf %435, %383 : vector<2x128xf32>
    %445 = arith.mulf %429, %437 : vector<2x128xf32>
    %446 = arith.addf %444, %445 : vector<2x128xf32>
    %447 = math.tanh %446 : vector<2x128xf32>
    %448 = arith.mulf %443, %447 : vector<2x128xf32>
    %c2_i32_120 = arith.constant 2 : i32
    %449 = arith.muli %c6_i32, %c2_i32_120 : i32
    %450 = arith.index_cast %449 : i32 to index
    %c0_121 = arith.constant 0 : index
    %451 = vector.load %arg11[%450, %c0_121] : memref<16x128xf32, #tpu.memory_space<vmem>>, vector<2x128xf32>
    tpu.vector_store %arg11[%450, %c0_121], %448 {strides = array<i32>} : memref<16x128xf32, #tpu.memory_space<vmem>>, vector<2x128xf32>,
    %c7_i32 = arith.constant 7 : i32
    %c2_i32_122 = arith.constant 2 : i32
    %452 = arith.muli %c7_i32, %c2_i32_122 : i32
    %453 = arith.index_cast %452 : i32 to index
    %c0_123 = arith.constant 0 : index
    %454 = vector.load %arg10[%453, %c0_123] : memref<16x512xf32, #tpu.memory_space<vmem>>, vector<2x512xf32>
    %c0_124 = arith.constant 0 : index
    %c0_125 = arith.constant 0 : index
    %455 = vector.load %arg3[%c0_124, %c0_125] : memref<128x512xf32, #tpu.memory_space<vmem>>, vector<128x512xf32>
    %cst_126 = arith.constant dense<0.000000e+00> : vector<2x512xf32>
    %456 = tpu.matmul %419, %455, %cst_126 {dimension_numbers = #tpu.dot_dimension_numbers<[1], [0], [0], [1], [0, 0, 1, 1], [], []>} : vector<2x128xf32>, vector<128x512xf32>, vector<2x512xf32> -> vector<2x512xf32>
    %457 = arith.addf %454, %456 : vector<2x512xf32>
    %458 = vector.extract_strided_slice %457 {offsets = [0, 0], sizes = [2, 128], strides = [1, 1]} : vector<2x512xf32> to vector<2x128xf32>
    %459 = arith.negf %458 : vector<2x128xf32>
    %460 = math.exp %459 : vector<2x128xf32>
    %cst_127 = arith.constant 1.000000e+00 : f32
    %461 = vector.broadcast %cst_127 : f32 to vector<2x128xf32>
    %462 = arith.addf %461, %460 : vector<2x128xf32>
    %463 = arith.divf %461, %462 : vector<2x128xf32>
    %464 = vector.extract_strided_slice %457 {offsets = [0, 128], sizes = [2, 128], strides = [1, 1]} : vector<2x512xf32> to vector<2x128xf32>
    %465 = arith.negf %464 : vector<2x128xf32>
    %466 = math.exp %465 : vector<2x128xf32>
    %cst_128 = arith.constant 1.000000e+00 : f32
    %467 = vector.broadcast %cst_128 : f32 to vector<2x128xf32>
    %468 = arith.addf %467, %466 : vector<2x128xf32>
    %469 = arith.divf %467, %468 : vector<2x128xf32>
    %470 = vector.extract_strided_slice %457 {offsets = [0, 256], sizes = [2, 128], strides = [1, 1]} : vector<2x512xf32> to vector<2x128xf32>
    %471 = math.tanh %470 : vector<2x128xf32>
    %472 = vector.extract_strided_slice %457 {offsets = [0, 384], sizes = [2, 128], strides = [1, 1]} : vector<2x512xf32> to vector<2x128xf32>
    %473 = arith.negf %472 : vector<2x128xf32>
    %474 = math.exp %473 : vector<2x128xf32>
    %cst_129 = arith.constant 1.000000e+00 : f32
    %475 = vector.broadcast %cst_129 : f32 to vector<2x128xf32>
    %476 = arith.addf %475, %474 : vector<2x128xf32>
    %477 = arith.divf %475, %476 : vector<2x128xf32>
    %478 = arith.mulf %469, %417 : vector<2x128xf32>
    %479 = arith.mulf %463, %471 : vector<2x128xf32>
    %480 = arith.addf %478, %479 : vector<2x128xf32>
    %481 = math.tanh %480 : vector<2x128xf32>
    %482 = arith.mulf %477, %481 : vector<2x128xf32>
    %483 = tpu.concatenate %482, %448 in 1 : vector<2x128xf32>, vector<2x128xf32> -> vector<2x256xf32>
    %c0_130 = arith.constant 0 : index
    %c0_131 = arith.constant 0 : index
    %484 = vector.load %arg5[%c0_130, %c0_131] : memref<256x512xf32, #tpu.memory_space<vmem>>, vector<256x512xf32>
    %cst_132 = arith.constant dense<0.000000e+00> : vector<2x512xf32>
    %485 = tpu.matmul %483, %484, %cst_132 {dimension_numbers = #tpu.dot_dimension_numbers<[1], [0], [0], [1], [0, 0, 1, 1], [], []>} : vector<2x256xf32>, vector<256x512xf32>, vector<2x512xf32> -> vector<2x512xf32>
    %486 = arith.addf %485, %9 : vector<2x512xf32>
    %487 = vector.extract_strided_slice %486 {offsets = [0, 0], sizes = [2, 128], strides = [1, 1]} : vector<2x512xf32> to vector<2x128xf32>
    %488 = arith.negf %487 : vector<2x128xf32>
    %489 = math.exp %488 : vector<2x128xf32>
    %cst_133 = arith.constant 1.000000e+00 : f32
    %490 = vector.broadcast %cst_133 : f32 to vector<2x128xf32>
    %491 = arith.addf %490, %489 : vector<2x128xf32>
    %492 = arith.divf %490, %491 : vector<2x128xf32>
    %493 = vector.extract_strided_slice %486 {offsets = [0, 128], sizes = [2, 128], strides = [1, 1]} : vector<2x512xf32> to vector<2x128xf32>
    %494 = arith.negf %493 : vector<2x128xf32>
    %495 = math.exp %494 : vector<2x128xf32>
    %cst_134 = arith.constant 1.000000e+00 : f32
    %496 = vector.broadcast %cst_134 : f32 to vector<2x128xf32>
    %497 = arith.addf %496, %495 : vector<2x128xf32>
    %498 = arith.divf %496, %497 : vector<2x128xf32>
    %499 = vector.extract_strided_slice %486 {offsets = [0, 256], sizes = [2, 128], strides = [1, 1]} : vector<2x512xf32> to vector<2x128xf32>
    %500 = math.tanh %499 : vector<2x128xf32>
    %501 = vector.extract_strided_slice %486 {offsets = [0, 384], sizes = [2, 128], strides = [1, 1]} : vector<2x512xf32> to vector<2x128xf32>
    %502 = arith.negf %501 : vector<2x128xf32>
    %503 = math.exp %502 : vector<2x128xf32>
    %cst_135 = arith.constant 1.000000e+00 : f32
    %504 = vector.broadcast %cst_135 : f32 to vector<2x128xf32>
    %505 = arith.addf %504, %503 : vector<2x128xf32>
    %506 = arith.divf %504, %505 : vector<2x128xf32>
    %507 = arith.mulf %498, %446 : vector<2x128xf32>
    %508 = arith.mulf %492, %500 : vector<2x128xf32>
    %509 = arith.addf %507, %508 : vector<2x128xf32>
    %510 = math.tanh %509 : vector<2x128xf32>
    %511 = arith.mulf %506, %510 : vector<2x128xf32>
    %c2_i32_136 = arith.constant 2 : i32
    %512 = arith.muli %c7_i32, %c2_i32_136 : i32
    %513 = arith.index_cast %512 : i32 to index
    %c0_137 = arith.constant 0 : index
    %514 = vector.load %arg11[%513, %c0_137] : memref<16x128xf32, #tpu.memory_space<vmem>>, vector<2x128xf32>
    tpu.vector_store %arg11[%513, %c0_137], %511 {strides = array<i32>} : memref<16x128xf32, #tpu.memory_space<vmem>>, vector<2x128xf32>,
    %c8_i32 = arith.constant 8 : i32
    %c0_138 = arith.constant 0 : index
    %c0_139 = arith.constant 0 : index
    %515 = vector.load %arg11[%c0_138, %c0_139] : memref<16x128xf32, #tpu.memory_space<vmem>>, vector<16x128xf32>
    %c0_140 = arith.constant 0 : index
    %c0_141 = arith.constant 0 : index
    %516 = vector.load %arg1[%c0_140, %c0_141] : memref<16x1xf32, #tpu.memory_space<vmem>>, vector<16x1xf32>
    %517 = vector.broadcast %516 : vector<16x1xf32> to vector<16x128xf32>
    %518 = arith.mulf %515, %517 : vector<16x128xf32>
    %c0_142 = arith.constant 0 : index
    %c0_143 = arith.constant 0 : index
    %519 = vector.load %arg7[%c0_142, %c0_143] : memref<128x27xf32, #tpu.memory_space<vmem>>, vector<128x27xf32>
    %cst_144 = arith.constant dense<0.000000e+00> : vector<16x27xf32>
    %520 = tpu.matmul %518, %519, %cst_144 {dimension_numbers = #tpu.dot_dimension_numbers<[1], [0], [0], [1], [0, 0, 1, 1], [], []>} : vector<16x128xf32>, vector<128x27xf32>, vector<16x27xf32> -> vector<16x27xf32>
    %c0_145 = arith.constant 0 : index
    %c0_146 = arith.constant 0 : index
    %521 = vector.load %arg8[%c0_145, %c0_146] : memref<1x27xf32, #tpu.memory_space<vmem>>, vector<1x27xf32>
    %522 = vector.broadcast %521 : vector<1x27xf32> to vector<16x27xf32>
    %523 = arith.addf %520, %522 : vector<16x27xf32>
    %c0_147 = arith.constant 0 : index
    %c0_148 = arith.constant 0 : index
    %524 = vector.load %arg9[%c0_147, %c0_148] : memref<16x27xf32, #tpu.memory_space<vmem>>, vector<16x27xf32>
    tpu.vector_store %arg9[%c0_147, %c0_148], %523 {strides = array<i32>} : memref<16x27xf32, #tpu.memory_space<vmem>>, vector<16x27xf32>,
    return
  }
}

</mosaic_0001>

<llo_original>
// kernel: tpu_custom_call.1
$region0: #{tpu_custom_call.1}
  #allocation0 [shape = 'u32[]', space=smem, size = 0x4, offset = 0x4, fixed_abs, tag = 'smem constant byte address 0x4 - core index']
  #allocation1 [shape = 'u32[72,128]{1,0:T(1,128)}', space=vmem, size = 0x9000, scoped, tag = 'internal scratch']
  #allocation2 [shape = 'f32[16,512]{1,0:T(8,128)}', space=vmem, size = 0x8000, scoped, tag = 'scratch operand']
  #allocation3 [shape = 'f32[16,128]{1,0:T(8,128)}', space=vmem, size = 0x2000, scoped, tag = 'scratch operand']
  %s0 = inlined_call_operand.vmem [shape: f32[16,64], index: 0, kind: input, shape index: {}]
  %s1 = inlined_call_operand.vmem [shape: f32[16,1], index: 1, kind: input, shape index: {}]
  %s2 = inlined_call_operand.hbm [shape: f32[64,512], index: 2, kind: input, shape index: {}]
  %s3 = inlined_call_operand.hbm [shape: f32[128,512], index: 3, kind: input, shape index: {}]
  %s4 = inlined_call_operand.vmem [shape: f32[1,512], index: 4, kind: input, shape index: {}]
  %s5 = inlined_call_operand.hbm [shape: f32[256,512], index: 5, kind: input, shape index: {}]
  %s6 = inlined_call_operand.vmem [shape: f32[1,512], index: 6, kind: input, shape index: {}]
  %s7 = inlined_call_operand.vmem [shape: f32[128,27], index: 7, kind: input, shape index: {}]
  %s8 = inlined_call_operand.vmem [shape: f32[1,27], index: 8, kind: input, shape index: {}]
  %s9 = inlined_call_operand.hbm [shape: f32[16,27], index: 9, kind: output, shape index: {}]
  %s10 = sld [smem:[#allocation0]]
  $region58: #{tpu_custom_call.1} parent=0
    _
  %s12 = ssub.s32 1, %s10
  %s13 = scalar_select 0, %s12, %s10
  $region1: #{tpu_custom_call.1} parent=0
    #allocation4 [shape = 'u8[131072]{0}', space=vmem, size = 0x20000, scoped, tag = 'input window, operand 2, single buffered']
    #allocation5 [shape = 's32[1]{0}', space=sflag, size = 0x4, scoped, tag = 'scoped memory for tpu_custom_call.1']
    #allocation6 [shape = 's32[1]{0}', space=sflag, size = 0x4, scoped, tag = 'scoped memory for tpu_custom_call.1']
    #allocation7 [shape = 'u8[262144]{0}', space=vmem, size = 0x40000, scoped, tag = 'input window, operand 3, single buffered']
    #allocation8 [shape = 's32[1]{0}', space=sflag, size = 0x4, scoped, tag = 'scoped memory for tpu_custom_call.1']
    #allocation9 [shape = 'u8[524288]{0}', space=vmem, size = 0x80000, scoped, tag = 'input window, operand 5, single buffered']
    #allocation10 [shape = 'u8[8192]{0}', space=vmem, size = 0x2000, scoped, tag = 'output window, operand 0, single buffered']
    %14 = vsyncpa [#allocation5], 0
    %15 = vsyncpa [#allocation8], 0
    %16 = vsyncpa [#allocation6], 0
    // Predicated region
    $region2: #{tpu_custom_call.1} parent=1 // pred_check
      _
    $region3: #{tpu_custom_call.1} parent=1 // pred_check_branch
      %18 = sbr.rel (0) target = $region5
    $region4: #{tpu_custom_call.1} parent=1 // pred_region
      _
    $region5: #{tpu_custom_call.1} parent=1 // pred_fallthru
      _
    // Predicated region
    $region6: #{tpu_custom_call.1} parent=1 // pred_check
      _
    $region7: #{tpu_custom_call.1} parent=1 // pred_check_branch
      %20 = sbr.rel (0) target = $region9
    $region8: #{tpu_custom_call.1} parent=1 // pred_region
      _
    $region9: #{tpu_custom_call.1} parent=1 // pred_fallthru
      _
    // Predicated region
    $region10: #{tpu_custom_call.1} parent=1 // pred_check
      _
    $region11: #{tpu_custom_call.1} parent=1 // pred_check_branch
      %22 = sbr.rel (0) target = $region13
    $region12: #{tpu_custom_call.1} parent=1 // pred_region
      %24 = vsyncadd [#allocation5], 0
      %s25 = sshll.u32 %s2, 4
      %s26 = int_to_ptr.hbm [resolvable:$true] %s25
      %s27 = sshll.u32 [#allocation4], 4
      %s28 = int_to_ptr.vmem [resolvable:$true] %s27
      %33 = dma.hbm_to_vmem [thread:$0]  %s26, 4096, %s28, [#allocation5], 512, 512, 32
    $region13: #{tpu_custom_call.1} parent=1 // pred_fallthru
      _
    // Predicated region
    $region14: #{tpu_custom_call.1} parent=1 // pred_check
      _
    $region15: #{tpu_custom_call.1} parent=1 // pred_check_branch
      %35 = sbr.rel (0) target = $region17
    $region16: #{tpu_custom_call.1} parent=1 // pred_region
      %37 = vsyncadd [#allocation8], 0
      %s38 = sshll.u32 %s3, 4
      %s39 = int_to_ptr.hbm [resolvable:$true] %s38
      %s40 = sshll.u32 [#allocation7], 4
      %s41 = int_to_ptr.vmem [resolvable:$true] %s40
      %46 = dma.hbm_to_vmem [thread:$0]  %s39, 8192, %s41, [#allocation8], 512, 512, 32
    $region17: #{tpu_custom_call.1} parent=1 // pred_fallthru
      _
    // Predicated region
    $region18: #{tpu_custom_call.1} parent=1 // pred_check
      _
    $region19: #{tpu_custom_call.1} parent=1 // pred_check_branch
      %48 = sbr.rel (0) target = $region21
    $region20: #{tpu_custom_call.1} parent=1 // pred_region
      _
    $region21: #{tpu_custom_call.1} parent=1 // pred_fallthru
      _
    // Predicated region
    $region22: #{tpu_custom_call.1} parent=1 // pred_check
      _
    $region23: #{tpu_custom_call.1} parent=1 // pred_check_branch
      %50 = sbr.rel (0) target = $region25
    $region24: #{tpu_custom_call.1} parent=1 // pred_region
      %52 = vsyncadd [#allocation8], 0
      %s53 = sshll.u32 %s5, 4
      %s54 = int_to_ptr.hbm [resolvable:$true] %s53
      %s55 = sshll.u32 [#allocation9], 4
      %s56 = int_to_ptr.vmem [resolvable:$true] %s55
      %61 = dma.hbm_to_vmem [thread:$0]  %s54, 16384, %s56, [#allocation8], 512, 512, 32
    $region25: #{tpu_custom_call.1} parent=1 // pred_fallthru
      _
    // Predicated region
    $region26: #{tpu_custom_call.1} parent=1 // pred_check
      _
    $region27: #{tpu_custom_call.1} parent=1 // pred_check_branch
      %63 = sbr.rel (0) target = $region29
    $region28: #{tpu_custom_call.1} parent=1 // pred_region
      _
    $region29: #{tpu_custom_call.1} parent=1 // pred_fallthru
      _
    // Predicated region
    $region30: #{tpu_custom_call.1} parent=1 // pred_check
      _
    $region31: #{tpu_custom_call.1} parent=1 // pred_check_branch
      %65 = sbr.rel (0) target = $region33
    $region32: #{tpu_custom_call.1} parent=1 // pred_region
      _
    $region33: #{tpu_custom_call.1} parent=1 // pred_fallthru
      _
    // Predicated region
    $region34: #{tpu_custom_call.1} parent=1 // pred_check
      _
    $region35: #{tpu_custom_call.1} parent=1 // pred_check_branch
      %67 = sbr.rel (0) target = $region37
    $region36: #{tpu_custom_call.1} parent=1 // pred_region
      _
    $region37: #{tpu_custom_call.1} parent=1 // pred_fallthru
      _
    // Predicated region
    $region38: #{tpu_custom_call.1} parent=1 // pred_check
      _
    $region39: #{tpu_custom_call.1} parent=1 // pred_check_branch
      %69 = sbr.rel (0) target = $region41
    $region40: #{tpu_custom_call.1} parent=1 // pred_region
      %71 = dma.done [#allocation5], 4096
    $region41: #{tpu_custom_call.1} parent=1 // pred_fallthru
      _
    // Predicated region
    $region42: #{tpu_custom_call.1} parent=1 // pred_check
      _
    $region43: #{tpu_custom_call.1} parent=1 // pred_check_branch
      %73 = sbr.rel (0) target = $region45
    $region44: #{tpu_custom_call.1} parent=1 // pred_region
      %75 = dma.done [#allocation8], 8192
    $region45: #{tpu_custom_call.1} parent=1 // pred_fallthru
      _
    // Predicated region
    $region46: #{tpu_custom_call.1} parent=1 // pred_check
      _
    $region47: #{tpu_custom_call.1} parent=1 // pred_check_branch
      %77 = sbr.rel (0) target = $region49
    $region48: #{tpu_custom_call.1} parent=1 // pred_region
      %79 = dma.done [#allocation8], 16384
    $region49: #{tpu_custom_call.1} parent=1 // pred_fallthru
      _
    %v80 = vld [vmem:[%s0] sm:$0xff]
    %v81 = vld [vmem:[%s0 + $0x8] sm:$0xff]
    %v82 = vld [vmem:[#allocation4] sm:$0xff]
    %v83 = vld [vmem:[#allocation4 + $0x8] sm:$0xff]
    %v84 = vld [vmem:[#allocation4 + $0x10] sm:$0xff]
    %v85 = vld [vmem:[#allocation4 + $0x18] sm:$0xff]
    %v86 = vld [vmem:[#allocation4 + $0x20] sm:$0xff]
    %v87 = vld [vmem:[#allocation4 + $0x28] sm:$0xff]
    %v88 = vld [vmem:[#allocation4 + $0x30] sm:$0xff]
    %v89 = vld [vmem:[#allocation4 + $0x38] sm:$0xff]
    %v90 = vld [vmem:[#allocation4 + $0x40] sm:$0xff]
    %v91 = vld [vmem:[#allocation4 + $0x48] sm:$0xff]
    %v92 = vld [vmem:[#allocation4 + $0x50] sm:$0xff]
    %v93 = vld [vmem:[#allocation4 + $0x58] sm:$0xff]
    %v94 = vld [vmem:[#allocation4 + $0x60] sm:$0xff]
    %v95 = vld [vmem:[#allocation4 + $0x68] sm:$0xff]
    %v96 = vld [vmem:[#allocation4 + $0x70] sm:$0xff]
    %v97 = vld [vmem:[#allocation4 + $0x78] sm:$0xff]
    %v98 = vld [vmem:[#allocation4 + $0x80] sm:$0xff]
    %v99 = vld [vmem:[#allocation4 + $0x88] sm:$0xff]
    %v100 = vld [vmem:[#allocation4 + $0x90] sm:$0xff]
    %v101 = vld [vmem:[#allocation4 + $0x98] sm:$0xff]
    %v102 = vld [vmem:[#allocation4 + $0xa0] sm:$0xff]
    %v103 = vld [vmem:[#allocation4 + $0xa8] sm:$0xff]
    %v104 = vld [vmem:[#allocation4 + $0xb0] sm:$0xff]
    %v105 = vld [vmem:[#allocation4 + $0xb8] sm:$0xff]
    %v106 = vld [vmem:[#allocation4 + $0xc0] sm:$0xff]
    %v107 = vld [vmem:[#allocation4 + $0xc8] sm:$0xff]
    %v108 = vld [vmem:[#allocation4 + $0xd0] sm:$0xff]
    %v109 = vld [vmem:[#allocation4 + $0xd8] sm:$0xff]
    %v110 = vld [vmem:[#allocation4 + $0xe0] sm:$0xff]
    %v111 = vld [vmem:[#allocation4 + $0xe8] sm:$0xff]
    %v112 = vld [vmem:[#allocation4 + $0xf0] sm:$0xff]
    %v113 = vld [vmem:[#allocation4 + $0xf8] sm:$0xff]
    %v114 = vld [vmem:[%s4] sm:$0xf]
    %v116 = vperm.slane %v114, 0
    %v117 = vperm.slane %v114, 1
    %v118 = vperm.slane %v114, 2
    %v119 = vperm.slane %v114, 3
    %vm124 = vcmask 523264
    %v126 = vsel %vm124, %v80, 0
    %v129 = vsel %vm124, %v81, 0
    %131 = vmatpush.msra.mxu0 0.0
    %132 = vmatpush.msra.mxu0 0.0
    %133 = vmatpush.msra.mxu0 0.0
    %134 = vmatpush.msra.mxu0 0.0
    %135 = vmatpush.msra.mxu0 0.0
    %136 = vmatpush.msra.mxu0 0.0
    %137 = vmatpush.msra.mxu0 0.0
    %138 = vmatpush.msra.mxu0 0.0
    %139 = vmatpush.msra.mxu0 %v110
    %140 = vmatpush.msra.mxu0 %v106
    %141 = vmatpush.msra.mxu0 %v102
    %142 = vmatpush.msra.mxu0 %v98
    %143 = vmatpush.msra.mxu0 %v94
    %144 = vmatpush.msra.mxu0 %v90
    %145 = vmatpush.msra.mxu0 %v86
    %146 = vmatpush.msra.mxu0 %v82
    %147 = vmatmul.f32.gmra.mxu0 %v126
    %v148 = vpop.f32.mrf.mxu0
    %v149 = vadd.f32 %v116, %v148
    %150 = vmatmul.f32.gmra.mxu0 %v129
    %v151 = vpop.f32.mrf.mxu0
    %v152 = vadd.f32 %v116, %v151
    %153 = vdwg.mxu0
    %154 = vmatpush.msra.mxu0 0.0
    %155 = vmatpush.msra.mxu0 0.0
    %156 = vmatpush.msra.mxu0 0.0
    %157 = vmatpush.msra.mxu0 0.0
    %158 = vmatpush.msra.mxu0 0.0
    %159 = vmatpush.msra.mxu0 0.0
    %160 = vmatpush.msra.mxu0 0.0
    %161 = vmatpush.msra.mxu0 0.0
    %162 = vmatpush.msra.mxu0 %v111
    %163 = vmatpush.msra.mxu0 %v107
    %164 = vmatpush.msra.mxu0 %v103
    %165 = vmatpush.msra.mxu0 %v99
    %166 = vmatpush.msra.mxu0 %v95
    %167 = vmatpush.msra.mxu0 %v91
    %168 = vmatpush.msra.mxu0 %v87
    %169 = vmatpush.msra.mxu0 %v83
    %170 = vmatmul.f32.gmra.mxu0 %v126
    %v171 = vpop.f32.mrf.mxu0
    %v172 = vadd.f32 %v117, %v171
    %173 = vmatmul.f32.gmra.mxu0 %v129
    %v174 = vpop.f32.mrf.mxu0
    %v175 = vadd.f32 %v117, %v174
    %176 = vdwg.mxu0
    %177 = vmatpush.msra.mxu0 0.0
    %178 = vmatpush.msra.mxu0 0.0
    %179 = vmatpush.msra.mxu0 0.0
    %180 = vmatpush.msra.mxu0 0.0
    %181 = vmatpush.msra.mxu0 0.0
    %182 = vmatpush.msra.mxu0 0.0
    %183 = vmatpush.msra.mxu0 0.0
    %184 = vmatpush.msra.mxu0 0.0
    %185 = vmatpush.msra.mxu0 %v112
    %186 = vmatpush.msra.mxu0 %v108
    %187 = vmatpush.msra.mxu0 %v104
    %188 = vmatpush.msra.mxu0 %v100
    %189 = vmatpush.msra.mxu0 %v96
    %190 = vmatpush.msra.mxu0 %v92
    %191 = vmatpush.msra.mxu0 %v88
    %192 = vmatpush.msra.mxu0 %v84
    %193 = vmatmul.f32.gmra.mxu0 %v126
    %v194 = vpop.f32.mrf.mxu0
    %v195 = vadd.f32 %v118, %v194
    %196 = vmatmul.f32.gmra.mxu0 %v129
    %v197 = vpop.f32.mrf.mxu0
    %v198 = vadd.f32 %v118, %v197
    %199 = vdwg.mxu0
    %200 = vmatpush.msra.mxu0 0.0
    %201 = vmatpush.msra.mxu0 0.0
    %202 = vmatpush.msra.mxu0 0.0
    %203 = vmatpush.msra.mxu0 0.0
    %204 = vmatpush.msra.mxu0 0.0
    %205 = vmatpush.msra.mxu0 0.0
    %206 = vmatpush.msra.mxu0 0.0
    %207 = vmatpush.msra.mxu0 0.0
    %208 = vmatpush.msra.mxu0 %v113
    %209 = vmatpush.msra.mxu0 %v109
    %210 = vmatpush.msra.mxu0 %v105
    %211 = vmatpush.msra.mxu0 %v101
    %212 = vmatpush.msra.mxu0 %v97
    %213 = vmatpush.msra.mxu0 %v93
    %214 = vmatpush.msra.mxu0 %v89
    %215 = vmatpush.msra.mxu0 %v85
    %216 = vmatmul.f32.gmra.mxu0 %v126
    %v217 = vpop.f32.mrf.mxu0
    %v218 = vadd.f32 %v119, %v217
    %219 = vmatmul.f32.gmra.mxu0 %v129
    %v220 = vpop.f32.mrf.mxu0
    %v221 = vadd.f32 %v119, %v220
    %222 = vdwg.mxu0
    %223 = vst [vmem:[#allocation2] sm:$0xff] %v149
    %224 = vst [vmem:[#allocation2 + $0x8] sm:$0xff] %v172
    %225 = vst [vmem:[#allocation2 + $0x10] sm:$0xff] %v195
    %226 = vst [vmem:[#allocation2 + $0x18] sm:$0xff] %v218
    %227 = vst [vmem:[#allocation2 + $0x20] sm:$0xff] %v152
    %228 = vst [vmem:[#allocation2 + $0x28] sm:$0xff] %v175
    %229 = vst [vmem:[#allocation2 + $0x30] sm:$0xff] %v198
    %230 = vst [vmem:[#allocation2 + $0x38] sm:$0xff] %v221
    %v231 = vld [vmem:[%s6] sm:$0xf]
    %v233 = vperm.slane %v231, 0
    %v234 = vperm.slane %v231, 1
    %v235 = vperm.slane %v231, 2
    %v236 = vperm.slane %v231, 3
    %v241 = vld [vmem:[#allocation2] sm:$0x3]
    %v242 = vld [vmem:[#allocation2 + $0x8] sm:$0x3]
    %v243 = vld [vmem:[#allocation2 + $0x10] sm:$0x3]
    %v244 = vld [vmem:[#allocation2 + $0x18] sm:$0x3]
    %v245 = vld [vmem:[#allocation7] sm:$0xff]
    %v246 = vld [vmem:[#allocation7 + $0x8] sm:$0xff]
    %v247 = vld [vmem:[#allocation7 + $0x10] sm:$0xff]
    %v248 = vld [vmem:[#allocation7 + $0x18] sm:$0xff]
    %v249 = vld [vmem:[#allocation7 + $0x20] sm:$0xff]
    %v250 = vld [vmem:[#allocation7 + $0x28] sm:$0xff]
    %v251 = vld [vmem:[#allocation7 + $0x30] sm:$0xff]
    %v252 = vld [vmem:[#allocation7 + $0x38] sm:$0xff]
    %v253 = vld [vmem:[#allocation7 + $0x40] sm:$0xff]
    %v254 = vld [vmem:[#allocation7 + $0x48] sm:$0xff]
    %v255 = vld [vmem:[#allocation7 + $0x50] sm:$0xff]
    %v256 = vld [vmem:[#allocation7 + $0x58] sm:$0xff]
    %v257 = vld [vmem:[#allocation7 + $0x60] sm:$0xff]
    %v258 = vld [vmem:[#allocation7 + $0x68] sm:$0xff]
    %v259 = vld [vmem:[#allocation7 + $0x70] sm:$0xff]
    %v260 = vld [vmem:[#allocation7 + $0x78] sm:$0xff]
    %v261 = vld [vmem:[#allocation7 + $0x80] sm:$0xff]
    %v262 = vld [vmem:[#allocation7 + $0x88] sm:$0xff]
    %v263 = vld [vmem:[#allocation7 + $0x90] sm:$0xff]
    %v264 = vld [vmem:[#allocation7 + $0x98] sm:$0xff]
    %v265 = vld [vmem:[#allocation7 + $0xa0] sm:$0xff]
    %v266 = vld [vmem:[#allocation7 + $0xa8] sm:$0xff]
    %v267 = vld [vmem:[#allocation7 + $0xb0] sm:$0xff]
    %v268 = vld [vmem:[#allocation7 + $0xb8] sm:$0xff]
    %v269 = vld [vmem:[#allocation7 + $0xc0] sm:$0xff]
    %v270 = vld [vmem:[#allocation7 + $0xc8] sm:$0xff]
    %v271 = vld [vmem:[#allocation7 + $0xd0] sm:$0xff]
    %v272 = vld [vmem:[#allocation7 + $0xd8] sm:$0xff]
    %v273 = vld [vmem:[#allocation7 + $0xe0] sm:$0xff]
    %v274 = vld [vmem:[#allocation7 + $0xe8] sm:$0xff]
    %v275 = vld [vmem:[#allocation7 + $0xf0] sm:$0xff]
    %v276 = vld [vmem:[#allocation7 + $0xf8] sm:$0xff]
    %v277 = vld [vmem:[#allocation7 + $0x100] sm:$0xff]
    %v278 = vld [vmem:[#allocation7 + $0x108] sm:$0xff]
    %v279 = vld [vmem:[#allocation7 + $0x110] sm:$0xff]
    %v280 = vld [vmem:[#allocation7 + $0x118] sm:$0xff]
    %v281 = vld [vmem:[#allocation7 + $0x120] sm:$0xff]
    %v282 = vld [vmem:[#allocation7 + $0x128] sm:$0xff]
    %v283 = vld [vmem:[#allocation7 + $0x130] sm:$0xff]
    %v284 = vld [vmem:[#allocation7 + $0x138] sm:$0xff]
    %v285 = vld [vmem:[#allocation7 + $0x140] sm:$0xff]
    %v286 = vld [vmem:[#allocation7 + $0x148] sm:$0xff]
    %v287 = vld [vmem:[#allocation7 + $0x150] sm:$0xff]
    %v288 = vld [vmem:[#allocation7 + $0x158] sm:$0xff]
    %v289 = vld [vmem:[#allocation7 + $0x160] sm:$0xff]
    %v290 = vld [vmem:[#allocation7 + $0x168] sm:$0xff]
    %v291 = vld [vmem:[#allocation7 + $0x170] sm:$0xff]
    %v292 = vld [vmem:[#allocation7 + $0x178] sm:$0xff]
    %v293 = vld [vmem:[#allocation7 + $0x180] sm:$0xff]
    %v294 = vld [vmem:[#allocation7 + $0x188] sm:$0xff]
    %v295 = vld [vmem:[#allocation7 + $0x190] sm:$0xff]
    %v296 = vld [vmem:[#allocation7 + $0x198] sm:$0xff]
    %v297 = vld [vmem:[#allocation7 + $0x1a0] sm:$0xff]
    %v298 = vld [vmem:[#allocation7 + $0x1a8] sm:$0xff]
    %v299 = vld [vmem:[#allocation7 + $0x1b0] sm:$0xff]
    %v300 = vld [vmem:[#allocation7 + $0x1b8] sm:$0xff]
    %v301 = vld [vmem:[#allocation7 + $0x1c0] sm:$0xff]
    %v302 = vld [vmem:[#allocation7 + $0x1c8] sm:$0xff]
    %v303 = vld [vmem:[#allocation7 + $0x1d0] sm:$0xff]
    %v304 = vld [vmem:[#allocation7 + $0x1d8] sm:$0xff]
    %v305 = vld [vmem:[#allocation7 + $0x1e0] sm:$0xff]
    %v306 = vld [vmem:[#allocation7 + $0x1e8] sm:$0xff]
    %v307 = vld [vmem:[#allocation7 + $0x1f0] sm:$0xff]
    %v308 = vld [vmem:[#allocation7 + $0x1f8] sm:$0xff]
    %309 = vmatpush.msra.mxu0 %v305
    %310 = vmatpush.msra.mxu0 %v301
    %311 = vmatpush.msra.mxu0 %v297
    %312 = vmatpush.msra.mxu0 %v293
    %313 = vmatpush.msra.mxu0 %v289
    %314 = vmatpush.msra.mxu0 %v285
    %315 = vmatpush.msra.mxu0 %v281
    %316 = vmatpush.msra.mxu0 %v277
    %317 = vmatpush.msra.mxu0 %v273
    %318 = vmatpush.msra.mxu0 %v269
    %319 = vmatpush.msra.mxu0 %v265
    %320 = vmatpush.msra.mxu0 %v261
    %321 = vmatpush.msra.mxu0 %v257
    %322 = vmatpush.msra.mxu0 %v253
    %323 = vmatpush.msra.mxu0 %v249
    %324 = vmatpush.msra.mxu0 %v245
    %325 = vmatmul.f32.gmra.mxu0 0.0
    %v326 = vpop.f32.mrf.mxu0
    %v327 = vadd.f32 0.0, %v326
    %328 = vdwg.mxu0
    %329 = vmatpush.msra.mxu0 %v306
    %330 = vmatpush.msra.mxu0 %v302
    %331 = vmatpush.msra.mxu0 %v298
    %332 = vmatpush.msra.mxu0 %v294
    %333 = vmatpush.msra.mxu0 %v290
    %334 = vmatpush.msra.mxu0 %v286
    %335 = vmatpush.msra.mxu0 %v282
    %336 = vmatpush.msra.mxu0 %v278
    %337 = vmatpush.msra.mxu0 %v274
    %338 = vmatpush.msra.mxu0 %v270
    %339 = vmatpush.msra.mxu0 %v266
    %340 = vmatpush.msra.mxu0 %v262
    %341 = vmatpush.msra.mxu0 %v258
    %342 = vmatpush.msra.mxu0 %v254
    %343 = vmatpush.msra.mxu0 %v250
    %344 = vmatpush.msra.mxu0 %v246
    %345 = vmatmul.f32.gmra.mxu0 0.0
    %v346 = vpop.f32.mrf.mxu0
    %v347 = vadd.f32 0.0, %v346
    %348 = vdwg.mxu0
    %349 = vmatpush.msra.mxu0 %v307
    %350 = vmatpush.msra.mxu0 %v303
    %351 = vmatpush.msra.mxu0 %v299
    %352 = vmatpush.msra.mxu0 %v295
    %353 = vmatpush.msra.mxu0 %v291
    %354 = vmatpush.msra.mxu0 %v287
    %355 = vmatpush.msra.mxu0 %v283
    %356 = vmatpush.msra.mxu0 %v279
    %357 = vmatpush.msra.mxu0 %v275
    %358 = vmatpush.msra.mxu0 %v271
    %359 = vmatpush.msra.mxu0 %v267
    %360 = vmatpush.msra.mxu0 %v263
    %361 = vmatpush.msra.mxu0 %v259
    %362 = vmatpush.msra.mxu0 %v255
    %363 = vmatpush.msra.mxu0 %v251
    %364 = vmatpush.msra.mxu0 %v247
    %365 = vmatmul.f32.gmra.mxu0 0.0
    %v366 = vpop.f32.mrf.mxu0
    %v367 = vadd.f32 0.0, %v366
    %368 = vdwg.mxu0
    %369 = vmatpush.msra.mxu0 %v308
    %370 = vmatpush.msra.mxu0 %v304
    %371 = vmatpush.msra.mxu0 %v300
    %372 = vmatpush.msra.mxu0 %v296
    %373 = vmatpush.msra.mxu0 %v292
    %374 = vmatpush.msra.mxu0 %v288
    %375 = vmatpush.msra.mxu0 %v284
    %376 = vmatpush.msra.mxu0 %v280
    %377 = vmatpush.msra.mxu0 %v276
    %378 = vmatpush.msra.mxu0 %v272
    %379 = vmatpush.msra.mxu0 %v268
    %380 = vmatpush.msra.mxu0 %v264
    %381 = vmatpush.msra.mxu0 %v260
    %382 = vmatpush.msra.mxu0 %v256
    %383 = vmatpush.msra.mxu0 %v252
    %384 = vmatpush.msra.mxu0 %v248
    %385 = vmatmul.f32.gmra.mxu0 0.0
    %v386 = vpop.f32.mrf.mxu0
    %v387 = vadd.f32 0.0, %v386
    %388 = vdwg.mxu0
    %v389 = vadd.f32 %v241, %v327
    %v390 = vadd.f32 %v242, %v347
    %v391 = vadd.f32 %v243, %v367
    %v392 = vadd.f32 %v244, %v387
    %v393 = vxor.u32 %v389, 2147483648
    %v394 = vmul.f32 %v393, 1.442695
    %v395 = vpow.pop %v394
    %v396 = vadd.f32 %v395, 1.0
    %v397 = vrcp.pop %v396
    %v398 = vmul.f32 %v396, %v397
    %v399 = vsub.f32 1.0, %v398
    %v400 = vmul.f32 %v397, %v399
    %v401 = vadd.f32 %v397, %v400
    %vm402 = vweird.f32 %v396
    %vm403 = vweird.f32 %v397
    %vm404 = vmor %vm402, %vm403
    %v405 = vsel %vm404, %v397, %v401
    %v406 = vand.u32 2147483647, %v396
    %vm407 = vcmp.eq.f32.partialorder %v406, 8.507059e+37
    %v408 = vand.u32 %v396, 2147483648
    %v409 = vor.u32 1.1754944e-38, %v408
    %v410 = vsel %vm407, %v409, %v405
    %v411 = vmul.f32 1.0, %v410
    %v412 = vxor.u32 %v390, 2147483648
    %v413 = vmul.f32 %v412, 1.442695
    %v414 = vpow.pop %v413
    %v415 = vadd.f32 %v414, 1.0
    %v416 = vrcp.pop %v415
    %v417 = vmul.f32 %v415, %v416
    %v418 = vsub.f32 1.0, %v417
    %v419 = vmul.f32 %v416, %v418
    %v420 = vadd.f32 %v416, %v419
    %vm421 = vweird.f32 %v415
    %vm422 = vweird.f32 %v416
    %vm423 = vmor %vm421, %vm422
    %v424 = vsel %vm423, %v416, %v420
    %v425 = vand.u32 2147483647, %v415
    %vm426 = vcmp.eq.f32.partialorder %v425, 8.507059e+37
    %v427 = vand.u32 %v415, 2147483648
    %v428 = vor.u32 1.1754944e-38, %v427
    %v429 = vsel %vm426, %v428, %v424
    %v430 = vmul.f32 1.0, %v429
    %v431 = vtanh.pop %v391
    %v432 = vxor.u32 %v392, 2147483648
    %v433 = vmul.f32 %v432, 1.442695
    %v434 = vpow.pop %v433
    %v435 = vadd.f32 %v434, 1.0
    %v436 = vrcp.pop %v435
    %v437 = vmul.f32 %v435, %v436
    %v438 = vsub.f32 1.0, %v437
    %v439 = vmul.f32 %v436, %v438
    %v440 = vadd.f32 %v436, %v439
    %vm441 = vweird.f32 %v435
    %vm442 = vweird.f32 %v436
    %vm443 = vmor %vm441, %vm442
    %v444 = vsel %vm443, %v436, %v440
    %v445 = vand.u32 2147483647, %v435
    %vm446 = vcmp.eq.f32.partialorder %v445, 8.507059e+37
    %v447 = vand.u32 %v435, 2147483648
    %v448 = vor.u32 1.1754944e-38, %v447
    %v449 = vsel %vm446, %v448, %v444
    %v450 = vmul.f32 1.0, %v449
    %v451 = vmul.f32 %v430, 0.0
    %v452 = vmul.f32 %v411, %v431
    %v453 = vadd.f32 %v451, %v452
    %v454 = vtanh.pop %v453
    %v455 = vmul.f32 %v450, %v454
    %v456 = vld [vmem:[#allocation9] sm:$0xff]
    %v457 = vld [vmem:[#allocation9 + $0x8] sm:$0xff]
    %v458 = vld [vmem:[#allocation9 + $0x10] sm:$0xff]
    %v459 = vld [vmem:[#allocation9 + $0x18] sm:$0xff]
    %v460 = vld [vmem:[#allocation9 + $0x20] sm:$0xff]
    %v461 = vld [vmem:[#allocation9 + $0x28] sm:$0xff]
    %v462 = vld [vmem:[#allocation9 + $0x30] sm:$0xff]
    %v463 = vld [vmem:[#allocation9 + $0x38] sm:$0xff]
    %v464 = vld [vmem:[#allocation9 + $0x40] sm:$0xff]
    %v465 = vld [vmem:[#allocation9 + $0x48] sm:$0xff]
    %v466 = vld [vmem:[#allocation9 + $0x50] sm:$0xff]
    %v467 = vld [vmem:[#allocation9 + $0x58] sm:$0xff]
    %v468 = vld [vmem:[#allocation9 + $0x60] sm:$0xff]
    %v469 = vld [vmem:[#allocation9 + $0x68] sm:$0xff]
    %v470 = vld [vmem:[#allocation9 + $0x70] sm:$0xff]
    %v471 = vld [vmem:[#allocation9 + $0x78] sm:$0xff]
    %v472 = vld [vmem:[#allocation9 + $0x80] sm:$0xff]
    %v473 = vld [vmem:[#allocation9 + $0x88] sm:$0xff]
    %v474 = vld [vmem:[#allocation9 + $0x90] sm:$0xff]
    %v475 = vld [vmem:[#allocation9 + $0x98] sm:$0xff]
    %v476 = vld [vmem:[#allocation9 + $0xa0] sm:$0xff]
    %v477 = vld [vmem:[#allocation9 + $0xa8] sm:$0xff]
    %v478 = vld [vmem:[#allocation9 + $0xb0] sm:$0xff]
    %v479 = vld [vmem:[#allocation9 + $0xb8] sm:$0xff]
    %v480 = vld [vmem:[#allocation9 + $0xc0] sm:$0xff]
    %v481 = vld [vmem:[#allocation9 + $0xc8] sm:$0xff]
    %v482 = vld [vmem:[#allocation9 + $0xd0] sm:$0xff]
    %v483 = vld [vmem:[#allocation9 + $0xd8] sm:$0xff]
    %v484 = vld [vmem:[#allocation9 + $0xe0] sm:$0xff]
    %v485 = vld [vmem:[#allocation9 + $0xe8] sm:$0xff]
    %v486 = vld [vmem:[#allocation9 + $0xf0] sm:$0xff]
    %v487 = vld [vmem:[#allocation9 + $0xf8] sm:$0xff]
    %v488 = vld [vmem:[#allocation9 + $0x100] sm:$0xff]
    %v489 = vld [vmem:[#allocation9 + $0x108] sm:$0xff]
    %v490 = vld [vmem:[#allocation9 + $0x110] sm:$0xff]
    %v491 = vld [vmem:[#allocation9 + $0x118] sm:$0xff]
    %v492 = vld [vmem:[#allocation9 + $0x120] sm:$0xff]
    %v493 = vld [vmem:[#allocation9 + $0x128] sm:$0xff]
    %v494 = vld [vmem:[#allocation9 + $0x130] sm:$0xff]
    %v495 = vld [vmem:[#allocation9 + $0x138] sm:$0xff]
    %v496 = vld [vmem:[#allocation9 + $0x140] sm:$0xff]
    %v497 = vld [vmem:[#allocation9 + $0x148] sm:$0xff]
    %v498 = vld [vmem:[#allocation9 + $0x150] sm:$0xff]
    %v499 = vld [vmem:[#allocation9 + $0x158] sm:$0xff]
    %v500 = vld [vmem:[#allocation9 + $0x160] sm:$0xff]
    %v501 = vld [vmem:[#allocation9 + $0x168] sm:$0xff]
    %v502 = vld [vmem:[#allocation9 + $0x170] sm:$0xff]
    %v503 = vld [vmem:[#allocation9 + $0x178] sm:$0xff]
    %v504 = vld [vmem:[#allocation9 + $0x180] sm:$0xff]
    %v505 = vld [vmem:[#allocation9 + $0x188] sm:$0xff]
    %v506 = vld [vmem:[#allocation9 + $0x190] sm:$0xff]
    %v507 = vld [vmem:[#allocation9 + $0x198] sm:$0xff]
    %v508 = vld [vmem:[#allocation9 + $0x1a0] sm:$0xff]
    %v509 = vld [vmem:[#allocation9 + $0x1a8] sm:$0xff]
    %v510 = vld [vmem:[#allocation9 + $0x1b0] sm:$0xff]
    %v511 = vld [vmem:[#allocation9 + $0x1b8] sm:$0xff]
    %v512 = vld [vmem:[#allocation9 + $0x1c0] sm:$0xff]
    %v513 = vld [vmem:[#allocation9 + $0x1c8] sm:$0xff]
    %v514 = vld [vmem:[#allocation9 + $0x1d0] sm:$0xff]
    %v515 = vld [vmem:[#allocation9 + $0x1d8] sm:$0xff]
    %v516 = vld [vmem:[#allocation9 + $0x1e0] sm:$0xff]
    %v517 = vld [vmem:[#allocation9 + $0x1e8] sm:$0xff]
    %v518 = vld [vmem:[#allocation9 + $0x1f0] sm:$0xff]
    %v519 = vld [vmem:[#allocation9 + $0x1f8] sm:$0xff]
    %v520 = vld [vmem:[#allocation9 + $0x200] sm:$0xff]
    %v521 = vld [vmem:[#allocation9 + $0x208] sm:$0xff]
    %v522 = vld [vmem:[#allocation9 + $0x210] sm:$0xff]
    %v523 = vld [vmem:[#allocation9 + $0x218] sm:$0xff]
    %v524 = vld [vmem:[#allocation9 + $0x220] sm:$0xff]
    %v525 = vld [vmem:[#allocation9 + $0x228] sm:$0xff]
    %v526 = vld [vmem:[#allocation9 + $0x230] sm:$0xff]
    %v527 = vld [vmem:[#allocation9 + $0x238] sm:$0xff]
    %v528 = vld [vmem:[#allocation9 + $0x240] sm:$0xff]
    %v529 = vld [vmem:[#allocation9 + $0x248] sm:$0xff]
    %v530 = vld [vmem:[#allocation9 + $0x250] sm:$0xff]
    %v531 = vld [vmem:[#allocation9 + $0x258] sm:$0xff]
    %v532 = vld [vmem:[#allocation9 + $0x260] sm:$0xff]
    %v533 = vld [vmem:[#allocation9 + $0x268] sm:$0xff]
    %v534 = vld [vmem:[#allocation9 + $0x270] sm:$0xff]
    %v535 = vld [vmem:[#allocation9 + $0x278] sm:$0xff]
    %v536 = vld [vmem:[#allocation9 + $0x280] sm:$0xff]
    %v537 = vld [vmem:[#allocation9 + $0x288] sm:$0xff]
    %v538 = vld [vmem:[#allocation9 + $0x290] sm:$0xff]
    %v539 = vld [vmem:[#allocation9 + $0x298] sm:$0xff]
    %v540 = vld [vmem:[#allocation9 + $0x2a0] sm:$0xff]
    %v541 = vld [vmem:[#allocation9 + $0x2a8] sm:$0xff]
    %v542 = vld [vmem:[#allocation9 + $0x2b0] sm:$0xff]
    %v543 = vld [vmem:[#allocation9 + $0x2b8] sm:$0xff]
    %v544 = vld [vmem:[#allocation9 + $0x2c0] sm:$0xff]
    %v545 = vld [vmem:[#allocation9 + $0x2c8] sm:$0xff]
    %v546 = vld [vmem:[#allocation9 + $0x2d0] sm:$0xff]
    %v547 = vld [vmem:[#allocation9 + $0x2d8] sm:$0xff]
    %v548 = vld [vmem:[#allocation9 + $0x2e0] sm:$0xff]
    %v549 = vld [vmem:[#allocation9 + $0x2e8] sm:$0xff]
    %v550 = vld [vmem:[#allocation9 + $0x2f0] sm:$0xff]
    %v551 = vld [vmem:[#allocation9 + $0x2f8] sm:$0xff]
    %v552 = vld [vmem:[#allocation9 + $0x300] sm:$0xff]
    %v553 = vld [vmem:[#allocation9 + $0x308] sm:$0xff]
    %v554 = vld [vmem:[#allocation9 + $0x310] sm:$0xff]
    %v555 = vld [vmem:[#allocation9 + $0x318] sm:$0xff]
    %v556 = vld [vmem:[#allocation9 + $0x320] sm:$0xff]
    %v557 = vld [vmem:[#allocation9 + $0x328] sm:$0xff]
    %v558 = vld [vmem:[#allocation9 + $0x330] sm:$0xff]
    %v559 = vld [vmem:[#allocation9 + $0x338] sm:$0xff]
    %v560 = vld [vmem:[#allocation9 + $0x340] sm:$0xff]
    %v561 = vld [vmem:[#allocation9 + $0x348] sm:$0xff]
    %v562 = vld [vmem:[#allocation9 + $0x350] sm:$0xff]
    %v563 = vld [vmem:[#allocation9 + $0x358] sm:$0xff]
    %v564 = vld [vmem:[#allocation9 + $0x360] sm:$0xff]
    %v565 = vld [vmem:[#allocation9 + $0x368] sm:$0xff]
    %v566 = vld [vmem:[#allocation9 + $0x370] sm:$0xff]
    %v567 = vld [vmem:[#allocation9 + $0x378] sm:$0xff]
    %v568 = vld [vmem:[#allocation9 + $0x380] sm:$0xff]
    %v569 = vld [vmem:[#allocation9 + $0x388] sm:$0xff]
    %v570 = vld [vmem:[#allocation9 + $0x390] sm:$0xff]
    %v571 = vld [vmem:[#allocation9 + $0x398] sm:$0xff]
    %v572 = vld [vmem:[#allocation9 + $0x3a0] sm:$0xff]
    %v573 = vld [vmem:[#allocation9 + $0x3a8] sm:$0xff]
    %v574 = vld [vmem:[#allocation9 + $0x3b0] sm:$0xff]
    %v575 = vld [vmem:[#allocation9 + $0x3b8] sm:$0xff]
    %v576 = vld [vmem:[#allocation9 + $0x3c0] sm:$0xff]
    %v577 = vld [vmem:[#allocation9 + $0x3c8] sm:$0xff]
    %v578 = vld [vmem:[#allocation9 + $0x3d0] sm:$0xff]
    %v579 = vld [vmem:[#allocation9 + $0x3d8] sm:$0xff]
    %v580 = vld [vmem:[#allocation9 + $0x3e0] sm:$0xff]
    %v581 = vld [vmem:[#allocation9 + $0x3e8] sm:$0xff]
    %v582 = vld [vmem:[#allocation9 + $0x3f0] sm:$0xff]
    %v583 = vld [vmem:[#allocation9 + $0x3f8] sm:$0xff]
    %584 = vmatpush.msra.mxu0 %v516
    %585 = vmatpush.msra.mxu0 %v512
    %586 = vmatpush.msra.mxu0 %v508
    %587 = vmatpush.msra.mxu0 %v504
    %588 = vmatpush.msra.mxu0 %v500
    %589 = vmatpush.msra.mxu0 %v496
    %590 = vmatpush.msra.mxu0 %v492
    %591 = vmatpush.msra.mxu0 %v488
    %592 = vmatpush.msra.mxu0 %v484
    %593 = vmatpush.msra.mxu0 %v480
    %594 = vmatpush.msra.mxu0 %v476
    %595 = vmatpush.msra.mxu0 %v472
    %596 = vmatpush.msra.mxu0 %v468
    %597 = vmatpush.msra.mxu0 %v464
    %598 = vmatpush.msra.mxu0 %v460
    %599 = vmatpush.msra.mxu0 %v456
    %600 = vmatmul.f32.gmra.mxu0 %v455
    %v601 = vpop.f32.mrf.mxu0
    %v602 = vadd.f32 %v233, %v601
    %603 = vdwg.mxu0
    %604 = vmatpush.msra.mxu0 %v580
    %605 = vmatpush.msra.mxu0 %v576
    %606 = vmatpush.msra.mxu0 %v572
    %607 = vmatpush.msra.mxu0 %v568
    %608 = vmatpush.msra.mxu0 %v564
    %609 = vmatpush.msra.mxu0 %v560
    %610 = vmatpush.msra.mxu0 %v556
    %611 = vmatpush.msra.mxu0 %v552
    %612 = vmatpush.msra.mxu0 %v548
    %613 = vmatpush.msra.mxu0 %v544
    %614 = vmatpush.msra.mxu0 %v540
    %615 = vmatpush.msra.mxu0 %v536
    %616 = vmatpush.msra.mxu0 %v532
    %617 = vmatpush.msra.mxu0 %v528
    %618 = vmatpush.msra.mxu0 %v524
    %619 = vmatpush.msra.mxu0 %v520
    %620 = vmatmul.f32.gmra.mxu0 0.0
    %v621 = vpop.f32.mrf.mxu0
    %v622 = vadd.f32 %v602, %v621
    %623 = vdwg.mxu0
    %624 = vmatpush.msra.mxu0 %v517
    %625 = vmatpush.msra.mxu0 %v513
    %626 = vmatpush.msra.mxu0 %v509
    %627 = vmatpush.msra.mxu0 %v505
    %628 = vmatpush.msra.mxu0 %v501
    %629 = vmatpush.msra.mxu0 %v497
    %630 = vmatpush.msra.mxu0 %v493
    %631 = vmatpush.msra.mxu0 %v489
    %632 = vmatpush.msra.mxu0 %v485
    %633 = vmatpush.msra.mxu0 %v481
    %634 = vmatpush.msra.mxu0 %v477
    %635 = vmatpush.msra.mxu0 %v473
    %636 = vmatpush.msra.mxu0 %v469
    %637 = vmatpush.msra.mxu0 %v465
    %638 = vmatpush.msra.mxu0 %v461
    %639 = vmatpush.msra.mxu0 %v457
    %640 = vmatmul.f32.gmra.mxu0 %v455
    %v641 = vpop.f32.mrf.mxu0
    %v642 = vadd.f32 %v234, %v641
    %643 = vdwg.mxu0
    %644 = vmatpush.msra.mxu0 %v581
    %645 = vmatpush.msra.mxu0 %v577
    %646 = vmatpush.msra.mxu0 %v573
    %647 = vmatpush.msra.mxu0 %v569
    %648 = vmatpush.msra.mxu0 %v565
    %649 = vmatpush.msra.mxu0 %v561
    %650 = vmatpush.msra.mxu0 %v557
    %651 = vmatpush.msra.mxu0 %v553
    %652 = vmatpush.msra.mxu0 %v549
    %653 = vmatpush.msra.mxu0 %v545
    %654 = vmatpush.msra.mxu0 %v541
    %655 = vmatpush.msra.mxu0 %v537
    %656 = vmatpush.msra.mxu0 %v533
    %657 = vmatpush.msra.mxu0 %v529
    %658 = vmatpush.msra.mxu0 %v525
    %659 = vmatpush.msra.mxu0 %v521
    %660 = vmatmul.f32.gmra.mxu0 0.0
    %v661 = vpop.f32.mrf.mxu0
    %v662 = vadd.f32 %v642, %v661
    %663 = vdwg.mxu0
    %664 = vmatpush.msra.mxu0 %v518
    %665 = vmatpush.msra.mxu0 %v514
    %666 = vmatpush.msra.mxu0 %v510
    %667 = vmatpush.msra.mxu0 %v506
    %668 = vmatpush.msra.mxu0 %v502
    %669 = vmatpush.msra.mxu0 %v498
    %670 = vmatpush.msra.mxu0 %v494
    %671 = vmatpush.msra.mxu0 %v490
    %672 = vmatpush.msra.mxu0 %v486
    %673 = vmatpush.msra.mxu0 %v482
    %674 = vmatpush.msra.mxu0 %v478
    %675 = vmatpush.msra.mxu0 %v474
    %676 = vmatpush.msra.mxu0 %v470
    %677 = vmatpush.msra.mxu0 %v466
    %678 = vmatpush.msra.mxu0 %v462
    %679 = vmatpush.msra.mxu0 %v458
    %680 = vmatmul.f32.gmra.mxu0 %v455
    %v681 = vpop.f32.mrf.mxu0
    %v682 = vadd.f32 %v235, %v681
    %683 = vdwg.mxu0
    %684 = vmatpush.msra.mxu0 %v582
    %685 = vmatpush.msra.mxu0 %v578
    %686 = vmatpush.msra.mxu0 %v574
    %687 = vmatpush.msra.mxu0 %v570
    %688 = vmatpush.msra.mxu0 %v566
    %689 = vmatpush.msra.mxu0 %v562
    %690 = vmatpush.msra.mxu0 %v558
    %691 = vmatpush.msra.mxu0 %v554
    %692 = vmatpush.msra.mxu0 %v550
    %693 = vmatpush.msra.mxu0 %v546
    %694 = vmatpush.msra.mxu0 %v542
    %695 = vmatpush.msra.mxu0 %v538
    %696 = vmatpush.msra.mxu0 %v534
    %697 = vmatpush.msra.mxu0 %v530
    %698 = vmatpush.msra.mxu0 %v526
    %699 = vmatpush.msra.mxu0 %v522
    %700 = vmatmul.f32.gmra.mxu0 0.0
    %v701 = vpop.f32.mrf.mxu0
    %v702 = vadd.f32 %v682, %v701
    %703 = vdwg.mxu0
    %704 = vmatpush.msra.mxu0 %v519
    %705 = vmatpush.msra.mxu0 %v515
    %706 = vmatpush.msra.mxu0 %v511
    %707 = vmatpush.msra.mxu0 %v507
    %708 = vmatpush.msra.mxu0 %v503
    %709 = vmatpush.msra.mxu0 %v499
    %710 = vmatpush.msra.mxu0 %v495
    %711 = vmatpush.msra.mxu0 %v491
    %712 = vmatpush.msra.mxu0 %v487
    %713 = vmatpush.msra.mxu0 %v483
    %714 = vmatpush.msra.mxu0 %v479
    %715 = vmatpush.msra.mxu0 %v475
    %716 = vmatpush.msra.mxu0 %v471
    %717 = vmatpush.msra.mxu0 %v467
    %718 = vmatpush.msra.mxu0 %v463
    %719 = vmatpush.msra.mxu0 %v459
    %720 = vmatmul.f32.gmra.mxu0 %v455
    %v721 = vpop.f32.mrf.mxu0
    %v722 = vadd.f32 %v236, %v721
    %723 = vdwg.mxu0
    %724 = vmatpush.msra.mxu0 %v583
    %725 = vmatpush.msra.mxu0 %v579
    %726 = vmatpush.msra.mxu0 %v575
    %727 = vmatpush.msra.mxu0 %v571
    %728 = vmatpush.msra.mxu0 %v567
    %729 = vmatpush.msra.mxu0 %v563
    %730 = vmatpush.msra.mxu0 %v559
    %731 = vmatpush.msra.mxu0 %v555
    %732 = vmatpush.msra.mxu0 %v551
    %733 = vmatpush.msra.mxu0 %v547
    %734 = vmatpush.msra.mxu0 %v543
    %735 = vmatpush.msra.mxu0 %v539
    %736 = vmatpush.msra.mxu0 %v535
    %737 = vmatpush.msra.mxu0 %v531
    %738 = vmatpush.msra.mxu0 %v527
    %739 = vmatpush.msra.mxu0 %v523
    %740 = vmatmul.f32.gmra.mxu0 0.0
    %v741 = vpop.f32.mrf.mxu0
    %v742 = vadd.f32 %v722, %v741
    %743 = vdwg.mxu0
    %v744 = vxor.u32 %v622, 2147483648
    %v745 = vmul.f32 %v744, 1.442695
    %v746 = vpow.pop %v745
    %v747 = vadd.f32 %v746, 1.0
    %v748 = vrcp.pop %v747
    %v749 = vmul.f32 %v747, %v748
    %v750 = vsub.f32 1.0, %v749
    %v751 = vmul.f32 %v748, %v750
    %v752 = vadd.f32 %v748, %v751
    %vm753 = vweird.f32 %v747
    %vm754 = vweird.f32 %v748
    %vm755 = vmor %vm753, %vm754
    %v756 = vsel %vm755, %v748, %v752
    %v757 = vand.u32 2147483647, %v747
    %vm758 = vcmp.eq.f32.partialorder %v757, 8.507059e+37
    %v759 = vand.u32 %v747, 2147483648
    %v760 = vor.u32 1.1754944e-38, %v759
    %v761 = vsel %vm758, %v760, %v756
    %v762 = vmul.f32 1.0, %v761
    %v763 = vxor.u32 %v662, 2147483648
    %v764 = vmul.f32 %v763, 1.442695
    %v765 = vpow.pop %v764
    %v766 = vadd.f32 %v765, 1.0
    %v767 = vrcp.pop %v766
    %v768 = vmul.f32 %v766, %v767
    %v769 = vsub.f32 1.0, %v768
    %v770 = vmul.f32 %v767, %v769
    %v771 = vadd.f32 %v767, %v770
    %vm772 = vweird.f32 %v766
    %vm773 = vweird.f32 %v767
    %vm774 = vmor %vm772, %vm773
    %v775 = vsel %vm774, %v767, %v771
    %v776 = vand.u32 2147483647, %v766
    %vm777 = vcmp.eq.f32.partialorder %v776, 8.507059e+37
    %v778 = vand.u32 %v766, 2147483648
    %v779 = vor.u32 1.1754944e-38, %v778
    %v780 = vsel %vm777, %v779, %v775
    %v781 = vmul.f32 1.0, %v780
    %v782 = vtanh.pop %v702
    %v783 = vxor.u32 %v742, 2147483648
    %v784 = vmul.f32 %v783, 1.442695
    %v785 = vpow.pop %v784
    %v786 = vadd.f32 %v785, 1.0
    %v787 = vrcp.pop %v786
    %v788 = vmul.f32 %v786, %v787
    %v789 = vsub.f32 1.0, %v788
    %v790 = vmul.f32 %v787, %v789
    %v791 = vadd.f32 %v787, %v790
    %vm792 = vweird.f32 %v786
    %vm793 = vweird.f32 %v787
    %vm794 = vmor %vm792, %vm793
    %v795 = vsel %vm794, %v787, %v791
    %v796 = vand.u32 2147483647, %v786
    %vm797 = vcmp.eq.f32.partialorder %v796, 8.507059e+37
    %v798 = vand.u32 %v786, 2147483648
    %v799 = vor.u32 1.1754944e-38, %v798
    %v800 = vsel %vm797, %v799, %v795
    %v801 = vmul.f32 1.0, %v800
    %v802 = vmul.f32 %v781, 0.0
    %v803 = vmul.f32 %v762, %v782
    %v804 = vadd.f32 %v802, %v803
    %v805 = vtanh.pop %v804
    %v806 = vmul.f32 %v801, %v805
    %807 = vst [vmem:[#allocation3] sm:$0x3] %v806
    %v808 = vld [vmem:[#allocation2] sm:$0xc]
    %v809 = vld [vmem:[#allocation2 + $0x8] sm:$0xc]
    %v810 = vld [vmem:[#allocation2 + $0x10] sm:$0xc]
    %v811 = vld [vmem:[#allocation2 + $0x18] sm:$0xc]
    %v812 = vld [vmem:[#allocation7] sm:$0xff]
    %v813 = vld [vmem:[#allocation7 + $0x8] sm:$0xff]
    %v814 = vld [vmem:[#allocation7 + $0x10] sm:$0xff]
    %v815 = vld [vmem:[#allocation7 + $0x18] sm:$0xff]
    %v816 = vld [vmem:[#allocation7 + $0x20] sm:$0xff]
    %v817 = vld [vmem:[#allocation7 + $0x28] sm:$0xff]
    %v818 = vld [vmem:[#allocation7 + $0x30] sm:$0xff]
    %v819 = vld [vmem:[#allocation7 + $0x38] sm:$0xff]
    %v820 = vld [vmem:[#allocation7 + $0x40] sm:$0xff]
    %v821 = vld [vmem:[#allocation7 + $0x48] sm:$0xff]
    %v822 = vld [vmem:[#allocation7 + $0x50] sm:$0xff]
    %v823 = vld [vmem:[#allocation7 + $0x58] sm:$0xff]
    %v824 = vld [vmem:[#allocation7 + $0x60] sm:$0xff]
    %v825 = vld [vmem:[#allocation7 + $0x68] sm:$0xff]
    %v826 = vld [vmem:[#allocation7 + $0x70] sm:$0xff]
    %v827 = vld [vmem:[#allocation7 + $0x78] sm:$0xff]
    %v828 = vld [vmem:[#allocation7 + $0x80] sm:$0xff]
    %v829 = vld [vmem:[#allocation7 + $0x88] sm:$0xff]
    %v830 = vld [vmem:[#allocation7 + $0x90] sm:$0xff]
    %v831 = vld [vmem:[#allocation7 + $0x98] sm:$0xff]
    %v832 = vld [vmem:[#allocation7 + $0xa0] sm:$0xff]
    %v833 = vld [vmem:[#allocation7 + $0xa8] sm:$0xff]
    %v834 = vld [vmem:[#allocation7 + $0xb0] sm:$0xff]
    %v835 = vld [vmem:[#allocation7 + $0xb8] sm:$0xff]
    %v836 = vld [vmem:[#allocation7 + $0xc0] sm:$0xff]
    %v837 = vld [vmem:[#allocation7 + $0xc8] sm:$0xff]
    %v838 = vld [vmem:[#allocation7 + $0xd0] sm:$0xff]
    %v839 = vld [vmem:[#allocation7 + $0xd8] sm:$0xff]
    %v840 = vld [vmem:[#allocation7 + $0xe0] sm:$0xff]
    %v841 = vld [vmem:[#allocation7 + $0xe8] sm:$0xff]
    %v842 = vld [vmem:[#allocation7 + $0xf0] sm:$0xff]
    %v843 = vld [vmem:[#allocation7 + $0xf8] sm:$0xff]
    %v844 = vld [vmem:[#allocation7 + $0x100] sm:$0xff]
    %v845 = vld [vmem:[#allocation7 + $0x108] sm:$0xff]
    %v846 = vld [vmem:[#allocation7 + $0x110] sm:$0xff]
    %v847 = vld [vmem:[#allocation7 + $0x118] sm:$0xff]
    %v848 = vld [vmem:[#allocation7 + $0x120] sm:$0xff]
    %v849 = vld [vmem:[#allocation7 + $0x128] sm:$0xff]
    %v850 = vld [vmem:[#allocation7 + $0x130] sm:$0xff]
    %v851 = vld [vmem:[#allocation7 + $0x138] sm:$0xff]
    %v852 = vld [vmem:[#allocation7 + $0x140] sm:$0xff]
    %v853 = vld [vmem:[#allocation7 + $0x148] sm:$0xff]
    %v854 = vld [vmem:[#allocation7 + $0x150] sm:$0xff]
    %v855 = vld [vmem:[#allocation7 + $0x158] sm:$0xff]
    %v856 = vld [vmem:[#allocation7 + $0x160] sm:$0xff]
    %v857 = vld [vmem:[#allocation7 + $0x168] sm:$0xff]
    %v858 = vld [vmem:[#allocation7 + $0x170] sm:$0xff]
    %v859 = vld [vmem:[#allocation7 + $0x178] sm:$0xff]
    %v860 = vld [vmem:[#allocation7 + $0x180] sm:$0xff]
    %v861 = vld [vmem:[#allocation7 + $0x188] sm:$0xff]
    %v862 = vld [vmem:[#allocation7 + $0x190] sm:$0xff]
    %v863 = vld [vmem:[#allocation7 + $0x198] sm:$0xff]
    %v864 = vld [vmem:[#allocation7 + $0x1a0] sm:$0xff]
    %v865 = vld [vmem:[#allocation7 + $0x1a8] sm:$0xff]
    %v866 = vld [vmem:[#allocation7 + $0x1b0] sm:$0xff]
    %v867 = vld [vmem:[#allocation7 + $0x1b8] sm:$0xff]
    %v868 = vld [vmem:[#allocation7 + $0x1c0] sm:$0xff]
    %v869 = vld [vmem:[#allocation7 + $0x1c8] sm:$0xff]
    %v870 = vld [vmem:[#allocation7 + $0x1d0] sm:$0xff]
    %v871 = vld [vmem:[#allocation7 + $0x1d8] sm:$0xff]
    %v872 = vld [vmem:[#allocation7 + $0x1e0] sm:$0xff]
    %v873 = vld [vmem:[#allocation7 + $0x1e8] sm:$0xff]
    %v874 = vld [vmem:[#allocation7 + $0x1f0] sm:$0xff]
    %v875 = vld [vmem:[#allocation7 + $0x1f8] sm:$0xff]
    %876 = vmatpush.msra.mxu0 %v872
    %877 = vmatpush.msra.mxu0 %v868
    %878 = vmatpush.msra.mxu0 %v864
    %879 = vmatpush.msra.mxu0 %v860
    %880 = vmatpush.msra.mxu0 %v856
    %881 = vmatpush.msra.mxu0 %v852
    %882 = vmatpush.msra.mxu0 %v848
    %883 = vmatpush.msra.mxu0 %v844
    %884 = vmatpush.msra.mxu0 %v840
    %885 = vmatpush.msra.mxu0 %v836
    %886 = vmatpush.msra.mxu0 %v832
    %887 = vmatpush.msra.mxu0 %v828
    %888 = vmatpush.msra.mxu0 %v824
    %889 = vmatpush.msra.mxu0 %v820
    %890 = vmatpush.msra.mxu0 %v816
    %891 = vmatpush.msra.mxu0 %v812
    %892 = vmatmul.f32.gmra.mxu0 %v455
    %v893 = vpop.f32.mrf.mxu0
    %v894 = vadd.f32 0.0, %v893
    %895 = vdwg.mxu0
    %896 = vmatpush.msra.mxu0 %v873
    %897 = vmatpush.msra.mxu0 %v869
    %898 = vmatpush.msra.mxu0 %v865
    %899 = vmatpush.msra.mxu0 %v861
    %900 = vmatpush.msra.mxu0 %v857
    %901 = vmatpush.msra.mxu0 %v853
    %902 = vmatpush.msra.mxu0 %v849
    %903 = vmatpush.msra.mxu0 %v845
    %904 = vmatpush.msra.mxu0 %v841
    %905 = vmatpush.msra.mxu0 %v837
    %906 = vmatpush.msra.mxu0 %v833
    %907 = vmatpush.msra.mxu0 %v829
    %908 = vmatpush.msra.mxu0 %v825
    %909 = vmatpush.msra.mxu0 %v821
    %910 = vmatpush.msra.mxu0 %v817
    %911 = vmatpush.msra.mxu0 %v813
    %912 = vmatmul.f32.gmra.mxu0 %v455
    %v913 = vpop.f32.mrf.mxu0
    %v914 = vadd.f32 0.0, %v913
    %915 = vdwg.mxu0
    %916 = vmatpush.msra.mxu0 %v874
    %917 = vmatpush.msra.mxu0 %v870
    %918 = vmatpush.msra.mxu0 %v866
    %919 = vmatpush.msra.mxu0 %v862
    %920 = vmatpush.msra.mxu0 %v858
    %921 = vmatpush.msra.mxu0 %v854
    %922 = vmatpush.msra.mxu0 %v850
    %923 = vmatpush.msra.mxu0 %v846
    %924 = vmatpush.msra.mxu0 %v842
    %925 = vmatpush.msra.mxu0 %v838
    %926 = vmatpush.msra.mxu0 %v834
    %927 = vmatpush.msra.mxu0 %v830
    %928 = vmatpush.msra.mxu0 %v826
    %929 = vmatpush.msra.mxu0 %v822
    %930 = vmatpush.msra.mxu0 %v818
    %931 = vmatpush.msra.mxu0 %v814
    %932 = vmatmul.f32.gmra.mxu0 %v455
    %v933 = vpop.f32.mrf.mxu0
    %v934 = vadd.f32 0.0, %v933
    %935 = vdwg.mxu0
    %936 = vmatpush.msra.mxu0 %v875
    %937 = vmatpush.msra.mxu0 %v871
    %938 = vmatpush.msra.mxu0 %v867
    %939 = vmatpush.msra.mxu0 %v863
    %940 = vmatpush.msra.mxu0 %v859
    %941 = vmatpush.msra.mxu0 %v855
    %942 = vmatpush.msra.mxu0 %v851
    %943 = vmatpush.msra.mxu0 %v847
    %944 = vmatpush.msra.mxu0 %v843
    %945 = vmatpush.msra.mxu0 %v839
    %946 = vmatpush.msra.mxu0 %v835
    %947 = vmatpush.msra.mxu0 %v831
    %948 = vmatpush.msra.mxu0 %v827
    %949 = vmatpush.msra.mxu0 %v823
    %950 = vmatpush.msra.mxu0 %v819
    %951 = vmatpush.msra.mxu0 %v815
    %952 = vmatmul.f32.gmra.mxu0 %v455
    %v953 = vpop.f32.mrf.mxu0
    %v954 = vadd.f32 0.0, %v953
    %955 = vdwg.mxu0
    %v960 = vrot.slane %v894, 6
    %v961 = vrot.slane %v914, 6
    %v962 = vrot.slane %v934, 6
    %v963 = vrot.slane %v954, 6
    %v968 = vadd.f32 %v808, %v960
    %v969 = vadd.f32 %v809, %v961
    %v970 = vadd.f32 %v810, %v962
    %v971 = vadd.f32 %v811, %v963
    %v972 = vxor.u32 %v968, 2147483648
    %v973 = vmul.f32 %v972, 1.442695
    %v974 = vpow.pop %v973
    %v975 = vadd.f32 %v974, 1.0
    %v976 = vrcp.pop %v975
    %v977 = vmul.f32 %v975, %v976
    %v978 = vsub.f32 1.0, %v977
    %v979 = vmul.f32 %v976, %v978
    %v980 = vadd.f32 %v976, %v979
    %vm981 = vweird.f32 %v975
    %vm982 = vweird.f32 %v976
    %vm983 = vmor %vm981, %vm982
    %v984 = vsel %vm983, %v976, %v980
    %v985 = vand.u32 2147483647, %v975
    %vm986 = vcmp.eq.f32.partialorder %v985, 8.507059e+37
    %v987 = vand.u32 %v975, 2147483648
    %v988 = vor.u32 1.1754944e-38, %v987
    %v989 = vsel %vm986, %v988, %v984
    %v990 = vmul.f32 1.0, %v989
    %v991 = vxor.u32 %v969, 2147483648
    %v992 = vmul.f32 %v991, 1.442695
    %v993 = vpow.pop %v992
    %v994 = vadd.f32 %v993, 1.0
    %v995 = vrcp.pop %v994
    %v996 = vmul.f32 %v994, %v995
    %v997 = vsub.f32 1.0, %v996
    %v998 = vmul.f32 %v995, %v997
    %v999 = vadd.f32 %v995, %v998
    %vm1000 = vweird.f32 %v994
    %vm1001 = vweird.f32 %v995
    %vm1002 = vmor %vm1000, %vm1001
    %v1003 = vsel %vm1002, %v995, %v999
    %v1004 = vand.u32 2147483647, %v994
    %vm1005 = vcmp.eq.f32.partialorder %v1004, 8.507059e+37
    %v1006 = vand.u32 %v994, 2147483648
    %v1007 = vor.u32 1.1754944e-38, %v1006
    %v1008 = vsel %vm1005, %v1007, %v1003
    %v1009 = vmul.f32 1.0, %v1008
    %v1010 = vtanh.pop %v970
    %v1011 = vxor.u32 %v971, 2147483648
    %v1012 = vmul.f32 %v1011, 1.442695
    %v1013 = vpow.pop %v1012
    %v1014 = vadd.f32 %v1013, 1.0
    %v1015 = vrcp.pop %v1014
    %v1016 = vmul.f32 %v1014, %v1015
    %v1017 = vsub.f32 1.0, %v1016
    %v1018 = vmul.f32 %v1015, %v1017
    %v1019 = vadd.f32 %v1015, %v1018
    %vm1020 = vweird.f32 %v1014
    %vm1021 = vweird.f32 %v1015
    %vm1022 = vmor %vm1020, %vm1021
    %v1023 = vsel %vm1022, %v1015, %v1019
    %v1024 = vand.u32 2147483647, %v1014
    %vm1025 = vcmp.eq.f32.partialorder %v1024, 8.507059e+37
    %v1026 = vand.u32 %v1014, 2147483648
    %v1027 = vor.u32 1.1754944e-38, %v1026
    %v1028 = vsel %vm1025, %v1027, %v1023
    %v1029 = vmul.f32 1.0, %v1028
    %v1031 = vrot.slane %v453, 6
    %v1033 = vmul.f32 %v1009, %v1031
    %v1034 = vmul.f32 %v990, %v1010
    %v1035 = vadd.f32 %v1033, %v1034
    %v1036 = vtanh.pop %v1035
    %v1037 = vmul.f32 %v1029, %v1036
    %v1039 = vrot.slane %v806, 6
    %v1040 = vld [vmem:[#allocation9] sm:$0xff]
    %v1041 = vld [vmem:[#allocation9 + $0x8] sm:$0xff]
    %v1042 = vld [vmem:[#allocation9 + $0x10] sm:$0xff]
    %v1043 = vld [vmem:[#allocation9 + $0x18] sm:$0xff]
    %v1044 = vld [vmem:[#allocation9 + $0x20] sm:$0xff]
    %v1045 = vld [vmem:[#allocation9 + $0x28] sm:$0xff]
    %v1046 = vld [vmem:[#allocation9 + $0x30] sm:$0xff]
    %v1047 = vld [vmem:[#allocation9 + $0x38] sm:$0xff]
    %v1048 = vld [vmem:[#allocation9 + $0x40] sm:$0xff]
    %v1049 = vld [vmem:[#allocation9 + $0x48] sm:$0xff]
    %v1050 = vld [vmem:[#allocation9 + $0x50] sm:$0xff]
    %v1051 = vld [vmem:[#allocation9 + $0x58] sm:$0xff]
    %v1052 = vld [vmem:[#allocation9 + $0x60] sm:$0xff]
    %v1053 = vld [vmem:[#allocation9 + $0x68] sm:$0xff]
    %v1054 = vld [vmem:[#allocation9 + $0x70] sm:$0xff]
    %v1055 = vld [vmem:[#allocation9 + $0x78] sm:$0xff]
    %v1056 = vld [vmem:[#allocation9 + $0x80] sm:$0xff]
    %v1057 = vld [vmem:[#allocation9 + $0x88] sm:$0xff]
    %v1058 = vld [vmem:[#allocation9 + $0x90] sm:$0xff]
    %v1059 = vld [vmem:[#allocation9 + $0x98] sm:$0xff]
    %v1060 = vld [vmem:[#allocation9 + $0xa0] sm:$0xff]
    %v1061 = vld [vmem:[#allocation9 + $0xa8] sm:$0xff]
    %v1062 = vld [vmem:[#allocation9 + $0xb0] sm:$0xff]
    %v1063 = vld [vmem:[#allocation9 + $0xb8] sm:$0xff]
    %v1064 = vld [vmem:[#allocation9 + $0xc0] sm:$0xff]
    %v1065 = vld [vmem:[#allocation9 + $0xc8] sm:$0xff]
    %v1066 = vld [vmem:[#allocation9 + $0xd0] sm:$0xff]
    %v1067 = vld [vmem:[#allocation9 + $0xd8] sm:$0xff]
    %v1068 = vld [vmem:[#allocation9 + $0xe0] sm:$0xff]
    %v1069 = vld [vmem:[#allocation9 + $0xe8] sm:$0xff]
    %v1070 = vld [vmem:[#allocation9 + $0xf0] sm:$0xff]
    %v1071 = vld [vmem:[#allocation9 + $0xf8] sm:$0xff]
    %v1072 = vld [vmem:[#allocation9 + $0x100] sm:$0xff]
    %v1073 = vld [vmem:[#allocation9 + $0x108] sm:$0xff]
    %v1074 = vld [vmem:[#allocation9 + $0x110] sm:$0xff]
    %v1075 = vld [vmem:[#allocation9 + $0x118] sm:$0xff]
    %v1076 = vld [vmem:[#allocation9 + $0x120] sm:$0xff]
    %v1077 = vld [vmem:[#allocation9 + $0x128] sm:$0xff]
    %v1078 = vld [vmem:[#allocation9 + $0x130] sm:$0xff]
    %v1079 = vld [vmem:[#allocation9 + $0x138] sm:$0xff]
    %v1080 = vld [vmem:[#allocation9 + $0x140] sm:$0xff]
    %v1081 = vld [vmem:[#allocation9 + $0x148] sm:$0xff]
    %v1082 = vld [vmem:[#allocation9 + $0x150] sm:$0xff]
    %v1083 = vld [vmem:[#allocation9 + $0x158] sm:$0xff]
    %v1084 = vld [vmem:[#allocation9 + $0x160] sm:$0xff]
    %v1085 = vld [vmem:[#allocation9 + $0x168] sm:$0xff]
    %v1086 = vld [vmem:[#allocation9 + $0x170] sm:$0xff]
    %v1087 = vld [vmem:[#allocation9 + $0x178] sm:$0xff]
    %v1088 = vld [vmem:[#allocation9 + $0x180] sm:$0xff]
    %v1089 = vld [vmem:[#allocation9 + $0x188] sm:$0xff]
    %v1090 = vld [vmem:[#allocation9 + $0x190] sm:$0xff]
    %v1091 = vld [vmem:[#allocation9 + $0x198] sm:$0xff]
    %v1092 = vld [vmem:[#allocation9 + $0x1a0] sm:$0xff]
    %v1093 = vld [vmem:[#allocation9 + $0x1a8] sm:$0xff]
    %v1094 = vld [vmem:[#allocation9 + $0x1b0] sm:$0xff]
    %v1095 = vld [vmem:[#allocation9 + $0x1b8] sm:$0xff]
    %v1096 = vld [vmem:[#allocation9 + $0x1c0] sm:$0xff]
    %v1097 = vld [vmem:[#allocation9 + $0x1c8] sm:$0xff]
    %v1098 = vld [vmem:[#allocation9 + $0x1d0] sm:$0xff]
    %v1099 = vld [vmem:[#allocation9 + $0x1d8] sm:$0xff]
    %v1100 = vld [vmem:[#allocation9 + $0x1e0] sm:$0xff]
    %v1101 = vld [vmem:[#allocation9 + $0x1e8] sm:$0xff]
    %v1102 = vld [vmem:[#allocation9 + $0x1f0] sm:$0xff]
    %v1103 = vld [vmem:[#allocation9 + $0x1f8] sm:$0xff]
    %v1104 = vld [vmem:[#allocation9 + $0x200] sm:$0xff]
    %v1105 = vld [vmem:[#allocation9 + $0x208] sm:$0xff]
    %v1106 = vld [vmem:[#allocation9 + $0x210] sm:$0xff]
    %v1107 = vld [vmem:[#allocation9 + $0x218] sm:$0xff]
    %v1108 = vld [vmem:[#allocation9 + $0x220] sm:$0xff]
    %v1109 = vld [vmem:[#allocation9 + $0x228] sm:$0xff]
    %v1110 = vld [vmem:[#allocation9 + $0x230] sm:$0xff]
    %v1111 = vld [vmem:[#allocation9 + $0x238] sm:$0xff]
    %v1112 = vld [vmem:[#allocation9 + $0x240] sm:$0xff]
    %v1113 = vld [vmem:[#allocation9 + $0x248] sm:$0xff]
    %v1114 = vld [vmem:[#allocation9 + $0x250] sm:$0xff]
    %v1115 = vld [vmem:[#allocation9 + $0x258] sm:$0xff]
    %v1116 = vld [vmem:[#allocation9 + $0x260] sm:$0xff]
    %v1117 = vld [vmem:[#allocation9 + $0x268] sm:$0xff]
    %v1118 = vld [vmem:[#allocation9 + $0x270] sm:$0xff]
    %v1119 = vld [vmem:[#allocation9 + $0x278] sm:$0xff]
    %v1120 = vld [vmem:[#allocation9 + $0x280] sm:$0xff]
    %v1121 = vld [vmem:[#allocation9 + $0x288] sm:$0xff]
    %v1122 = vld [vmem:[#allocation9 + $0x290] sm:$0xff]
    %v1123 = vld [vmem:[#allocation9 + $0x298] sm:$0xff]
    %v1124 = vld [vmem:[#allocation9 + $0x2a0] sm:$0xff]
    %v1125 = vld [vmem:[#allocation9 + $0x2a8] sm:$0xff]
    %v1126 = vld [vmem:[#allocation9 + $0x2b0] sm:$0xff]
    %v1127 = vld [vmem:[#allocation9 + $0x2b8] sm:$0xff]
    %v1128 = vld [vmem:[#allocation9 + $0x2c0] sm:$0xff]
    %v1129 = vld [vmem:[#allocation9 + $0x2c8] sm:$0xff]
    %v1130 = vld [vmem:[#allocation9 + $0x2d0] sm:$0xff]
    %v1131 = vld [vmem:[#allocation9 + $0x2d8] sm:$0xff]
    %v1132 = vld [vmem:[#allocation9 + $0x2e0] sm:$0xff]
    %v1133 = vld [vmem:[#allocation9 + $0x2e8] sm:$0xff]
    %v1134 = vld [vmem:[#allocation9 + $0x2f0] sm:$0xff]
    %v1135 = vld [vmem:[#allocation9 + $0x2f8] sm:$0xff]
    %v1136 = vld [vmem:[#allocation9 + $0x300] sm:$0xff]
    %v1137 = vld [vmem:[#allocation9 + $0x308] sm:$0xff]
    %v1138 = vld [vmem:[#allocation9 + $0x310] sm:$0xff]
    %v1139 = vld [vmem:[#allocation9 + $0x318] sm:$0xff]
    %v1140 = vld [vmem:[#allocation9 + $0x320] sm:$0xff]
    %v1141 = vld [vmem:[#allocation9 + $0x328] sm:$0xff]
    %v1142 = vld [vmem:[#allocation9 + $0x330] sm:$0xff]
    %v1143 = vld [vmem:[#allocation9 + $0x338] sm:$0xff]
    %v1144 = vld [vmem:[#allocation9 + $0x340] sm:$0xff]
    %v1145 = vld [vmem:[#allocation9 + $0x348] sm:$0xff]
    %v1146 = vld [vmem:[#allocation9 + $0x350] sm:$0xff]
    %v1147 = vld [vmem:[#allocation9 + $0x358] sm:$0xff]
    %v1148 = vld [vmem:[#allocation9 + $0x360] sm:$0xff]
    %v1149 = vld [vmem:[#allocation9 + $0x368] sm:$0xff]
    %v1150 = vld [vmem:[#allocation9 + $0x370] sm:$0xff]
    %v1151 = vld [vmem:[#allocation9 + $0x378] sm:$0xff]
    %v1152 = vld [vmem:[#allocation9 + $0x380] sm:$0xff]
    %v1153 = vld [vmem:[#allocation9 + $0x388] sm:$0xff]
    %v1154 = vld [vmem:[#allocation9 + $0x390] sm:$0xff]
    %v1155 = vld [vmem:[#allocation9 + $0x398] sm:$0xff]
    %v1156 = vld [vmem:[#allocation9 + $0x3a0] sm:$0xff]
    %v1157 = vld [vmem:[#allocation9 + $0x3a8] sm:$0xff]
    %v1158 = vld [vmem:[#allocation9 + $0x3b0] sm:$0xff]
    %v1159 = vld [vmem:[#allocation9 + $0x3b8] sm:$0xff]
    %v1160 = vld [vmem:[#allocation9 + $0x3c0] sm:$0xff]
    %v1161 = vld [vmem:[#allocation9 + $0x3c8] sm:$0xff]
    %v1162 = vld [vmem:[#allocation9 + $0x3d0] sm:$0xff]
    %v1163 = vld [vmem:[#allocation9 + $0x3d8] sm:$0xff]
    %v1164 = vld [vmem:[#allocation9 + $0x3e0] sm:$0xff]
    %v1165 = vld [vmem:[#allocation9 + $0x3e8] sm:$0xff]
    %v1166 = vld [vmem:[#allocation9 + $0x3f0] sm:$0xff]
    %v1167 = vld [vmem:[#allocation9 + $0x3f8] sm:$0xff]
    %v1169 = vrot.slane %v1037, 2
    %v1170 = vrot.slane %v1039, 2
    %1173 = vmatpush.msra.mxu0 %v1100
    %1174 = vmatpush.msra.mxu0 %v1096
    %1175 = vmatpush.msra.mxu0 %v1092
    %1176 = vmatpush.msra.mxu0 %v1088
    %1177 = vmatpush.msra.mxu0 %v1084
    %1178 = vmatpush.msra.mxu0 %v1080
    %1179 = vmatpush.msra.mxu0 %v1076
    %1180 = vmatpush.msra.mxu0 %v1072
    %1181 = vmatpush.msra.mxu0 %v1068
    %1182 = vmatpush.msra.mxu0 %v1064
    %1183 = vmatpush.msra.mxu0 %v1060
    %1184 = vmatpush.msra.mxu0 %v1056
    %1185 = vmatpush.msra.mxu0 %v1052
    %1186 = vmatpush.msra.mxu0 %v1048
    %1187 = vmatpush.msra.mxu0 %v1044
    %1188 = vmatpush.msra.mxu0 %v1040
    %1189 = vmatmul.f32.gmra.mxu0 %v1169
    %v1190 = vpop.f32.mrf.mxu0
    %v1191 = vadd.f32 %v233, %v1190
    %1192 = vdwg.mxu0
    %1193 = vmatpush.msra.mxu0 %v1164
    %1194 = vmatpush.msra.mxu0 %v1160
    %1195 = vmatpush.msra.mxu0 %v1156
    %1196 = vmatpush.msra.mxu0 %v1152
    %1197 = vmatpush.msra.mxu0 %v1148
    %1198 = vmatpush.msra.mxu0 %v1144
    %1199 = vmatpush.msra.mxu0 %v1140
    %1200 = vmatpush.msra.mxu0 %v1136
    %1201 = vmatpush.msra.mxu0 %v1132
    %1202 = vmatpush.msra.mxu0 %v1128
    %1203 = vmatpush.msra.mxu0 %v1124
    %1204 = vmatpush.msra.mxu0 %v1120
    %1205 = vmatpush.msra.mxu0 %v1116
    %1206 = vmatpush.msra.mxu0 %v1112
    %1207 = vmatpush.msra.mxu0 %v1108
    %1208 = vmatpush.msra.mxu0 %v1104
    %1209 = vmatmul.f32.gmra.mxu0 %v1170
    %v1210 = vpop.f32.mrf.mxu0
    %v1211 = vadd.f32 %v1191, %v1210
    %1212 = vdwg.mxu0
    %1213 = vmatpush.msra.mxu0 %v1101
    %1214 = vmatpush.msra.mxu0 %v1097
    %1215 = vmatpush.msra.mxu0 %v1093
    %1216 = vmatpush.msra.mxu0 %v1089
    %1217 = vmatpush.msra.mxu0 %v1085
    %1218 = vmatpush.msra.mxu0 %v1081
    %1219 = vmatpush.msra.mxu0 %v1077
    %1220 = vmatpush.msra.mxu0 %v1073
    %1221 = vmatpush.msra.mxu0 %v1069
    %1222 = vmatpush.msra.mxu0 %v1065
    %1223 = vmatpush.msra.mxu0 %v1061
    %1224 = vmatpush.msra.mxu0 %v1057
    %1225 = vmatpush.msra.mxu0 %v1053
    %1226 = vmatpush.msra.mxu0 %v1049
    %1227 = vmatpush.msra.mxu0 %v1045
    %1228 = vmatpush.msra.mxu0 %v1041
    %1229 = vmatmul.f32.gmra.mxu0 %v1169
    %v1230 = vpop.f32.mrf.mxu0
    %v1231 = vadd.f32 %v234, %v1230
    %1232 = vdwg.mxu0
    %1233 = vmatpush.msra.mxu0 %v1165
    %1234 = vmatpush.msra.mxu0 %v1161
    %1235 = vmatpush.msra.mxu0 %v1157
    %1236 = vmatpush.msra.mxu0 %v1153
    %1237 = vmatpush.msra.mxu0 %v1149
    %1238 = vmatpush.msra.mxu0 %v1145
    %1239 = vmatpush.msra.mxu0 %v1141
    %1240 = vmatpush.msra.mxu0 %v1137
    %1241 = vmatpush.msra.mxu0 %v1133
    %1242 = vmatpush.msra.mxu0 %v1129
    %1243 = vmatpush.msra.mxu0 %v1125
    %1244 = vmatpush.msra.mxu0 %v1121
    %1245 = vmatpush.msra.mxu0 %v1117
    %1246 = vmatpush.msra.mxu0 %v1113
    %1247 = vmatpush.msra.mxu0 %v1109
    %1248 = vmatpush.msra.mxu0 %v1105
    %1249 = vmatmul.f32.gmra.mxu0 %v1170
    %v1250 = vpop.f32.mrf.mxu0
    %v1251 = vadd.f32 %v1231, %v1250
    %1252 = vdwg.mxu0
    %1253 = vmatpush.msra.mxu0 %v1102
    %1254 = vmatpush.msra.mxu0 %v1098
    %1255 = vmatpush.msra.mxu0 %v1094
    %1256 = vmatpush.msra.mxu0 %v1090
    %1257 = vmatpush.msra.mxu0 %v1086
    %1258 = vmatpush.msra.mxu0 %v1082
    %1259 = vmatpush.msra.mxu0 %v1078
    %1260 = vmatpush.msra.mxu0 %v1074
    %1261 = vmatpush.msra.mxu0 %v1070
    %1262 = vmatpush.msra.mxu0 %v1066
    %1263 = vmatpush.msra.mxu0 %v1062
    %1264 = vmatpush.msra.mxu0 %v1058
    %1265 = vmatpush.msra.mxu0 %v1054
    %1266 = vmatpush.msra.mxu0 %v1050
    %1267 = vmatpush.msra.mxu0 %v1046
    %1268 = vmatpush.msra.mxu0 %v1042
    %1269 = vmatmul.f32.gmra.mxu0 %v1169
    %v1270 = vpop.f32.mrf.mxu0
    %v1271 = vadd.f32 %v235, %v1270
    %1272 = vdwg.mxu0
    %1273 = vmatpush.msra.mxu0 %v1166
    %1274 = vmatpush.msra.mxu0 %v1162
    %1275 = vmatpush.msra.mxu0 %v1158
    %1276 = vmatpush.msra.mxu0 %v1154
    %1277 = vmatpush.msra.mxu0 %v1150
    %1278 = vmatpush.msra.mxu0 %v1146
    %1279 = vmatpush.msra.mxu0 %v1142
    %1280 = vmatpush.msra.mxu0 %v1138
    %1281 = vmatpush.msra.mxu0 %v1134
    %1282 = vmatpush.msra.mxu0 %v1130
    %1283 = vmatpush.msra.mxu0 %v1126
    %1284 = vmatpush.msra.mxu0 %v1122
    %1285 = vmatpush.msra.mxu0 %v1118
    %1286 = vmatpush.msra.mxu0 %v1114
    %1287 = vmatpush.msra.mxu0 %v1110
    %1288 = vmatpush.msra.mxu0 %v1106
    %1289 = vmatmul.f32.gmra.mxu0 %v1170
    %v1290 = vpop.f32.mrf.mxu0
    %v1291 = vadd.f32 %v1271, %v1290
    %1292 = vdwg.mxu0
    %1293 = vmatpush.msra.mxu0 %v1103
    %1294 = vmatpush.msra.mxu0 %v1099
    %1295 = vmatpush.msra.mxu0 %v1095
    %1296 = vmatpush.msra.mxu0 %v1091
    %1297 = vmatpush.msra.mxu0 %v1087
    %1298 = vmatpush.msra.mxu0 %v1083
    %1299 = vmatpush.msra.mxu0 %v1079
    %1300 = vmatpush.msra.mxu0 %v1075
    %1301 = vmatpush.msra.mxu0 %v1071
    %1302 = vmatpush.msra.mxu0 %v1067
    %1303 = vmatpush.msra.mxu0 %v1063
    %1304 = vmatpush.msra.mxu0 %v1059
    %1305 = vmatpush.msra.mxu0 %v1055
    %1306 = vmatpush.msra.mxu0 %v1051
    %1307 = vmatpush.msra.mxu0 %v1047
    %1308 = vmatpush.msra.mxu0 %v1043
    %1309 = vmatmul.f32.gmra.mxu0 %v1169
    %v1310 = vpop.f32.mrf.mxu0
    %v1311 = vadd.f32 %v236, %v1310
    %1312 = vdwg.mxu0
    %1313 = vmatpush.msra.mxu0 %v1167
    %1314 = vmatpush.msra.mxu0 %v1163
    %1315 = vmatpush.msra.mxu0 %v1159
    %1316 = vmatpush.msra.mxu0 %v1155
    %1317 = vmatpush.msra.mxu0 %v1151
    %1318 = vmatpush.msra.mxu0 %v1147
    %1319 = vmatpush.msra.mxu0 %v1143
    %1320 = vmatpush.msra.mxu0 %v1139
    %1321 = vmatpush.msra.mxu0 %v1135
    %1322 = vmatpush.msra.mxu0 %v1131
    %1323 = vmatpush.msra.mxu0 %v1127
    %1324 = vmatpush.msra.mxu0 %v1123
    %1325 = vmatpush.msra.mxu0 %v1119
    %1326 = vmatpush.msra.mxu0 %v1115
    %1327 = vmatpush.msra.mxu0 %v1111
    %1328 = vmatpush.msra.mxu0 %v1107
    %1329 = vmatmul.f32.gmra.mxu0 %v1170
    %v1330 = vpop.f32.mrf.mxu0
    %v1331 = vadd.f32 %v1311, %v1330
    %1332 = vdwg.mxu0
    %v1333 = vxor.u32 %v1211, 2147483648
    %v1334 = vmul.f32 %v1333, 1.442695
    %v1335 = vpow.pop %v1334
    %v1336 = vadd.f32 %v1335, 1.0
    %v1337 = vrcp.pop %v1336
    %v1338 = vmul.f32 %v1336, %v1337
    %v1339 = vsub.f32 1.0, %v1338
    %v1340 = vmul.f32 %v1337, %v1339
    %v1341 = vadd.f32 %v1337, %v1340
    %vm1342 = vweird.f32 %v1336
    %vm1343 = vweird.f32 %v1337
    %vm1344 = vmor %vm1342, %vm1343
    %v1345 = vsel %vm1344, %v1337, %v1341
    %v1346 = vand.u32 2147483647, %v1336
    %vm1347 = vcmp.eq.f32.partialorder %v1346, 8.507059e+37
    %v1348 = vand.u32 %v1336, 2147483648
    %v1349 = vor.u32 1.1754944e-38, %v1348
    %v1350 = vsel %vm1347, %v1349, %v1345
    %v1351 = vmul.f32 1.0, %v1350
    %v1352 = vxor.u32 %v1251, 2147483648
    %v1353 = vmul.f32 %v1352, 1.442695
    %v1354 = vpow.pop %v1353
    %v1355 = vadd.f32 %v1354, 1.0
    %v1356 = vrcp.pop %v1355
    %v1357 = vmul.f32 %v1355, %v1356
    %v1358 = vsub.f32 1.0, %v1357
    %v1359 = vmul.f32 %v1356, %v1358
    %v1360 = vadd.f32 %v1356, %v1359
    %vm1361 = vweird.f32 %v1355
    %vm1362 = vweird.f32 %v1356
    %vm1363 = vmor %vm1361, %vm1362
    %v1364 = vsel %vm1363, %v1356, %v1360
    %v1365 = vand.u32 2147483647, %v1355
    %vm1366 = vcmp.eq.f32.partialorder %v1365, 8.507059e+37
    %v1367 = vand.u32 %v1355, 2147483648
    %v1368 = vor.u32 1.1754944e-38, %v1367
    %v1369 = vsel %vm1366, %v1368, %v1364
    %v1370 = vmul.f32 1.0, %v1369
    %v1371 = vtanh.pop %v1291
    %v1372 = vxor.u32 %v1331, 2147483648
    %v1373 = vmul.f32 %v1372, 1.442695
    %v1374 = vpow.pop %v1373
    %v1375 = vadd.f32 %v1374, 1.0
    %v1376 = vrcp.pop %v1375
    %v1377 = vmul.f32 %v1375, %v1376
    %v1378 = vsub.f32 1.0, %v1377
    %v1379 = vmul.f32 %v1376, %v1378
    %v1380 = vadd.f32 %v1376, %v1379
    %vm1381 = vweird.f32 %v1375
    %vm1382 = vweird.f32 %v1376
    %vm1383 = vmor %vm1381, %vm1382
    %v1384 = vsel %vm1383, %v1376, %v1380
    %v1385 = vand.u32 2147483647, %v1375
    %vm1386 = vcmp.eq.f32.partialorder %v1385, 8.507059e+37
    %v1387 = vand.u32 %v1375, 2147483648
    %v1388 = vor.u32 1.1754944e-38, %v1387
    %v1389 = vsel %vm1386, %v1388, %v1384
    %v1390 = vmul.f32 1.0, %v1389
    %v1391 = vmul.f32 %v1370, %v804
    %v1392 = vmul.f32 %v1351, %v1371
    %v1393 = vadd.f32 %v1391, %v1392
    %v1394 = vtanh.pop %v1393
    %v1395 = vmul.f32 %v1390, %v1394
    %1396 = vst [vmem:[#allocation3 + $0x2] sm:$0x3] %v1395
    %v1397 = vld [vmem:[#allocation2] sm:$0x30]
    %v1398 = vld [vmem:[#allocation2 + $0x8] sm:$0x30]
    %v1399 = vld [vmem:[#allocation2 + $0x10] sm:$0x30]
    %v1400 = vld [vmem:[#allocation2 + $0x18] sm:$0x30]
    %v1401 = vld [vmem:[#allocation7] sm:$0xff]
    %v1402 = vld [vmem:[#allocation7 + $0x8] sm:$0xff]
    %v1403 = vld [vmem:[#allocation7 + $0x10] sm:$0xff]
    %v1404 = vld [vmem:[#allocation7 + $0x18] sm:$0xff]
    %v1405 = vld [vmem:[#allocation7 + $0x20] sm:$0xff]
    %v1406 = vld [vmem:[#allocation7 + $0x28] sm:$0xff]
    %v1407 = vld [vmem:[#allocation7 + $0x30] sm:$0xff]
    %v1408 = vld [vmem:[#allocation7 + $0x38] sm:$0xff]
    %v1409 = vld [vmem:[#allocation7 + $0x40] sm:$0xff]
    %v1410 = vld [vmem:[#allocation7 + $0x48] sm:$0xff]
    %v1411 = vld [vmem:[#allocation7 + $0x50] sm:$0xff]
    %v1412 = vld [vmem:[#allocation7 + $0x58] sm:$0xff]
    %v1413 = vld [vmem:[#allocation7 + $0x60] sm:$0xff]
    %v1414 = vld [vmem:[#allocation7 + $0x68] sm:$0xff]
    %v1415 = vld [vmem:[#allocation7 + $0x70] sm:$0xff]
    %v1416 = vld [vmem:[#allocation7 + $0x78] sm:$0xff]
    %v1417 = vld [vmem:[#allocation7 + $0x80] sm:$0xff]
    %v1418 = vld [vmem:[#allocation7 + $0x88] sm:$0xff]
    %v1419 = vld [vmem:[#allocation7 + $0x90] sm:$0xff]
    %v1420 = vld [vmem:[#allocation7 + $0x98] sm:$0xff]
    %v1421 = vld [vmem:[#allocation7 + $0xa0] sm:$0xff]
    %v1422 = vld [vmem:[#allocation7 + $0xa8] sm:$0xff]
    %v1423 = vld [vmem:[#allocation7 + $0xb0] sm:$0xff]
    %v1424 = vld [vmem:[#allocation7 + $0xb8] sm:$0xff]
    %v1425 = vld [vmem:[#allocation7 + $0xc0] sm:$0xff]
    %v1426 = vld [vmem:[#allocation7 + $0xc8] sm:$0xff]
    %v1427 = vld [vmem:[#allocation7 + $0xd0] sm:$0xff]
    %v1428 = vld [vmem:[#allocation7 + $0xd8] sm:$0xff]
    %v1429 = vld [vmem:[#allocation7 + $0xe0] sm:$0xff]
    %v1430 = vld [vmem:[#allocation7 + $0xe8] sm:$0xff]
    %v1431 = vld [vmem:[#allocation7 + $0xf0] sm:$0xff]
    %v1432 = vld [vmem:[#allocation7 + $0xf8] sm:$0xff]
    %v1433 = vld [vmem:[#allocation7 + $0x100] sm:$0xff]
    %v1434 = vld [vmem:[#allocation7 + $0x108] sm:$0xff]
    %v1435 = vld [vmem:[#allocation7 + $0x110] sm:$0xff]
    %v1436 = vld [vmem:[#allocation7 + $0x118] sm:$0xff]
    %v1437 = vld [vmem:[#allocation7 + $0x120] sm:$0xff]
    %v1438 = vld [vmem:[#allocation7 + $0x128] sm:$0xff]
    %v1439 = vld [vmem:[#allocation7 + $0x130] sm:$0xff]
    %v1440 = vld [vmem:[#allocation7 + $0x138] sm:$0xff]
    %v1441 = vld [vmem:[#allocation7 + $0x140] sm:$0xff]
    %v1442 = vld [vmem:[#allocation7 + $0x148] sm:$0xff]
    %v1443 = vld [vmem:[#allocation7 + $0x150] sm:$0xff]
    %v1444 = vld [vmem:[#allocation7 + $0x158] sm:$0xff]
    %v1445 = vld [vmem:[#allocation7 + $0x160] sm:$0xff]
    %v1446 = vld [vmem:[#allocation7 + $0x168] sm:$0xff]
    %v1447 = vld [vmem:[#allocation7 + $0x170] sm:$0xff]
    %v1448 = vld [vmem:[#allocation7 + $0x178] sm:$0xff]
    %v1449 = vld [vmem:[#allocation7 + $0x180] sm:$0xff]
    %v1450 = vld [vmem:[#allocation7 + $0x188] sm:$0xff]
    %v1451 = vld [vmem:[#allocation7 + $0x190] sm:$0xff]
    %v1452 = vld [vmem:[#allocation7 + $0x198] sm:$0xff]
    %v1453 = vld [vmem:[#allocation7 + $0x1a0] sm:$0xff]
    %v1454 = vld [vmem:[#allocation7 + $0x1a8] sm:$0xff]
    %v1455 = vld [vmem:[#allocation7 + $0x1b0] sm:$0xff]
    %v1456 = vld [vmem:[#allocation7 + $0x1b8] sm:$0xff]
    %v1457 = vld [vmem:[#allocation7 + $0x1c0] sm:$0xff]
    %v1458 = vld [vmem:[#allocation7 + $0x1c8] sm:$0xff]
    %v1459 = vld [vmem:[#allocation7 + $0x1d0] sm:$0xff]
    %v1460 = vld [vmem:[#allocation7 + $0x1d8] sm:$0xff]
    %v1461 = vld [vmem:[#allocation7 + $0x1e0] sm:$0xff]
    %v1462 = vld [vmem:[#allocation7 + $0x1e8] sm:$0xff]
    %v1463 = vld [vmem:[#allocation7 + $0x1f0] sm:$0xff]
    %v1464 = vld [vmem:[#allocation7 + $0x1f8] sm:$0xff]
    %1465 = vmatpush.msra.mxu0 %v1461
    %1466 = vmatpush.msra.mxu0 %v1457
    %1467 = vmatpush.msra.mxu0 %v1453
    %1468 = vmatpush.msra.mxu0 %v1449
    %1469 = vmatpush.msra.mxu0 %v1445
    %1470 = vmatpush.msra.mxu0 %v1441
    %1471 = vmatpush.msra.mxu0 %v1437
    %1472 = vmatpush.msra.mxu0 %v1433
    %1473 = vmatpush.msra.mxu0 %v1429
    %1474 = vmatpush.msra.mxu0 %v1425
    %1475 = vmatpush.msra.mxu0 %v1421
    %1476 = vmatpush.msra.mxu0 %v1417
    %1477 = vmatpush.msra.mxu0 %v1413
    %1478 = vmatpush.msra.mxu0 %v1409
    %1479 = vmatpush.msra.mxu0 %v1405
    %1480 = vmatpush.msra.mxu0 %v1401
    %1481 = vmatmul.f32.gmra.mxu0 %v1169
    %v1482 = vpop.f32.mrf.mxu0
    %v1483 = vadd.f32 0.0, %v1482
    %1484 = vdwg.mxu0
    %1485 = vmatpush.msra.mxu0 %v1462
    %1486 = vmatpush.msra.mxu0 %v1458
    %1487 = vmatpush.msra.mxu0 %v1454
    %1488 = vmatpush.msra.mxu0 %v1450
    %1489 = vmatpush.msra.mxu0 %v1446
    %1490 = vmatpush.msra.mxu0 %v1442
    %1491 = vmatpush.msra.mxu0 %v1438
    %1492 = vmatpush.msra.mxu0 %v1434
    %1493 = vmatpush.msra.mxu0 %v1430
    %1494 = vmatpush.msra.mxu0 %v1426
    %1495 = vmatpush.msra.mxu0 %v1422
    %1496 = vmatpush.msra.mxu0 %v1418
    %1497 = vmatpush.msra.mxu0 %v1414
    %1498 = vmatpush.msra.mxu0 %v1410
    %1499 = vmatpush.msra.mxu0 %v1406
    %1500 = vmatpush.msra.mxu0 %v1402
    %1501 = vmatmul.f32.gmra.mxu0 %v1169
    %v1502 = vpop.f32.mrf.mxu0
    %v1503 = vadd.f32 0.0, %v1502
    %1504 = vdwg.mxu0
    %1505 = vmatpush.msra.mxu0 %v1463
    %1506 = vmatpush.msra.mxu0 %v1459
    %1507 = vmatpush.msra.mxu0 %v1455
    %1508 = vmatpush.msra.mxu0 %v1451
    %1509 = vmatpush.msra.mxu0 %v1447
    %1510 = vmatpush.msra.mxu0 %v1443
    %1511 = vmatpush.msra.mxu0 %v1439
    %1512 = vmatpush.msra.mxu0 %v1435
    %1513 = vmatpush.msra.mxu0 %v1431
    %1514 = vmatpush.msra.mxu0 %v1427
    %1515 = vmatpush.msra.mxu0 %v1423
    %1516 = vmatpush.msra.mxu0 %v1419
    %1517 = vmatpush.msra.mxu0 %v1415
    %1518 = vmatpush.msra.mxu0 %v1411
    %1519 = vmatpush.msra.mxu0 %v1407
    %1520 = vmatpush.msra.mxu0 %v1403
    %1521 = vmatmul.f32.gmra.mxu0 %v1169
    %v1522 = vpop.f32.mrf.mxu0
    %v1523 = vadd.f32 0.0, %v1522
    %1524 = vdwg.mxu0
    %1525 = vmatpush.msra.mxu0 %v1464
    %1526 = vmatpush.msra.mxu0 %v1460
    %1527 = vmatpush.msra.mxu0 %v1456
    %1528 = vmatpush.msra.mxu0 %v1452
    %1529 = vmatpush.msra.mxu0 %v1448
    %1530 = vmatpush.msra.mxu0 %v1444
    %1531 = vmatpush.msra.mxu0 %v1440
    %1532 = vmatpush.msra.mxu0 %v1436
    %1533 = vmatpush.msra.mxu0 %v1432
    %1534 = vmatpush.msra.mxu0 %v1428
    %1535 = vmatpush.msra.mxu0 %v1424
    %1536 = vmatpush.msra.mxu0 %v1420
    %1537 = vmatpush.msra.mxu0 %v1416
    %1538 = vmatpush.msra.mxu0 %v1412
    %1539 = vmatpush.msra.mxu0 %v1408
    %1540 = vmatpush.msra.mxu0 %v1404
    %1541 = vmatmul.f32.gmra.mxu0 %v1169
    %v1542 = vpop.f32.mrf.mxu0
    %v1543 = vadd.f32 0.0, %v1542
    %1544 = vdwg.mxu0
    %v1549 = vrot.slane %v1483, 4
    %v1550 = vrot.slane %v1503, 4
    %v1551 = vrot.slane %v1523, 4
    %v1552 = vrot.slane %v1543, 4
    %v1557 = vadd.f32 %v1397, %v1549
    %v1558 = vadd.f32 %v1398, %v1550
    %v1559 = vadd.f32 %v1399, %v1551
    %v1560 = vadd.f32 %v1400, %v1552
    %v1561 = vxor.u32 %v1557, 2147483648
    %v1562 = vmul.f32 %v1561, 1.442695
    %v1563 = vpow.pop %v1562
    %v1564 = vadd.f32 %v1563, 1.0
    %v1565 = vrcp.pop %v1564
    %v1566 = vmul.f32 %v1564, %v1565
    %v1567 = vsub.f32 1.0, %v1566
    %v1568 = vmul.f32 %v1565, %v1567
    %v1569 = vadd.f32 %v1565, %v1568
    %vm1570 = vweird.f32 %v1564
    %vm1571 = vweird.f32 %v1565
    %vm1572 = vmor %vm1570, %vm1571
    %v1573 = vsel %vm1572, %v1565, %v1569
    %v1574 = vand.u32 2147483647, %v1564
    %vm1575 = vcmp.eq.f32.partialorder %v1574, 8.507059e+37
    %v1576 = vand.u32 %v1564, 2147483648
    %v1577 = vor.u32 1.1754944e-38, %v1576
    %v1578 = vsel %vm1575, %v1577, %v1573
    %v1579 = vmul.f32 1.0, %v1578
    %v1580 = vxor.u32 %v1558, 2147483648
    %v1581 = vmul.f32 %v1580, 1.442695
    %v1582 = vpow.pop %v1581
    %v1583 = vadd.f32 %v1582, 1.0
    %v1584 = vrcp.pop %v1583
    %v1585 = vmul.f32 %v1583, %v1584
    %v1586 = vsub.f32 1.0, %v1585
    %v1587 = vmul.f32 %v1584, %v1586
    %v1588 = vadd.f32 %v1584, %v1587
    %vm1589 = vweird.f32 %v1583
    %vm1590 = vweird.f32 %v1584
    %vm1591 = vmor %vm1589, %vm1590
    %v1592 = vsel %vm1591, %v1584, %v1588
    %v1593 = vand.u32 2147483647, %v1583
    %vm1594 = vcmp.eq.f32.partialorder %v1593, 8.507059e+37
    %v1595 = vand.u32 %v1583, 2147483648
    %v1596 = vor.u32 1.1754944e-38, %v1595
    %v1597 = vsel %vm1594, %v1596, %v1592
    %v1598 = vmul.f32 1.0, %v1597
    %v1599 = vtanh.pop %v1559
    %v1600 = vxor.u32 %v1560, 2147483648
    %v1601 = vmul.f32 %v1600, 1.442695
    %v1602 = vpow.pop %v1601
    %v1603 = vadd.f32 %v1602, 1.0
    %v1604 = vrcp.pop %v1603
    %v1605 = vmul.f32 %v1603, %v1604
    %v1606 = vsub.f32 1.0, %v1605
    %v1607 = vmul.f32 %v1604, %v1606
    %v1608 = vadd.f32 %v1604, %v1607
    %vm1609 = vweird.f32 %v1603
    %vm1610 = vweird.f32 %v1604
    %vm1611 = vmor %vm1609, %vm1610
    %v1612 = vsel %vm1611, %v1604, %v1608
    %v1613 = vand.u32 2147483647, %v1603
    %vm1614 = vcmp.eq.f32.partialorder %v1613, 8.507059e+37
    %v1615 = vand.u32 %v1603, 2147483648
    %v1616 = vor.u32 1.1754944e-38, %v1615
    %v1617 = vsel %vm1614, %v1616, %v1612
    %v1618 = vmul.f32 1.0, %v1617
    %v1620 = vrot.slane %v1035, 6
    %v1622 = vmul.f32 %v1598, %v1620
    %v1623 = vmul.f32 %v1579, %v1599
    %v1624 = vadd.f32 %v1622, %v1623
    %v1625 = vtanh.pop %v1624
    %v1626 = vmul.f32 %v1618, %v1625
    %v1628 = vrot.slane %v1395, 4
    %v1629 = vld [vmem:[#allocation9] sm:$0xff]
    %v1630 = vld [vmem:[#allocation9 + $0x8] sm:$0xff]
    %v1631 = vld [vmem:[#allocation9 + $0x10] sm:$0xff]
    %v1632 = vld [vmem:[#allocation9 + $0x18] sm:$0xff]
    %v1633 = vld [vmem:[#allocation9 + $0x20] sm:$0xff]
    %v1634 = vld [vmem:[#allocation9 + $0x28] sm:$0xff]
    %v1635 = vld [vmem:[#allocation9 + $0x30] sm:$0xff]
    %v1636 = vld [vmem:[#allocation9 + $0x38] sm:$0xff]
    %v1637 = vld [vmem:[#allocation9 + $0x40] sm:$0xff]
    %v1638 = vld [vmem:[#allocation9 + $0x48] sm:$0xff]
    %v1639 = vld [vmem:[#allocation9 + $0x50] sm:$0xff]
    %v1640 = vld [vmem:[#allocation9 + $0x58] sm:$0xff]
    %v1641 = vld [vmem:[#allocation9 + $0x60] sm:$0xff]
    %v1642 = vld [vmem:[#allocation9 + $0x68] sm:$0xff]
    %v1643 = vld [vmem:[#allocation9 + $0x70] sm:$0xff]
    %v1644 = vld [vmem:[#allocation9 + $0x78] sm:$0xff]
    %v1645 = vld [vmem:[#allocation9 + $0x80] sm:$0xff]
    %v1646 = vld [vmem:[#allocation9 + $0x88] sm:$0xff]
    %v1647 = vld [vmem:[#allocation9 + $0x90] sm:$0xff]
    %v1648 = vld [vmem:[#allocation9 + $0x98] sm:$0xff]
    %v1649 = vld [vmem:[#allocation9 + $0xa0] sm:$0xff]
    %v1650 = vld [vmem:[#allocation9 + $0xa8] sm:$0xff]
    %v1651 = vld [vmem:[#allocation9 + $0xb0] sm:$0xff]
    %v1652 = vld [vmem:[#allocation9 + $0xb8] sm:$0xff]
    %v1653 = vld [vmem:[#allocation9 + $0xc0] sm:$0xff]
    %v1654 = vld [vmem:[#allocation9 + $0xc8] sm:$0xff]
    %v1655 = vld [vmem:[#allocation9 + $0xd0] sm:$0xff]
    %v1656 = vld [vmem:[#allocation9 + $0xd8] sm:$0xff]
    %v1657 = vld [vmem:[#allocation9 + $0xe0] sm:$0xff]
    %v1658 = vld [vmem:[#allocation9 + $0xe8] sm:$0xff]
    %v1659 = vld [vmem:[#allocation9 + $0xf0] sm:$0xff]
    %v1660 = vld [vmem:[#allocation9 + $0xf8] sm:$0xff]
    %v1661 = vld [vmem:[#allocation9 + $0x100] sm:$0xff]
    %v1662 = vld [vmem:[#allocation9 + $0x108] sm:$0xff]
    %v1663 = vld [vmem:[#allocation9 + $0x110] sm:$0xff]
    %v1664 = vld [vmem:[#allocation9 + $0x118] sm:$0xff]
    %v1665 = vld [vmem:[#allocation9 + $0x120] sm:$0xff]
    %v1666 = vld [vmem:[#allocation9 + $0x128] sm:$0xff]
    %v1667 = vld [vmem:[#allocation9 + $0x130] sm:$0xff]
    %v1668 = vld [vmem:[#allocation9 + $0x138] sm:$0xff]
    %v1669 = vld [vmem:[#allocation9 + $0x140] sm:$0xff]
    %v1670 = vld [vmem:[#allocation9 + $0x148] sm:$0xff]
    %v1671 = vld [vmem:[#allocation9 + $0x150] sm:$0xff]
    %v1672 = vld [vmem:[#allocation9 + $0x158] sm:$0xff]
    %v1673 = vld [vmem:[#allocation9 + $0x160] sm:$0xff]
    %v1674 = vld [vmem:[#allocation9 + $0x168] sm:$0xff]
    %v1675 = vld [vmem:[#allocation9 + $0x170] sm:$0xff]
    %v1676 = vld [vmem:[#allocation9 + $0x178] sm:$0xff]
    %v1677 = vld [vmem:[#allocation9 + $0x180] sm:$0xff]
    %v1678 = vld [vmem:[#allocation9 + $0x188] sm:$0xff]
    %v1679 = vld [vmem:[#allocation9 + $0x190] sm:$0xff]
    %v1680 = vld [vmem:[#allocation9 + $0x198] sm:$0xff]
    %v1681 = vld [vmem:[#allocation9 + $0x1a0] sm:$0xff]
    %v1682 = vld [vmem:[#allocation9 + $0x1a8] sm:$0xff]
    %v1683 = vld [vmem:[#allocation9 + $0x1b0] sm:$0xff]
    %v1684 = vld [vmem:[#allocation9 + $0x1b8] sm:$0xff]
    %v1685 = vld [vmem:[#allocation9 + $0x1c0] sm:$0xff]
    %v1686 = vld [vmem:[#allocation9 + $0x1c8] sm:$0xff]
    %v1687 = vld [vmem:[#allocation9 + $0x1d0] sm:$0xff]
    %v1688 = vld [vmem:[#allocation9 + $0x1d8] sm:$0xff]
    %v1689 = vld [vmem:[#allocation9 + $0x1e0] sm:$0xff]
    %v1690 = vld [vmem:[#allocation9 + $0x1e8] sm:$0xff]
    %v1691 = vld [vmem:[#allocation9 + $0x1f0] sm:$0xff]
    %v1692 = vld [vmem:[#allocation9 + $0x1f8] sm:$0xff]
    %v1693 = vld [vmem:[#allocation9 + $0x200] sm:$0xff]
    %v1694 = vld [vmem:[#allocation9 + $0x208] sm:$0xff]
    %v1695 = vld [vmem:[#allocation9 + $0x210] sm:$0xff]
    %v1696 = vld [vmem:[#allocation9 + $0x218] sm:$0xff]
    %v1697 = vld [vmem:[#allocation9 + $0x220] sm:$0xff]
    %v1698 = vld [vmem:[#allocation9 + $0x228] sm:$0xff]
    %v1699 = vld [vmem:[#allocation9 + $0x230] sm:$0xff]
    %v1700 = vld [vmem:[#allocation9 + $0x238] sm:$0xff]
    %v1701 = vld [vmem:[#allocation9 + $0x240] sm:$0xff]
    %v1702 = vld [vmem:[#allocation9 + $0x248] sm:$0xff]
    %v1703 = vld [vmem:[#allocation9 + $0x250] sm:$0xff]
    %v1704 = vld [vmem:[#allocation9 + $0x258] sm:$0xff]
    %v1705 = vld [vmem:[#allocation9 + $0x260] sm:$0xff]
    %v1706 = vld [vmem:[#allocation9 + $0x268] sm:$0xff]
    %v1707 = vld [vmem:[#allocation9 + $0x270] sm:$0xff]
    %v1708 = vld [vmem:[#allocation9 + $0x278] sm:$0xff]
    %v1709 = vld [vmem:[#allocation9 + $0x280] sm:$0xff]
    %v1710 = vld [vmem:[#allocation9 + $0x288] sm:$0xff]
    %v1711 = vld [vmem:[#allocation9 + $0x290] sm:$0xff]
    %v1712 = vld [vmem:[#allocation9 + $0x298] sm:$0xff]
    %v1713 = vld [vmem:[#allocation9 + $0x2a0] sm:$0xff]
    %v1714 = vld [vmem:[#allocation9 + $0x2a8] sm:$0xff]
    %v1715 = vld [vmem:[#allocation9 + $0x2b0] sm:$0xff]
    %v1716 = vld [vmem:[#allocation9 + $0x2b8] sm:$0xff]
    %v1717 = vld [vmem:[#allocation9 + $0x2c0] sm:$0xff]
    %v1718 = vld [vmem:[#allocation9 + $0x2c8] sm:$0xff]
    %v1719 = vld [vmem:[#allocation9 + $0x2d0] sm:$0xff]
    %v1720 = vld [vmem:[#allocation9 + $0x2d8] sm:$0xff]
    %v1721 = vld [vmem:[#allocation9 + $0x2e0] sm:$0xff]
    %v1722 = vld [vmem:[#allocation9 + $0x2e8] sm:$0xff]
    %v1723 = vld [vmem:[#allocation9 + $0x2f0] sm:$0xff]
    %v1724 = vld [vmem:[#allocation9 + $0x2f8] sm:$0xff]
    %v1725 = vld [vmem:[#allocation9 + $0x300] sm:$0xff]
    %v1726 = vld [vmem:[#allocation9 + $0x308] sm:$0xff]
    %v1727 = vld [vmem:[#allocation9 + $0x310] sm:$0xff]
    %v1728 = vld [vmem:[#allocation9 + $0x318] sm:$0xff]
    %v1729 = vld [vmem:[#allocation9 + $0x320] sm:$0xff]
    %v1730 = vld [vmem:[#allocation9 + $0x328] sm:$0xff]
    %v1731 = vld [vmem:[#allocation9 + $0x330] sm:$0xff]
    %v1732 = vld [vmem:[#allocation9 + $0x338] sm:$0xff]
    %v1733 = vld [vmem:[#allocation9 + $0x340] sm:$0xff]
    %v1734 = vld [vmem:[#allocation9 + $0x348] sm:$0xff]
    %v1735 = vld [vmem:[#allocation9 + $0x350] sm:$0xff]
    %v1736 = vld [vmem:[#allocation9 + $0x358] sm:$0xff]
    %v1737 = vld [vmem:[#allocation9 + $0x360] sm:$0xff]
    %v1738 = vld [vmem:[#allocation9 + $0x368] sm:$0xff]
    %v1739 = vld [vmem:[#allocation9 + $0x370] sm:$0xff]
    %v1740 = vld [vmem:[#allocation9 + $0x378] sm:$0xff]
    %v1741 = vld [vmem:[#allocation9 + $0x380] sm:$0xff]
    %v1742 = vld [vmem:[#allocation9 + $0x388] sm:$0xff]
    %v1743 = vld [vmem:[#allocation9 + $0x390] sm:$0xff]
    %v1744 = vld [vmem:[#allocation9 + $0x398] sm:$0xff]
    %v1745 = vld [vmem:[#allocation9 + $0x3a0] sm:$0xff]
    %v1746 = vld [vmem:[#allocation9 + $0x3a8] sm:$0xff]
    %v1747 = vld [vmem:[#allocation9 + $0x3b0] sm:$0xff]
    %v1748 = vld [vmem:[#allocation9 + $0x3b8] sm:$0xff]
    %v1749 = vld [vmem:[#allocation9 + $0x3c0] sm:$0xff]
    %v1750 = vld [vmem:[#allocation9 + $0x3c8] sm:$0xff]
    %v1751 = vld [vmem:[#allocation9 + $0x3d0] sm:$0xff]
    %v1752 = vld [vmem:[#allocation9 + $0x3d8] sm:$0xff]
    %v1753 = vld [vmem:[#allocation9 + $0x3e0] sm:$0xff]
    %v1754 = vld [vmem:[#allocation9 + $0x3e8] sm:$0xff]
    %v1755 = vld [vmem:[#allocation9 + $0x3f0] sm:$0xff]
    %v1756 = vld [vmem:[#allocation9 + $0x3f8] sm:$0xff]
    %v1758 = vrot.slane %v1626, 4
    %v1759 = vrot.slane %v1628, 4
    %1762 = vmatpush.msra.mxu0 %v1689
    %1763 = vmatpush.msra.mxu0 %v1685
    %1764 = vmatpush.msra.mxu0 %v1681
    %1765 = vmatpush.msra.mxu0 %v1677
    %1766 = vmatpush.msra.mxu0 %v1673
    %1767 = vmatpush.msra.mxu0 %v1669
    %1768 = vmatpush.msra.mxu0 %v1665
    %1769 = vmatpush.msra.mxu0 %v1661
    %1770 = vmatpush.msra.mxu0 %v1657
    %1771 = vmatpush.msra.mxu0 %v1653
    %1772 = vmatpush.msra.mxu0 %v1649
    %1773 = vmatpush.msra.mxu0 %v1645
    %1774 = vmatpush.msra.mxu0 %v1641
    %1775 = vmatpush.msra.mxu0 %v1637
    %1776 = vmatpush.msra.mxu0 %v1633
    %1777 = vmatpush.msra.mxu0 %v1629
    %1778 = vmatmul.f32.gmra.mxu0 %v1758
    %v1779 = vpop.f32.mrf.mxu0
    %v1780 = vadd.f32 %v233, %v1779
    %1781 = vdwg.mxu0
    %1782 = vmatpush.msra.mxu0 %v1753
    %1783 = vmatpush.msra.mxu0 %v1749
    %1784 = vmatpush.msra.mxu0 %v1745
    %1785 = vmatpush.msra.mxu0 %v1741
    %1786 = vmatpush.msra.mxu0 %v1737
    %1787 = vmatpush.msra.mxu0 %v1733
    %1788 = vmatpush.msra.mxu0 %v1729
    %1789 = vmatpush.msra.mxu0 %v1725
    %1790 = vmatpush.msra.mxu0 %v1721
    %1791 = vmatpush.msra.mxu0 %v1717
    %1792 = vmatpush.msra.mxu0 %v1713
    %1793 = vmatpush.msra.mxu0 %v1709
    %1794 = vmatpush.msra.mxu0 %v1705
    %1795 = vmatpush.msra.mxu0 %v1701
    %1796 = vmatpush.msra.mxu0 %v1697
    %1797 = vmatpush.msra.mxu0 %v1693
    %1798 = vmatmul.f32.gmra.mxu0 %v1759
    %v1799 = vpop.f32.mrf.mxu0
    %v1800 = vadd.f32 %v1780, %v1799
    %1801 = vdwg.mxu0
    %1802 = vmatpush.msra.mxu0 %v1690
    %1803 = vmatpush.msra.mxu0 %v1686
    %1804 = vmatpush.msra.mxu0 %v1682
    %1805 = vmatpush.msra.mxu0 %v1678
    %1806 = vmatpush.msra.mxu0 %v1674
    %1807 = vmatpush.msra.mxu0 %v1670
    %1808 = vmatpush.msra.mxu0 %v1666
    %1809 = vmatpush.msra.mxu0 %v1662
    %1810 = vmatpush.msra.mxu0 %v1658
    %1811 = vmatpush.msra.mxu0 %v1654
    %1812 = vmatpush.msra.mxu0 %v1650
    %1813 = vmatpush.msra.mxu0 %v1646
    %1814 = vmatpush.msra.mxu0 %v1642
    %1815 = vmatpush.msra.mxu0 %v1638
    %1816 = vmatpush.msra.mxu0 %v1634
    %1817 = vmatpush.msra.mxu0 %v1630
    %1818 = vmatmul.f32.gmra.mxu0 %v1758
    %v1819 = vpop.f32.mrf.mxu0
    %v1820 = vadd.f32 %v234, %v1819
    %1821 = vdwg.mxu0
    %1822 = vmatpush.msra.mxu0 %v1754
    %1823 = vmatpush.msra.mxu0 %v1750
    %1824 = vmatpush.msra.mxu0 %v1746
    %1825 = vmatpush.msra.mxu0 %v1742
    %1826 = vmatpush.msra.mxu0 %v1738
    %1827 = vmatpush.msra.mxu0 %v1734
    %1828 = vmatpush.msra.mxu0 %v1730
    %1829 = vmatpush.msra.mxu0 %v1726
    %1830 = vmatpush.msra.mxu0 %v1722
    %1831 = vmatpush.msra.mxu0 %v1718
    %1832 = vmatpush.msra.mxu0 %v1714
    %1833 = vmatpush.msra.mxu0 %v1710
    %1834 = vmatpush.msra.mxu0 %v1706
    %1835 = vmatpush.msra.mxu0 %v1702
    %1836 = vmatpush.msra.mxu0 %v1698
    %1837 = vmatpush.msra.mxu0 %v1694
    %1838 = vmatmul.f32.gmra.mxu0 %v1759
    %v1839 = vpop.f32.mrf.mxu0
    %v1840 = vadd.f32 %v1820, %v1839
    %1841 = vdwg.mxu0
    %1842 = vmatpush.msra.mxu0 %v1691
    %1843 = vmatpush.msra.mxu0 %v1687
    %1844 = vmatpush.msra.mxu0 %v1683
    %1845 = vmatpush.msra.mxu0 %v1679
    %1846 = vmatpush.msra.mxu0 %v1675
    %1847 = vmatpush.msra.mxu0 %v1671
    %1848 = vmatpush.msra.mxu0 %v1667
    %1849 = vmatpush.msra.mxu0 %v1663
    %1850 = vmatpush.msra.mxu0 %v1659
    %1851 = vmatpush.msra.mxu0 %v1655
    %1852 = vmatpush.msra.mxu0 %v1651
    %1853 = vmatpush.msra.mxu0 %v1647
    %1854 = vmatpush.msra.mxu0 %v1643
    %1855 = vmatpush.msra.mxu0 %v1639
    %1856 = vmatpush.msra.mxu0 %v1635
    %1857 = vmatpush.msra.mxu0 %v1631
    %1858 = vmatmul.f32.gmra.mxu0 %v1758
    %v1859 = vpop.f32.mrf.mxu0
    %v1860 = vadd.f32 %v235, %v1859
    %1861 = vdwg.mxu0
    %1862 = vmatpush.msra.mxu0 %v1755
    %1863 = vmatpush.msra.mxu0 %v1751
    %1864 = vmatpush.msra.mxu0 %v1747
    %1865 = vmatpush.msra.mxu0 %v1743
    %1866 = vmatpush.msra.mxu0 %v1739
    %1867 = vmatpush.msra.mxu0 %v1735
    %1868 = vmatpush.msra.mxu0 %v1731
    %1869 = vmatpush.msra.mxu0 %v1727
    %1870 = vmatpush.msra.mxu0 %v1723
    %1871 = vmatpush.msra.mxu0 %v1719
    %1872 = vmatpush.msra.mxu0 %v1715
    %1873 = vmatpush.msra.mxu0 %v1711
    %1874 = vmatpush.msra.mxu0 %v1707
    %1875 = vmatpush.msra.mxu0 %v1703
    %1876 = vmatpush.msra.mxu0 %v1699
    %1877 = vmatpush.msra.mxu0 %v1695
    %1878 = vmatmul.f32.gmra.mxu0 %v1759
    %v1879 = vpop.f32.mrf.mxu0
    %v1880 = vadd.f32 %v1860, %v1879
    %1881 = vdwg.mxu0
    %1882 = vmatpush.msra.mxu0 %v1692
    %1883 = vmatpush.msra.mxu0 %v1688
    %1884 = vmatpush.msra.mxu0 %v1684
    %1885 = vmatpush.msra.mxu0 %v1680
    %1886 = vmatpush.msra.mxu0 %v1676
    %1887 = vmatpush.msra.mxu0 %v1672
    %1888 = vmatpush.msra.mxu0 %v1668
    %1889 = vmatpush.msra.mxu0 %v1664
    %1890 = vmatpush.msra.mxu0 %v1660
    %1891 = vmatpush.msra.mxu0 %v1656
    %1892 = vmatpush.msra.mxu0 %v1652
    %1893 = vmatpush.msra.mxu0 %v1648
    %1894 = vmatpush.msra.mxu0 %v1644
    %1895 = vmatpush.msra.mxu0 %v1640
    %1896 = vmatpush.msra.mxu0 %v1636
    %1897 = vmatpush.msra.mxu0 %v1632
    %1898 = vmatmul.f32.gmra.mxu0 %v1758
    %v1899 = vpop.f32.mrf.mxu0
    %v1900 = vadd.f32 %v236, %v1899
    %1901 = vdwg.mxu0
    %1902 = vmatpush.msra.mxu0 %v1756
    %1903 = vmatpush.msra.mxu0 %v1752
    %1904 = vmatpush.msra.mxu0 %v1748
    %1905 = vmatpush.msra.mxu0 %v1744
    %1906 = vmatpush.msra.mxu0 %v1740
    %1907 = vmatpush.msra.mxu0 %v1736
    %1908 = vmatpush.msra.mxu0 %v1732
    %1909 = vmatpush.msra.mxu0 %v1728
    %1910 = vmatpush.msra.mxu0 %v1724
    %1911 = vmatpush.msra.mxu0 %v1720
    %1912 = vmatpush.msra.mxu0 %v1716
    %1913 = vmatpush.msra.mxu0 %v1712
    %1914 = vmatpush.msra.mxu0 %v1708
    %1915 = vmatpush.msra.mxu0 %v1704
    %1916 = vmatpush.msra.mxu0 %v1700
    %1917 = vmatpush.msra.mxu0 %v1696
    %1918 = vmatmul.f32.gmra.mxu0 %v1759
    %v1919 = vpop.f32.mrf.mxu0
    %v1920 = vadd.f32 %v1900, %v1919
    %1921 = vdwg.mxu0
    %v1922 = vxor.u32 %v1800, 2147483648
    %v1923 = vmul.f32 %v1922, 1.442695
    %v1924 = vpow.pop %v1923
    %v1925 = vadd.f32 %v1924, 1.0
    %v1926 = vrcp.pop %v1925
    %v1927 = vmul.f32 %v1925, %v1926
    %v1928 = vsub.f32 1.0, %v1927
    %v1929 = vmul.f32 %v1926, %v1928
    %v1930 = vadd.f32 %v1926, %v1929
    %vm1931 = vweird.f32 %v1925
    %vm1932 = vweird.f32 %v1926
    %vm1933 = vmor %vm1931, %vm1932
    %v1934 = vsel %vm1933, %v1926, %v1930
    %v1935 = vand.u32 2147483647, %v1925
    %vm1936 = vcmp.eq.f32.partialorder %v1935, 8.507059e+37
    %v1937 = vand.u32 %v1925, 2147483648
    %v1938 = vor.u32 1.1754944e-38, %v1937
    %v1939 = vsel %vm1936, %v1938, %v1934
    %v1940 = vmul.f32 1.0, %v1939
    %v1941 = vxor.u32 %v1840, 2147483648
    %v1942 = vmul.f32 %v1941, 1.442695
    %v1943 = vpow.pop %v1942
    %v1944 = vadd.f32 %v1943, 1.0
    %v1945 = vrcp.pop %v1944
    %v1946 = vmul.f32 %v1944, %v1945
    %v1947 = vsub.f32 1.0, %v1946
    %v1948 = vmul.f32 %v1945, %v1947
    %v1949 = vadd.f32 %v1945, %v1948
    %vm1950 = vweird.f32 %v1944
    %vm1951 = vweird.f32 %v1945
    %vm1952 = vmor %vm1950, %vm1951
    %v1953 = vsel %vm1952, %v1945, %v1949
    %v1954 = vand.u32 2147483647, %v1944
    %vm1955 = vcmp.eq.f32.partialorder %v1954, 8.507059e+37
    %v1956 = vand.u32 %v1944, 2147483648
    %v1957 = vor.u32 1.1754944e-38, %v1956
    %v1958 = vsel %vm1955, %v1957, %v1953
    %v1959 = vmul.f32 1.0, %v1958
    %v1960 = vtanh.pop %v1880
    %v1961 = vxor.u32 %v1920, 2147483648
    %v1962 = vmul.f32 %v1961, 1.442695
    %v1963 = vpow.pop %v1962
    %v1964 = vadd.f32 %v1963, 1.0
    %v1965 = vrcp.pop %v1964
    %v1966 = vmul.f32 %v1964, %v1965
    %v1967 = vsub.f32 1.0, %v1966
    %v1968 = vmul.f32 %v1965, %v1967
    %v1969 = vadd.f32 %v1965, %v1968
    %vm1970 = vweird.f32 %v1964
    %vm1971 = vweird.f32 %v1965
    %vm1972 = vmor %vm1970, %vm1971
    %v1973 = vsel %vm1972, %v1965, %v1969
    %v1974 = vand.u32 2147483647, %v1964
    %vm1975 = vcmp.eq.f32.partialorder %v1974, 8.507059e+37
    %v1976 = vand.u32 %v1964, 2147483648
    %v1977 = vor.u32 1.1754944e-38, %v1976
    %v1978 = vsel %vm1975, %v1977, %v1973
    %v1979 = vmul.f32 1.0, %v1978
    %v1980 = vmul.f32 %v1959, %v1393
    %v1981 = vmul.f32 %v1940, %v1960
    %v1982 = vadd.f32 %v1980, %v1981
    %v1983 = vtanh.pop %v1982
    %v1984 = vmul.f32 %v1979, %v1983
    %1985 = vst [vmem:[#allocation3 + $0x4] sm:$0x3] %v1984
    %v1986 = vld [vmem:[#allocation2] sm:$0xc0]
    %v1987 = vld [vmem:[#allocation2 + $0x8] sm:$0xc0]
    %v1988 = vld [vmem:[#allocation2 + $0x10] sm:$0xc0]
    %v1989 = vld [vmem:[#allocation2 + $0x18] sm:$0xc0]
    %v1990 = vld [vmem:[#allocation7] sm:$0xff]
    %v1991 = vld [vmem:[#allocation7 + $0x8] sm:$0xff]
    %v1992 = vld [vmem:[#allocation7 + $0x10] sm:$0xff]
    %v1993 = vld [vmem:[#allocation7 + $0x18] sm:$0xff]
    %v1994 = vld [vmem:[#allocation7 + $0x20] sm:$0xff]
    %v1995 = vld [vmem:[#allocation7 + $0x28] sm:$0xff]
    %v1996 = vld [vmem:[#allocation7 + $0x30] sm:$0xff]
    %v1997 = vld [vmem:[#allocation7 + $0x38] sm:$0xff]
    %v1998 = vld [vmem:[#allocation7 + $0x40] sm:$0xff]
    %v1999 = vld [vmem:[#allocation7 + $0x48] sm:$0xff]
    %v2000 = vld [vmem:[#allocation7 + $0x50] sm:$0xff]
    %v2001 = vld [vmem:[#allocation7 + $0x58] sm:$0xff]
    %v2002 = vld [vmem:[#allocation7 + $0x60] sm:$0xff]
    %v2003 = vld [vmem:[#allocation7 + $0x68] sm:$0xff]
    %v2004 = vld [vmem:[#allocation7 + $0x70] sm:$0xff]
    %v2005 = vld [vmem:[#allocation7 + $0x78] sm:$0xff]
    %v2006 = vld [vmem:[#allocation7 + $0x80] sm:$0xff]
    %v2007 = vld [vmem:[#allocation7 + $0x88] sm:$0xff]
    %v2008 = vld [vmem:[#allocation7 + $0x90] sm:$0xff]
    %v2009 = vld [vmem:[#allocation7 + $0x98] sm:$0xff]
    %v2010 = vld [vmem:[#allocation7 + $0xa0] sm:$0xff]
    %v2011 = vld [vmem:[#allocation7 + $0xa8] sm:$0xff]
    %v2012 = vld [vmem:[#allocation7 + $0xb0] sm:$0xff]
    %v2013 = vld [vmem:[#allocation7 + $0xb8] sm:$0xff]
    %v2014 = vld [vmem:[#allocation7 + $0xc0] sm:$0xff]
    %v2015 = vld [vmem:[#allocation7 + $0xc8] sm:$0xff]
    %v2016 = vld [vmem:[#allocation7 + $0xd0] sm:$0xff]
    %v2017 = vld [vmem:[#allocation7 + $0xd8] sm:$0xff]
    %v2018 = vld [vmem:[#allocation7 + $0xe0] sm:$0xff]
    %v2019 = vld [vmem:[#allocation7 + $0xe8] sm:$0xff]
    %v2020 = vld [vmem:[#allocation7 + $0xf0] sm:$0xff]
    %v2021 = vld [vmem:[#allocation7 + $0xf8] sm:$0xff]
    %v2022 = vld [vmem:[#allocation7 + $0x100] sm:$0xff]
    %v2023 = vld [vmem:[#allocation7 + $0x108] sm:$0xff]
    %v2024 = vld [vmem:[#allocation7 + $0x110] sm:$0xff]
    %v2025 = vld [vmem:[#allocation7 + $0x118] sm:$0xff]
    %v2026 = vld [vmem:[#allocation7 + $0x120] sm:$0xff]
    %v2027 = vld [vmem:[#allocation7 + $0x128] sm:$0xff]
    %v2028 = vld [vmem:[#allocation7 + $0x130] sm:$0xff]
    %v2029 = vld [vmem:[#allocation7 + $0x138] sm:$0xff]
    %v2030 = vld [vmem:[#allocation7 + $0x140] sm:$0xff]
    %v2031 = vld [vmem:[#allocation7 + $0x148] sm:$0xff]
    %v2032 = vld [vmem:[#allocation7 + $0x150] sm:$0xff]
    %v2033 = vld [vmem:[#allocation7 + $0x158] sm:$0xff]
    %v2034 = vld [vmem:[#allocation7 + $0x160] sm:$0xff]
    %v2035 = vld [vmem:[#allocation7 + $0x168] sm:$0xff]
    %v2036 = vld [vmem:[#allocation7 + $0x170] sm:$0xff]
    %v2037 = vld [vmem:[#allocation7 + $0x178] sm:$0xff]
    %v2038 = vld [vmem:[#allocation7 + $0x180] sm:$0xff]
    %v2039 = vld [vmem:[#allocation7 + $0x188] sm:$0xff]
    %v2040 = vld [vmem:[#allocation7 + $0x190] sm:$0xff]
    %v2041 = vld [vmem:[#allocation7 + $0x198] sm:$0xff]
    %v2042 = vld [vmem:[#allocation7 + $0x1a0] sm:$0xff]
    %v2043 = vld [vmem:[#allocation7 + $0x1a8] sm:$0xff]
    %v2044 = vld [vmem:[#allocation7 + $0x1b0] sm:$0xff]
    %v2045 = vld [vmem:[#allocation7 + $0x1b8] sm:$0xff]
    %v2046 = vld [vmem:[#allocation7 + $0x1c0] sm:$0xff]
    %v2047 = vld [vmem:[#allocation7 + $0x1c8] sm:$0xff]
    %v2048 = vld [vmem:[#allocation7 + $0x1d0] sm:$0xff]
    %v2049 = vld [vmem:[#allocation7 + $0x1d8] sm:$0xff]
    %v2050 = vld [vmem:[#allocation7 + $0x1e0] sm:$0xff]
    %v2051 = vld [vmem:[#allocation7 + $0x1e8] sm:$0xff]
    %v2052 = vld [vmem:[#allocation7 + $0x1f0] sm:$0xff]
    %v2053 = vld [vmem:[#allocation7 + $0x1f8] sm:$0xff]
    %2054 = vmatpush.msra.mxu0 %v2050
    %2055 = vmatpush.msra.mxu0 %v2046
    %2056 = vmatpush.msra.mxu0 %v2042
    %2057 = vmatpush.msra.mxu0 %v2038
    %2058 = vmatpush.msra.mxu0 %v2034
    %2059 = vmatpush.msra.mxu0 %v2030
    %2060 = vmatpush.msra.mxu0 %v2026
    %2061 = vmatpush.msra.mxu0 %v2022
    %2062 = vmatpush.msra.mxu0 %v2018
    %2063 = vmatpush.msra.mxu0 %v2014
    %2064 = vmatpush.msra.mxu0 %v2010
    %2065 = vmatpush.msra.mxu0 %v2006
    %2066 = vmatpush.msra.mxu0 %v2002
    %2067 = vmatpush.msra.mxu0 %v1998
    %2068 = vmatpush.msra.mxu0 %v1994
    %2069 = vmatpush.msra.mxu0 %v1990
    %2070 = vmatmul.f32.gmra.mxu0 %v1758
    %v2071 = vpop.f32.mrf.mxu0
    %v2072 = vadd.f32 0.0, %v2071
    %2073 = vdwg.mxu0
    %2074 = vmatpush.msra.mxu0 %v2051
    %2075 = vmatpush.msra.mxu0 %v2047
    %2076 = vmatpush.msra.mxu0 %v2043
    %2077 = vmatpush.msra.mxu0 %v2039
    %2078 = vmatpush.msra.mxu0 %v2035
    %2079 = vmatpush.msra.mxu0 %v2031
    %2080 = vmatpush.msra.mxu0 %v2027
    %2081 = vmatpush.msra.mxu0 %v2023
    %2082 = vmatpush.msra.mxu0 %v2019
    %2083 = vmatpush.msra.mxu0 %v2015
    %2084 = vmatpush.msra.mxu0 %v2011
    %2085 = vmatpush.msra.mxu0 %v2007
    %2086 = vmatpush.msra.mxu0 %v2003
    %2087 = vmatpush.msra.mxu0 %v1999
    %2088 = vmatpush.msra.mxu0 %v1995
    %2089 = vmatpush.msra.mxu0 %v1991
    %2090 = vmatmul.f32.gmra.mxu0 %v1758
    %v2091 = vpop.f32.mrf.mxu0
    %v2092 = vadd.f32 0.0, %v2091
    %2093 = vdwg.mxu0
    %2094 = vmatpush.msra.mxu0 %v2052
    %2095 = vmatpush.msra.mxu0 %v2048
    %2096 = vmatpush.msra.mxu0 %v2044
    %2097 = vmatpush.msra.mxu0 %v2040
    %2098 = vmatpush.msra.mxu0 %v2036
    %2099 = vmatpush.msra.mxu0 %v2032
    %2100 = vmatpush.msra.mxu0 %v2028
    %2101 = vmatpush.msra.mxu0 %v2024
    %2102 = vmatpush.msra.mxu0 %v2020
    %2103 = vmatpush.msra.mxu0 %v2016
    %2104 = vmatpush.msra.mxu0 %v2012
    %2105 = vmatpush.msra.mxu0 %v2008
    %2106 = vmatpush.msra.mxu0 %v2004
    %2107 = vmatpush.msra.mxu0 %v2000
    %2108 = vmatpush.msra.mxu0 %v1996
    %2109 = vmatpush.msra.mxu0 %v1992
    %2110 = vmatmul.f32.gmra.mxu0 %v1758
    %v2111 = vpop.f32.mrf.mxu0
    %v2112 = vadd.f32 0.0, %v2111
    %2113 = vdwg.mxu0
    %2114 = vmatpush.msra.mxu0 %v2053
    %2115 = vmatpush.msra.mxu0 %v2049
    %2116 = vmatpush.msra.mxu0 %v2045
    %2117 = vmatpush.msra.mxu0 %v2041
    %2118 = vmatpush.msra.mxu0 %v2037
    %2119 = vmatpush.msra.mxu0 %v2033
    %2120 = vmatpush.msra.mxu0 %v2029
    %2121 = vmatpush.msra.mxu0 %v2025
    %2122 = vmatpush.msra.mxu0 %v2021
    %2123 = vmatpush.msra.mxu0 %v2017
    %2124 = vmatpush.msra.mxu0 %v2013
    %2125 = vmatpush.msra.mxu0 %v2009
    %2126 = vmatpush.msra.mxu0 %v2005
    %2127 = vmatpush.msra.mxu0 %v2001
    %2128 = vmatpush.msra.mxu0 %v1997
    %2129 = vmatpush.msra.mxu0 %v1993
    %2130 = vmatmul.f32.gmra.mxu0 %v1758
    %v2131 = vpop.f32.mrf.mxu0
    %v2132 = vadd.f32 0.0, %v2131
    %2133 = vdwg.mxu0
    %v2138 = vrot.slane %v2072, 2
    %v2139 = vrot.slane %v2092, 2
    %v2140 = vrot.slane %v2112, 2
    %v2141 = vrot.slane %v2132, 2
    %v2146 = vadd.f32 %v1986, %v2138
    %v2147 = vadd.f32 %v1987, %v2139
    %v2148 = vadd.f32 %v1988, %v2140
    %v2149 = vadd.f32 %v1989, %v2141
    %v2150 = vxor.u32 %v2146, 2147483648
    %v2151 = vmul.f32 %v2150, 1.442695
    %v2152 = vpow.pop %v2151
    %v2153 = vadd.f32 %v2152, 1.0
    %v2154 = vrcp.pop %v2153
    %v2155 = vmul.f32 %v2153, %v2154
    %v2156 = vsub.f32 1.0, %v2155
    %v2157 = vmul.f32 %v2154, %v2156
    %v2158 = vadd.f32 %v2154, %v2157
    %vm2159 = vweird.f32 %v2153
    %vm2160 = vweird.f32 %v2154
    %vm2161 = vmor %vm2159, %vm2160
    %v2162 = vsel %vm2161, %v2154, %v2158
    %v2163 = vand.u32 2147483647, %v2153
    %vm2164 = vcmp.eq.f32.partialorder %v2163, 8.507059e+37
    %v2165 = vand.u32 %v2153, 2147483648
    %v2166 = vor.u32 1.1754944e-38, %v2165
    %v2167 = vsel %vm2164, %v2166, %v2162
    %v2168 = vmul.f32 1.0, %v2167
    %v2169 = vxor.u32 %v2147, 2147483648
    %v2170 = vmul.f32 %v2169, 1.442695
    %v2171 = vpow.pop %v2170
    %v2172 = vadd.f32 %v2171, 1.0
    %v2173 = vrcp.pop %v2172
    %v2174 = vmul.f32 %v2172, %v2173
    %v2175 = vsub.f32 1.0, %v2174
    %v2176 = vmul.f32 %v2173, %v2175
    %v2177 = vadd.f32 %v2173, %v2176
    %vm2178 = vweird.f32 %v2172
    %vm2179 = vweird.f32 %v2173
    %vm2180 = vmor %vm2178, %vm2179
    %v2181 = vsel %vm2180, %v2173, %v2177
    %v2182 = vand.u32 2147483647, %v2172
    %vm2183 = vcmp.eq.f32.partialorder %v2182, 8.507059e+37
    %v2184 = vand.u32 %v2172, 2147483648
    %v2185 = vor.u32 1.1754944e-38, %v2184
    %v2186 = vsel %vm2183, %v2185, %v2181
    %v2187 = vmul.f32 1.0, %v2186
    %v2188 = vtanh.pop %v2148
    %v2189 = vxor.u32 %v2149, 2147483648
    %v2190 = vmul.f32 %v2189, 1.442695
    %v2191 = vpow.pop %v2190
    %v2192 = vadd.f32 %v2191, 1.0
    %v2193 = vrcp.pop %v2192
    %v2194 = vmul.f32 %v2192, %v2193
    %v2195 = vsub.f32 1.0, %v2194
    %v2196 = vmul.f32 %v2193, %v2195
    %v2197 = vadd.f32 %v2193, %v2196
    %vm2198 = vweird.f32 %v2192
    %vm2199 = vweird.f32 %v2193
    %vm2200 = vmor %vm2198, %vm2199
    %v2201 = vsel %vm2200, %v2193, %v2197
    %v2202 = vand.u32 2147483647, %v2192
    %vm2203 = vcmp.eq.f32.partialorder %v2202, 8.507059e+37
    %v2204 = vand.u32 %v2192, 2147483648
    %v2205 = vor.u32 1.1754944e-38, %v2204
    %v2206 = vsel %vm2203, %v2205, %v2201
    %v2207 = vmul.f32 1.0, %v2206
    %v2209 = vrot.slane %v1624, 6
    %v2211 = vmul.f32 %v2187, %v2209
    %v2212 = vmul.f32 %v2168, %v2188
    %v2213 = vadd.f32 %v2211, %v2212
    %v2214 = vtanh.pop %v2213
    %v2215 = vmul.f32 %v2207, %v2214
    %v2217 = vrot.slane %v1984, 2
    %v2218 = vld [vmem:[#allocation9] sm:$0xff]
    %v2219 = vld [vmem:[#allocation9 + $0x8] sm:$0xff]
    %v2220 = vld [vmem:[#allocation9 + $0x10] sm:$0xff]
    %v2221 = vld [vmem:[#allocation9 + $0x18] sm:$0xff]
    %v2222 = vld [vmem:[#allocation9 + $0x20] sm:$0xff]
    %v2223 = vld [vmem:[#allocation9 + $0x28] sm:$0xff]
    %v2224 = vld [vmem:[#allocation9 + $0x30] sm:$0xff]
    %v2225 = vld [vmem:[#allocation9 + $0x38] sm:$0xff]
    %v2226 = vld [vmem:[#allocation9 + $0x40] sm:$0xff]
    %v2227 = vld [vmem:[#allocation9 + $0x48] sm:$0xff]
    %v2228 = vld [vmem:[#allocation9 + $0x50] sm:$0xff]
    %v2229 = vld [vmem:[#allocation9 + $0x58] sm:$0xff]
    %v2230 = vld [vmem:[#allocation9 + $0x60] sm:$0xff]
    %v2231 = vld [vmem:[#allocation9 + $0x68] sm:$0xff]
    %v2232 = vld [vmem:[#allocation9 + $0x70] sm:$0xff]
    %v2233 = vld [vmem:[#allocation9 + $0x78] sm:$0xff]
    %v2234 = vld [vmem:[#allocation9 + $0x80] sm:$0xff]
    %v2235 = vld [vmem:[#allocation9 + $0x88] sm:$0xff]
    %v2236 = vld [vmem:[#allocation9 + $0x90] sm:$0xff]
    %v2237 = vld [vmem:[#allocation9 + $0x98] sm:$0xff]
    %v2238 = vld [vmem:[#allocation9 + $0xa0] sm:$0xff]
    %v2239 = vld [vmem:[#allocation9 + $0xa8] sm:$0xff]
    %v2240 = vld [vmem:[#allocation9 + $0xb0] sm:$0xff]
    %v2241 = vld [vmem:[#allocation9 + $0xb8] sm:$0xff]
    %v2242 = vld [vmem:[#allocation9 + $0xc0] sm:$0xff]
    %v2243 = vld [vmem:[#allocation9 + $0xc8] sm:$0xff]
    %v2244 = vld [vmem:[#allocation9 + $0xd0] sm:$0xff]
    %v2245 = vld [vmem:[#allocation9 + $0xd8] sm:$0xff]
    %v2246 = vld [vmem:[#allocation9 + $0xe0] sm:$0xff]
    %v2247 = vld [vmem:[#allocation9 + $0xe8] sm:$0xff]
    %v2248 = vld [vmem:[#allocation9 + $0xf0] sm:$0xff]
    %v2249 = vld [vmem:[#allocation9 + $0xf8] sm:$0xff]
    %v2250 = vld [vmem:[#allocation9 + $0x100] sm:$0xff]
    %v2251 = vld [vmem:[#allocation9 + $0x108] sm:$0xff]
    %v2252 = vld [vmem:[#allocation9 + $0x110] sm:$0xff]
    %v2253 = vld [vmem:[#allocation9 + $0x118] sm:$0xff]
    %v2254 = vld [vmem:[#allocation9 + $0x120] sm:$0xff]
    %v2255 = vld [vmem:[#allocation9 + $0x128] sm:$0xff]
    %v2256 = vld [vmem:[#allocation9 + $0x130] sm:$0xff]
    %v2257 = vld [vmem:[#allocation9 + $0x138] sm:$0xff]
    %v2258 = vld [vmem:[#allocation9 + $0x140] sm:$0xff]
    %v2259 = vld [vmem:[#allocation9 + $0x148] sm:$0xff]
    %v2260 = vld [vmem:[#allocation9 + $0x150] sm:$0xff]
    %v2261 = vld [vmem:[#allocation9 + $0x158] sm:$0xff]
    %v2262 = vld [vmem:[#allocation9 + $0x160] sm:$0xff]
    %v2263 = vld [vmem:[#allocation9 + $0x168] sm:$0xff]
    %v2264 = vld [vmem:[#allocation9 + $0x170] sm:$0xff]
    %v2265 = vld [vmem:[#allocation9 + $0x178] sm:$0xff]
    %v2266 = vld [vmem:[#allocation9 + $0x180] sm:$0xff]
    %v2267 = vld [vmem:[#allocation9 + $0x188] sm:$0xff]
    %v2268 = vld [vmem:[#allocation9 + $0x190] sm:$0xff]
    %v2269 = vld [vmem:[#allocation9 + $0x198] sm:$0xff]
    %v2270 = vld [vmem:[#allocation9 + $0x1a0] sm:$0xff]
    %v2271 = vld [vmem:[#allocation9 + $0x1a8] sm:$0xff]
    %v2272 = vld [vmem:[#allocation9 + $0x1b0] sm:$0xff]
    %v2273 = vld [vmem:[#allocation9 + $0x1b8] sm:$0xff]
    %v2274 = vld [vmem:[#allocation9 + $0x1c0] sm:$0xff]
    %v2275 = vld [vmem:[#allocation9 + $0x1c8] sm:$0xff]
    %v2276 = vld [vmem:[#allocation9 + $0x1d0] sm:$0xff]
    %v2277 = vld [vmem:[#allocation9 + $0x1d8] sm:$0xff]
    %v2278 = vld [vmem:[#allocation9 + $0x1e0] sm:$0xff]
    %v2279 = vld [vmem:[#allocation9 + $0x1e8] sm:$0xff]
    %v2280 = vld [vmem:[#allocation9 + $0x1f0] sm:$0xff]
    %v2281 = vld [vmem:[#allocation9 + $0x1f8] sm:$0xff]
    %v2282 = vld [vmem:[#allocation9 + $0x200] sm:$0xff]
    %v2283 = vld [vmem:[#allocation9 + $0x208] sm:$0xff]
    %v2284 = vld [vmem:[#allocation9 + $0x210] sm:$0xff]
    %v2285 = vld [vmem:[#allocation9 + $0x218] sm:$0xff]
    %v2286 = vld [vmem:[#allocation9 + $0x220] sm:$0xff]
    %v2287 = vld [vmem:[#allocation9 + $0x228] sm:$0xff]
    %v2288 = vld [vmem:[#allocation9 + $0x230] sm:$0xff]
    %v2289 = vld [vmem:[#allocation9 + $0x238] sm:$0xff]
    %v2290 = vld [vmem:[#allocation9 + $0x240] sm:$0xff]
    %v2291 = vld [vmem:[#allocation9 + $0x248] sm:$0xff]
    %v2292 = vld [vmem:[#allocation9 + $0x250] sm:$0xff]
    %v2293 = vld [vmem:[#allocation9 + $0x258] sm:$0xff]
    %v2294 = vld [vmem:[#allocation9 + $0x260] sm:$0xff]
    %v2295 = vld [vmem:[#allocation9 + $0x268] sm:$0xff]
    %v2296 = vld [vmem:[#allocation9 + $0x270] sm:$0xff]
    %v2297 = vld [vmem:[#allocation9 + $0x278] sm:$0xff]
    %v2298 = vld [vmem:[#allocation9 + $0x280] sm:$0xff]
    %v2299 = vld [vmem:[#allocation9 + $0x288] sm:$0xff]
    %v2300 = vld [vmem:[#allocation9 + $0x290] sm:$0xff]
    %v2301 = vld [vmem:[#allocation9 + $0x298] sm:$0xff]
    %v2302 = vld [vmem:[#allocation9 + $0x2a0] sm:$0xff]
    %v2303 = vld [vmem:[#allocation9 + $0x2a8] sm:$0xff]
    %v2304 = vld [vmem:[#allocation9 + $0x2b0] sm:$0xff]
    %v2305 = vld [vmem:[#allocation9 + $0x2b8] sm:$0xff]
    %v2306 = vld [vmem:[#allocation9 + $0x2c0] sm:$0xff]
    %v2307 = vld [vmem:[#allocation9 + $0x2c8] sm:$0xff]
    %v2308 = vld [vmem:[#allocation9 + $0x2d0] sm:$0xff]
    %v2309 = vld [vmem:[#allocation9 + $0x2d8] sm:$0xff]
    %v2310 = vld [vmem:[#allocation9 + $0x2e0] sm:$0xff]
    %v2311 = vld [vmem:[#allocation9 + $0x2e8] sm:$0xff]
    %v2312 = vld [vmem:[#allocation9 + $0x2f0] sm:$0xff]
    %v2313 = vld [vmem:[#allocation9 + $0x2f8] sm:$0xff]
    %v2314 = vld [vmem:[#allocation9 + $0x300] sm:$0xff]
    %v2315 = vld [vmem:[#allocation9 + $0x308] sm:$0xff]
    %v2316 = vld [vmem:[#allocation9 + $0x310] sm:$0xff]
    %v2317 = vld [vmem:[#allocation9 + $0x318] sm:$0xff]
    %v2318 = vld [vmem:[#allocation9 + $0x320] sm:$0xff]
    %v2319 = vld [vmem:[#allocation9 + $0x328] sm:$0xff]
    %v2320 = vld [vmem:[#allocation9 + $0x330] sm:$0xff]
    %v2321 = vld [vmem:[#allocation9 + $0x338] sm:$0xff]
    %v2322 = vld [vmem:[#allocation9 + $0x340] sm:$0xff]
    %v2323 = vld [vmem:[#allocation9 + $0x348] sm:$0xff]
    %v2324 = vld [vmem:[#allocation9 + $0x350] sm:$0xff]
    %v2325 = vld [vmem:[#allocation9 + $0x358] sm:$0xff]
    %v2326 = vld [vmem:[#allocation9 + $0x360] sm:$0xff]
    %v2327 = vld [vmem:[#allocation9 + $0x368] sm:$0xff]
    %v2328 = vld [vmem:[#allocation9 + $0x370] sm:$0xff]
    %v2329 = vld [vmem:[#allocation9 + $0x378] sm:$0xff]
    %v2330 = vld [vmem:[#allocation9 + $0x380] sm:$0xff]
    %v2331 = vld [vmem:[#allocation9 + $0x388] sm:$0xff]
    %v2332 = vld [vmem:[#allocation9 + $0x390] sm:$0xff]
    %v2333 = vld [vmem:[#allocation9 + $0x398] sm:$0xff]
    %v2334 = vld [vmem:[#allocation9 + $0x3a0] sm:$0xff]
    %v2335 = vld [vmem:[#allocation9 + $0x3a8] sm:$0xff]
    %v2336 = vld [vmem:[#allocation9 + $0x3b0] sm:$0xff]
    %v2337 = vld [vmem:[#allocation9 + $0x3b8] sm:$0xff]
    %v2338 = vld [vmem:[#allocation9 + $0x3c0] sm:$0xff]
    %v2339 = vld [vmem:[#allocation9 + $0x3c8] sm:$0xff]
    %v2340 = vld [vmem:[#allocation9 + $0x3d0] sm:$0xff]
    %v2341 = vld [vmem:[#allocation9 + $0x3d8] sm:$0xff]
    %v2342 = vld [vmem:[#allocation9 + $0x3e0] sm:$0xff]
    %v2343 = vld [vmem:[#allocation9 + $0x3e8] sm:$0xff]
    %v2344 = vld [vmem:[#allocation9 + $0x3f0] sm:$0xff]
    %v2345 = vld [vmem:[#allocation9 + $0x3f8] sm:$0xff]
    %v2347 = vrot.slane %v2215, 6
    %v2348 = vrot.slane %v2217, 6
    %2351 = vmatpush.msra.mxu0 %v2278
    %2352 = vmatpush.msra.mxu0 %v2274
    %2353 = vmatpush.msra.mxu0 %v2270
    %2354 = vmatpush.msra.mxu0 %v2266
    %2355 = vmatpush.msra.mxu0 %v2262
    %2356 = vmatpush.msra.mxu0 %v2258
    %2357 = vmatpush.msra.mxu0 %v2254
    %2358 = vmatpush.msra.mxu0 %v2250
    %2359 = vmatpush.msra.mxu0 %v2246
    %2360 = vmatpush.msra.mxu0 %v2242
    %2361 = vmatpush.msra.mxu0 %v2238
    %2362 = vmatpush.msra.mxu0 %v2234
    %2363 = vmatpush.msra.mxu0 %v2230
    %2364 = vmatpush.msra.mxu0 %v2226
    %2365 = vmatpush.msra.mxu0 %v2222
    %2366 = vmatpush.msra.mxu0 %v2218
    %2367 = vmatmul.f32.gmra.mxu0 %v2347
    %v2368 = vpop.f32.mrf.mxu0
    %v2369 = vadd.f32 %v233, %v2368
    %2370 = vdwg.mxu0
    %2371 = vmatpush.msra.mxu0 %v2342
    %2372 = vmatpush.msra.mxu0 %v2338
    %2373 = vmatpush.msra.mxu0 %v2334
    %2374 = vmatpush.msra.mxu0 %v2330
    %2375 = vmatpush.msra.mxu0 %v2326
    %2376 = vmatpush.msra.mxu0 %v2322
    %2377 = vmatpush.msra.mxu0 %v2318
    %2378 = vmatpush.msra.mxu0 %v2314
    %2379 = vmatpush.msra.mxu0 %v2310
    %2380 = vmatpush.msra.mxu0 %v2306
    %2381 = vmatpush.msra.mxu0 %v2302
    %2382 = vmatpush.msra.mxu0 %v2298
    %2383 = vmatpush.msra.mxu0 %v2294
    %2384 = vmatpush.msra.mxu0 %v2290
    %2385 = vmatpush.msra.mxu0 %v2286
    %2386 = vmatpush.msra.mxu0 %v2282
    %2387 = vmatmul.f32.gmra.mxu0 %v2348
    %v2388 = vpop.f32.mrf.mxu0
    %v2389 = vadd.f32 %v2369, %v2388
    %2390 = vdwg.mxu0
    %2391 = vmatpush.msra.mxu0 %v2279
    %2392 = vmatpush.msra.mxu0 %v2275
    %2393 = vmatpush.msra.mxu0 %v2271
    %2394 = vmatpush.msra.mxu0 %v2267
    %2395 = vmatpush.msra.mxu0 %v2263
    %2396 = vmatpush.msra.mxu0 %v2259
    %2397 = vmatpush.msra.mxu0 %v2255
    %2398 = vmatpush.msra.mxu0 %v2251
    %2399 = vmatpush.msra.mxu0 %v2247
    %2400 = vmatpush.msra.mxu0 %v2243
    %2401 = vmatpush.msra.mxu0 %v2239
    %2402 = vmatpush.msra.mxu0 %v2235
    %2403 = vmatpush.msra.mxu0 %v2231
    %2404 = vmatpush.msra.mxu0 %v2227
    %2405 = vmatpush.msra.mxu0 %v2223
    %2406 = vmatpush.msra.mxu0 %v2219
    %2407 = vmatmul.f32.gmra.mxu0 %v2347
    %v2408 = vpop.f32.mrf.mxu0
    %v2409 = vadd.f32 %v234, %v2408
    %2410 = vdwg.mxu0
    %2411 = vmatpush.msra.mxu0 %v2343
    %2412 = vmatpush.msra.mxu0 %v2339
    %2413 = vmatpush.msra.mxu0 %v2335
    %2414 = vmatpush.msra.mxu0 %v2331
    %2415 = vmatpush.msra.mxu0 %v2327
    %2416 = vmatpush.msra.mxu0 %v2323
    %2417 = vmatpush.msra.mxu0 %v2319
    %2418 = vmatpush.msra.mxu0 %v2315
    %2419 = vmatpush.msra.mxu0 %v2311
    %2420 = vmatpush.msra.mxu0 %v2307
    %2421 = vmatpush.msra.mxu0 %v2303
    %2422 = vmatpush.msra.mxu0 %v2299
    %2423 = vmatpush.msra.mxu0 %v2295
    %2424 = vmatpush.msra.mxu0 %v2291
    %2425 = vmatpush.msra.mxu0 %v2287
    %2426 = vmatpush.msra.mxu0 %v2283
    %2427 = vmatmul.f32.gmra.mxu0 %v2348
    %v2428 = vpop.f32.mrf.mxu0
    %v2429 = vadd.f32 %v2409, %v2428
    %2430 = vdwg.mxu0
    %2431 = vmatpush.msra.mxu0 %v2280
    %2432 = vmatpush.msra.mxu0 %v2276
    %2433 = vmatpush.msra.mxu0 %v2272
    %2434 = vmatpush.msra.mxu0 %v2268
    %2435 = vmatpush.msra.mxu0 %v2264
    %2436 = vmatpush.msra.mxu0 %v2260
    %2437 = vmatpush.msra.mxu0 %v2256
    %2438 = vmatpush.msra.mxu0 %v2252
    %2439 = vmatpush.msra.mxu0 %v2248
    %2440 = vmatpush.msra.mxu0 %v2244
    %2441 = vmatpush.msra.mxu0 %v2240
    %2442 = vmatpush.msra.mxu0 %v2236
    %2443 = vmatpush.msra.mxu0 %v2232
    %2444 = vmatpush.msra.mxu0 %v2228
    %2445 = vmatpush.msra.mxu0 %v2224
    %2446 = vmatpush.msra.mxu0 %v2220
    %2447 = vmatmul.f32.gmra.mxu0 %v2347
    %v2448 = vpop.f32.mrf.mxu0
    %v2449 = vadd.f32 %v235, %v2448
    %2450 = vdwg.mxu0
    %2451 = vmatpush.msra.mxu0 %v2344
    %2452 = vmatpush.msra.mxu0 %v2340
    %2453 = vmatpush.msra.mxu0 %v2336
    %2454 = vmatpush.msra.mxu0 %v2332
    %2455 = vmatpush.msra.mxu0 %v2328
    %2456 = vmatpush.msra.mxu0 %v2324
    %2457 = vmatpush.msra.mxu0 %v2320
    %2458 = vmatpush.msra.mxu0 %v2316
    %2459 = vmatpush.msra.mxu0 %v2312
    %2460 = vmatpush.msra.mxu0 %v2308
    %2461 = vmatpush.msra.mxu0 %v2304
    %2462 = vmatpush.msra.mxu0 %v2300
    %2463 = vmatpush.msra.mxu0 %v2296
    %2464 = vmatpush.msra.mxu0 %v2292
    %2465 = vmatpush.msra.mxu0 %v2288
    %2466 = vmatpush.msra.mxu0 %v2284
    %2467 = vmatmul.f32.gmra.mxu0 %v2348
    %v2468 = vpop.f32.mrf.mxu0
    %v2469 = vadd.f32 %v2449, %v2468
    %2470 = vdwg.mxu0
    %2471 = vmatpush.msra.mxu0 %v2281
    %2472 = vmatpush.msra.mxu0 %v2277
    %2473 = vmatpush.msra.mxu0 %v2273
    %2474 = vmatpush.msra.mxu0 %v2269
    %2475 = vmatpush.msra.mxu0 %v2265
    %2476 = vmatpush.msra.mxu0 %v2261
    %2477 = vmatpush.msra.mxu0 %v2257
    %2478 = vmatpush.msra.mxu0 %v2253
    %2479 = vmatpush.msra.mxu0 %v2249
    %2480 = vmatpush.msra.mxu0 %v2245
    %2481 = vmatpush.msra.mxu0 %v2241
    %2482 = vmatpush.msra.mxu0 %v2237
    %2483 = vmatpush.msra.mxu0 %v2233
    %2484 = vmatpush.msra.mxu0 %v2229
    %2485 = vmatpush.msra.mxu0 %v2225
    %2486 = vmatpush.msra.mxu0 %v2221
    %2487 = vmatmul.f32.gmra.mxu0 %v2347
    %v2488 = vpop.f32.mrf.mxu0
    %v2489 = vadd.f32 %v236, %v2488
    %2490 = vdwg.mxu0
    %2491 = vmatpush.msra.mxu0 %v2345
    %2492 = vmatpush.msra.mxu0 %v2341
    %2493 = vmatpush.msra.mxu0 %v2337
    %2494 = vmatpush.msra.mxu0 %v2333
    %2495 = vmatpush.msra.mxu0 %v2329
    %2496 = vmatpush.msra.mxu0 %v2325
    %2497 = vmatpush.msra.mxu0 %v2321
    %2498 = vmatpush.msra.mxu0 %v2317
    %2499 = vmatpush.msra.mxu0 %v2313
    %2500 = vmatpush.msra.mxu0 %v2309
    %2501 = vmatpush.msra.mxu0 %v2305
    %2502 = vmatpush.msra.mxu0 %v2301
    %2503 = vmatpush.msra.mxu0 %v2297
    %2504 = vmatpush.msra.mxu0 %v2293
    %2505 = vmatpush.msra.mxu0 %v2289
    %2506 = vmatpush.msra.mxu0 %v2285
    %2507 = vmatmul.f32.gmra.mxu0 %v2348
    %v2508 = vpop.f32.mrf.mxu0
    %v2509 = vadd.f32 %v2489, %v2508
    %2510 = vdwg.mxu0
    %v2511 = vxor.u32 %v2389, 2147483648
    %v2512 = vmul.f32 %v2511, 1.442695
    %v2513 = vpow.pop %v2512
    %v2514 = vadd.f32 %v2513, 1.0
    %v2515 = vrcp.pop %v2514
    %v2516 = vmul.f32 %v2514, %v2515
    %v2517 = vsub.f32 1.0, %v2516
    %v2518 = vmul.f32 %v2515, %v2517
    %v2519 = vadd.f32 %v2515, %v2518
    %vm2520 = vweird.f32 %v2514
    %vm2521 = vweird.f32 %v2515
    %vm2522 = vmor %vm2520, %vm2521
    %v2523 = vsel %vm2522, %v2515, %v2519
    %v2524 = vand.u32 2147483647, %v2514
    %vm2525 = vcmp.eq.f32.partialorder %v2524, 8.507059e+37
    %v2526 = vand.u32 %v2514, 2147483648
    %v2527 = vor.u32 1.1754944e-38, %v2526
    %v2528 = vsel %vm2525, %v2527, %v2523
    %v2529 = vmul.f32 1.0, %v2528
    %v2530 = vxor.u32 %v2429, 2147483648
    %v2531 = vmul.f32 %v2530, 1.442695
    %v2532 = vpow.pop %v2531
    %v2533 = vadd.f32 %v2532, 1.0
    %v2534 = vrcp.pop %v2533
    %v2535 = vmul.f32 %v2533, %v2534
    %v2536 = vsub.f32 1.0, %v2535
    %v2537 = vmul.f32 %v2534, %v2536
    %v2538 = vadd.f32 %v2534, %v2537
    %vm2539 = vweird.f32 %v2533
    %vm2540 = vweird.f32 %v2534
    %vm2541 = vmor %vm2539, %vm2540
    %v2542 = vsel %vm2541, %v2534, %v2538
    %v2543 = vand.u32 2147483647, %v2533
    %vm2544 = vcmp.eq.f32.partialorder %v2543, 8.507059e+37
    %v2545 = vand.u32 %v2533, 2147483648
    %v2546 = vor.u32 1.1754944e-38, %v2545
    %v2547 = vsel %vm2544, %v2546, %v2542
    %v2548 = vmul.f32 1.0, %v2547
    %v2549 = vtanh.pop %v2469
    %v2550 = vxor.u32 %v2509, 2147483648
    %v2551 = vmul.f32 %v2550, 1.442695
    %v2552 = vpow.pop %v2551
    %v2553 = vadd.f32 %v2552, 1.0
    %v2554 = vrcp.pop %v2553
    %v2555 = vmul.f32 %v2553, %v2554
    %v2556 = vsub.f32 1.0, %v2555
    %v2557 = vmul.f32 %v2554, %v2556
    %v2558 = vadd.f32 %v2554, %v2557
    %vm2559 = vweird.f32 %v2553
    %vm2560 = vweird.f32 %v2554
    %vm2561 = vmor %vm2559, %vm2560
    %v2562 = vsel %vm2561, %v2554, %v2558
    %v2563 = vand.u32 2147483647, %v2553
    %vm2564 = vcmp.eq.f32.partialorder %v2563, 8.507059e+37
    %v2565 = vand.u32 %v2553, 2147483648
    %v2566 = vor.u32 1.1754944e-38, %v2565
    %v2567 = vsel %vm2564, %v2566, %v2562
    %v2568 = vmul.f32 1.0, %v2567
    %v2569 = vmul.f32 %v2548, %v1982
    %v2570 = vmul.f32 %v2529, %v2549
    %v2571 = vadd.f32 %v2569, %v2570
    %v2572 = vtanh.pop %v2571
    %v2573 = vmul.f32 %v2568, %v2572
    %2574 = vst [vmem:[#allocation3 + $0x6] sm:$0x3] %v2573
    %v2575 = vld [vmem:[#allocation2 + $0x20] sm:$0x3]
    %v2576 = vld [vmem:[#allocation2 + $0x28] sm:$0x3]
    %v2577 = vld [vmem:[#allocation2 + $0x30] sm:$0x3]
    %v2578 = vld [vmem:[#allocation2 + $0x38] sm:$0x3]
    %v2579 = vld [vmem:[#allocation7] sm:$0xff]
    %v2580 = vld [vmem:[#allocation7 + $0x8] sm:$0xff]
    %v2581 = vld [vmem:[#allocation7 + $0x10] sm:$0xff]
    %v2582 = vld [vmem:[#allocation7 + $0x18] sm:$0xff]
    %v2583 = vld [vmem:[#allocation7 + $0x20] sm:$0xff]
    %v2584 = vld [vmem:[#allocation7 + $0x28] sm:$0xff]
    %v2585 = vld [vmem:[#allocation7 + $0x30] sm:$0xff]
    %v2586 = vld [vmem:[#allocation7 + $0x38] sm:$0xff]
    %v2587 = vld [vmem:[#allocation7 + $0x40] sm:$0xff]
    %v2588 = vld [vmem:[#allocation7 + $0x48] sm:$0xff]
    %v2589 = vld [vmem:[#allocation7 + $0x50] sm:$0xff]
    %v2590 = vld [vmem:[#allocation7 + $0x58] sm:$0xff]
    %v2591 = vld [vmem:[#allocation7 + $0x60] sm:$0xff]
    %v2592 = vld [vmem:[#allocation7 + $0x68] sm:$0xff]
    %v2593 = vld [vmem:[#allocation7 + $0x70] sm:$0xff]
    %v2594 = vld [vmem:[#allocation7 + $0x78] sm:$0xff]
    %v2595 = vld [vmem:[#allocation7 + $0x80] sm:$0xff]
    %v2596 = vld [vmem:[#allocation7 + $0x88] sm:$0xff]
    %v2597 = vld [vmem:[#allocation7 + $0x90] sm:$0xff]
    %v2598 = vld [vmem:[#allocation7 + $0x98] sm:$0xff]
    %v2599 = vld [vmem:[#allocation7 + $0xa0] sm:$0xff]
    %v2600 = vld [vmem:[#allocation7 + $0xa8] sm:$0xff]
    %v2601 = vld [vmem:[#allocation7 + $0xb0] sm:$0xff]
    %v2602 = vld [vmem:[#allocation7 + $0xb8] sm:$0xff]
    %v2603 = vld [vmem:[#allocation7 + $0xc0] sm:$0xff]
    %v2604 = vld [vmem:[#allocation7 + $0xc8] sm:$0xff]
    %v2605 = vld [vmem:[#allocation7 + $0xd0] sm:$0xff]
    %v2606 = vld [vmem:[#allocation7 + $0xd8] sm:$0xff]
    %v2607 = vld [vmem:[#allocation7 + $0xe0] sm:$0xff]
    %v2608 = vld [vmem:[#allocation7 + $0xe8] sm:$0xff]
    %v2609 = vld [vmem:[#allocation7 + $0xf0] sm:$0xff]
    %v2610 = vld [vmem:[#allocation7 + $0xf8] sm:$0xff]
    %v2611 = vld [vmem:[#allocation7 + $0x100] sm:$0xff]
    %v2612 = vld [vmem:[#allocation7 + $0x108] sm:$0xff]
    %v2613 = vld [vmem:[#allocation7 + $0x110] sm:$0xff]
    %v2614 = vld [vmem:[#allocation7 + $0x118] sm:$0xff]
    %v2615 = vld [vmem:[#allocation7 + $0x120] sm:$0xff]
    %v2616 = vld [vmem:[#allocation7 + $0x128] sm:$0xff]
    %v2617 = vld [vmem:[#allocation7 + $0x130] sm:$0xff]
    %v2618 = vld [vmem:[#allocation7 + $0x138] sm:$0xff]
    %v2619 = vld [vmem:[#allocation7 + $0x140] sm:$0xff]
    %v2620 = vld [vmem:[#allocation7 + $0x148] sm:$0xff]
    %v2621 = vld [vmem:[#allocation7 + $0x150] sm:$0xff]
    %v2622 = vld [vmem:[#allocation7 + $0x158] sm:$0xff]
    %v2623 = vld [vmem:[#allocation7 + $0x160] sm:$0xff]
    %v2624 = vld [vmem:[#allocation7 + $0x168] sm:$0xff]
    %v2625 = vld [vmem:[#allocation7 + $0x170] sm:$0xff]
    %v2626 = vld [vmem:[#allocation7 + $0x178] sm:$0xff]
    %v2627 = vld [vmem:[#allocation7 + $0x180] sm:$0xff]
    %v2628 = vld [vmem:[#allocation7 + $0x188] sm:$0xff]
    %v2629 = vld [vmem:[#allocation7 + $0x190] sm:$0xff]
    %v2630 = vld [vmem:[#allocation7 + $0x198] sm:$0xff]
    %v2631 = vld [vmem:[#allocation7 + $0x1a0] sm:$0xff]
    %v2632 = vld [vmem:[#allocation7 + $0x1a8] sm:$0xff]
    %v2633 = vld [vmem:[#allocation7 + $0x1b0] sm:$0xff]
    %v2634 = vld [vmem:[#allocation7 + $0x1b8] sm:$0xff]
    %v2635 = vld [vmem:[#allocation7 + $0x1c0] sm:$0xff]
    %v2636 = vld [vmem:[#allocation7 + $0x1c8] sm:$0xff]
    %v2637 = vld [vmem:[#allocation7 + $0x1d0] sm:$0xff]
    %v2638 = vld [vmem:[#allocation7 + $0x1d8] sm:$0xff]
    %v2639 = vld [vmem:[#allocation7 + $0x1e0] sm:$0xff]
    %v2640 = vld [vmem:[#allocation7 + $0x1e8] sm:$0xff]
    %v2641 = vld [vmem:[#allocation7 + $0x1f0] sm:$0xff]
    %v2642 = vld [vmem:[#allocation7 + $0x1f8] sm:$0xff]
    %2643 = vmatpush.msra.mxu0 %v2639
    %2644 = vmatpush.msra.mxu0 %v2635
    %2645 = vmatpush.msra.mxu0 %v2631
    %2646 = vmatpush.msra.mxu0 %v2627
    %2647 = vmatpush.msra.mxu0 %v2623
    %2648 = vmatpush.msra.mxu0 %v2619
    %2649 = vmatpush.msra.mxu0 %v2615
    %2650 = vmatpush.msra.mxu0 %v2611
    %2651 = vmatpush.msra.mxu0 %v2607
    %2652 = vmatpush.msra.mxu0 %v2603
    %2653 = vmatpush.msra.mxu0 %v2599
    %2654 = vmatpush.msra.mxu0 %v2595
    %2655 = vmatpush.msra.mxu0 %v2591
    %2656 = vmatpush.msra.mxu0 %v2587
    %2657 = vmatpush.msra.mxu0 %v2583
    %2658 = vmatpush.msra.mxu0 %v2579
    %2659 = vmatmul.f32.gmra.mxu0 %v2347
    %v2660 = vpop.f32.mrf.mxu0
    %v2661 = vadd.f32 0.0, %v2660
    %2662 = vdwg.mxu0
    %2663 = vmatpush.msra.mxu0 %v2640
    %2664 = vmatpush.msra.mxu0 %v2636
    %2665 = vmatpush.msra.mxu0 %v2632
    %2666 = vmatpush.msra.mxu0 %v2628
    %2667 = vmatpush.msra.mxu0 %v2624
    %2668 = vmatpush.msra.mxu0 %v2620
    %2669 = vmatpush.msra.mxu0 %v2616
    %2670 = vmatpush.msra.mxu0 %v2612
    %2671 = vmatpush.msra.mxu0 %v2608
    %2672 = vmatpush.msra.mxu0 %v2604
    %2673 = vmatpush.msra.mxu0 %v2600
    %2674 = vmatpush.msra.mxu0 %v2596
    %2675 = vmatpush.msra.mxu0 %v2592
    %2676 = vmatpush.msra.mxu0 %v2588
    %2677 = vmatpush.msra.mxu0 %v2584
    %2678 = vmatpush.msra.mxu0 %v2580
    %2679 = vmatmul.f32.gmra.mxu0 %v2347
    %v2680 = vpop.f32.mrf.mxu0
    %v2681 = vadd.f32 0.0, %v2680
    %2682 = vdwg.mxu0
    %2683 = vmatpush.msra.mxu0 %v2641
    %2684 = vmatpush.msra.mxu0 %v2637
    %2685 = vmatpush.msra.mxu0 %v2633
    %2686 = vmatpush.msra.mxu0 %v2629
    %2687 = vmatpush.msra.mxu0 %v2625
    %2688 = vmatpush.msra.mxu0 %v2621
    %2689 = vmatpush.msra.mxu0 %v2617
    %2690 = vmatpush.msra.mxu0 %v2613
    %2691 = vmatpush.msra.mxu0 %v2609
    %2692 = vmatpush.msra.mxu0 %v2605
    %2693 = vmatpush.msra.mxu0 %v2601
    %2694 = vmatpush.msra.mxu0 %v2597
    %2695 = vmatpush.msra.mxu0 %v2593
    %2696 = vmatpush.msra.mxu0 %v2589
    %2697 = vmatpush.msra.mxu0 %v2585
    %2698 = vmatpush.msra.mxu0 %v2581
    %2699 = vmatmul.f32.gmra.mxu0 %v2347
    %v2700 = vpop.f32.mrf.mxu0
    %v2701 = vadd.f32 0.0, %v2700
    %2702 = vdwg.mxu0
    %2703 = vmatpush.msra.mxu0 %v2642
    %2704 = vmatpush.msra.mxu0 %v2638
    %2705 = vmatpush.msra.mxu0 %v2634
    %2706 = vmatpush.msra.mxu0 %v2630
    %2707 = vmatpush.msra.mxu0 %v2626
    %2708 = vmatpush.msra.mxu0 %v2622
    %2709 = vmatpush.msra.mxu0 %v2618
    %2710 = vmatpush.msra.mxu0 %v2614
    %2711 = vmatpush.msra.mxu0 %v2610
    %2712 = vmatpush.msra.mxu0 %v2606
    %2713 = vmatpush.msra.mxu0 %v2602
    %2714 = vmatpush.msra.mxu0 %v2598
    %2715 = vmatpush.msra.mxu0 %v2594
    %2716 = vmatpush.msra.mxu0 %v2590
    %2717 = vmatpush.msra.mxu0 %v2586
    %2718 = vmatpush.msra.mxu0 %v2582
    %2719 = vmatmul.f32.gmra.mxu0 %v2347
    %v2720 = vpop.f32.mrf.mxu0
    %v2721 = vadd.f32 0.0, %v2720
    %2722 = vdwg.mxu0
    %v2723 = vadd.f32 %v2575, %v2661
    %v2724 = vadd.f32 %v2576, %v2681
    %v2725 = vadd.f32 %v2577, %v2701
    %v2726 = vadd.f32 %v2578, %v2721
    %v2727 = vxor.u32 %v2723, 2147483648
    %v2728 = vmul.f32 %v2727, 1.442695
    %v2729 = vpow.pop %v2728
    %v2730 = vadd.f32 %v2729, 1.0
    %v2731 = vrcp.pop %v2730
    %v2732 = vmul.f32 %v2730, %v2731
    %v2733 = vsub.f32 1.0, %v2732
    %v2734 = vmul.f32 %v2731, %v2733
    %v2735 = vadd.f32 %v2731, %v2734
    %vm2736 = vweird.f32 %v2730
    %vm2737 = vweird.f32 %v2731
    %vm2738 = vmor %vm2736, %vm2737
    %v2739 = vsel %vm2738, %v2731, %v2735
    %v2740 = vand.u32 2147483647, %v2730
    %vm2741 = vcmp.eq.f32.partialorder %v2740, 8.507059e+37
    %v2742 = vand.u32 %v2730, 2147483648
    %v2743 = vor.u32 1.1754944e-38, %v2742
    %v2744 = vsel %vm2741, %v2743, %v2739
    %v2745 = vmul.f32 1.0, %v2744
    %v2746 = vxor.u32 %v2724, 2147483648
    %v2747 = vmul.f32 %v2746, 1.442695
    %v2748 = vpow.pop %v2747
    %v2749 = vadd.f32 %v2748, 1.0
    %v2750 = vrcp.pop %v2749
    %v2751 = vmul.f32 %v2749, %v2750
    %v2752 = vsub.f32 1.0, %v2751
    %v2753 = vmul.f32 %v2750, %v2752
    %v2754 = vadd.f32 %v2750, %v2753
    %vm2755 = vweird.f32 %v2749
    %vm2756 = vweird.f32 %v2750
    %vm2757 = vmor %vm2755, %vm2756
    %v2758 = vsel %vm2757, %v2750, %v2754
    %v2759 = vand.u32 2147483647, %v2749
    %vm2760 = vcmp.eq.f32.partialorder %v2759, 8.507059e+37
    %v2761 = vand.u32 %v2749, 2147483648
    %v2762 = vor.u32 1.1754944e-38, %v2761
    %v2763 = vsel %vm2760, %v2762, %v2758
    %v2764 = vmul.f32 1.0, %v2763
    %v2765 = vtanh.pop %v2725
    %v2766 = vxor.u32 %v2726, 2147483648
    %v2767 = vmul.f32 %v2766, 1.442695
    %v2768 = vpow.pop %v2767
    %v2769 = vadd.f32 %v2768, 1.0
    %v2770 = vrcp.pop %v2769
    %v2771 = vmul.f32 %v2769, %v2770
    %v2772 = vsub.f32 1.0, %v2771
    %v2773 = vmul.f32 %v2770, %v2772
    %v2774 = vadd.f32 %v2770, %v2773
    %vm2775 = vweird.f32 %v2769
    %vm2776 = vweird.f32 %v2770
    %vm2777 = vmor %vm2775, %vm2776
    %v2778 = vsel %vm2777, %v2770, %v2774
    %v2779 = vand.u32 2147483647, %v2769
    %vm2780 = vcmp.eq.f32.partialorder %v2779, 8.507059e+37
    %v2781 = vand.u32 %v2769, 2147483648
    %v2782 = vor.u32 1.1754944e-38, %v2781
    %v2783 = vsel %vm2780, %v2782, %v2778
    %v2784 = vmul.f32 1.0, %v2783
    %v2786 = vrot.slane %v2213, 6
    %v2788 = vmul.f32 %v2764, %v2786
    %v2789 = vmul.f32 %v2745, %v2765
    %v2790 = vadd.f32 %v2788, %v2789
    %v2791 = vtanh.pop %v2790
    %v2792 = vmul.f32 %v2784, %v2791
    %v2793 = vld [vmem:[#allocation9] sm:$0xff]
    %v2794 = vld [vmem:[#allocation9 + $0x8] sm:$0xff]
    %v2795 = vld [vmem:[#allocation9 + $0x10] sm:$0xff]
    %v2796 = vld [vmem:[#allocation9 + $0x18] sm:$0xff]
    %v2797 = vld [vmem:[#allocation9 + $0x20] sm:$0xff]
    %v2798 = vld [vmem:[#allocation9 + $0x28] sm:$0xff]
    %v2799 = vld [vmem:[#allocation9 + $0x30] sm:$0xff]
    %v2800 = vld [vmem:[#allocation9 + $0x38] sm:$0xff]
    %v2801 = vld [vmem:[#allocation9 + $0x40] sm:$0xff]
    %v2802 = vld [vmem:[#allocation9 + $0x48] sm:$0xff]
    %v2803 = vld [vmem:[#allocation9 + $0x50] sm:$0xff]
    %v2804 = vld [vmem:[#allocation9 + $0x58] sm:$0xff]
    %v2805 = vld [vmem:[#allocation9 + $0x60] sm:$0xff]
    %v2806 = vld [vmem:[#allocation9 + $0x68] sm:$0xff]
    %v2807 = vld [vmem:[#allocation9 + $0x70] sm:$0xff]
    %v2808 = vld [vmem:[#allocation9 + $0x78] sm:$0xff]
    %v2809 = vld [vmem:[#allocation9 + $0x80] sm:$0xff]
    %v2810 = vld [vmem:[#allocation9 + $0x88] sm:$0xff]
    %v2811 = vld [vmem:[#allocation9 + $0x90] sm:$0xff]
    %v2812 = vld [vmem:[#allocation9 + $0x98] sm:$0xff]
    %v2813 = vld [vmem:[#allocation9 + $0xa0] sm:$0xff]
    %v2814 = vld [vmem:[#allocation9 + $0xa8] sm:$0xff]
    %v2815 = vld [vmem:[#allocation9 + $0xb0] sm:$0xff]
    %v2816 = vld [vmem:[#allocation9 + $0xb8] sm:$0xff]
    %v2817 = vld [vmem:[#allocation9 + $0xc0] sm:$0xff]
    %v2818 = vld [vmem:[#allocation9 + $0xc8] sm:$0xff]
    %v2819 = vld [vmem:[#allocation9 + $0xd0] sm:$0xff]
    %v2820 = vld [vmem:[#allocation9 + $0xd8] sm:$0xff]
    %v2821 = vld [vmem:[#allocation9 + $0xe0] sm:$0xff]
    %v2822 = vld [vmem:[#allocation9 + $0xe8] sm:$0xff]
    %v2823 = vld [vmem:[#allocation9 + $0xf0] sm:$0xff]
    %v2824 = vld [vmem:[#allocation9 + $0xf8] sm:$0xff]
    %v2825 = vld [vmem:[#allocation9 + $0x100] sm:$0xff]
    %v2826 = vld [vmem:[#allocation9 + $0x108] sm:$0xff]
    %v2827 = vld [vmem:[#allocation9 + $0x110] sm:$0xff]
    %v2828 = vld [vmem:[#allocation9 + $0x118] sm:$0xff]
    %v2829 = vld [vmem:[#allocation9 + $0x120] sm:$0xff]
    %v2830 = vld [vmem:[#allocation9 + $0x128] sm:$0xff]
    %v2831 = vld [vmem:[#allocation9 + $0x130] sm:$0xff]
    %v2832 = vld [vmem:[#allocation9 + $0x138] sm:$0xff]
    %v2833 = vld [vmem:[#allocation9 + $0x140] sm:$0xff]
    %v2834 = vld [vmem:[#allocation9 + $0x148] sm:$0xff]
    %v2835 = vld [vmem:[#allocation9 + $0x150] sm:$0xff]
    %v2836 = vld [vmem:[#allocation9 + $0x158] sm:$0xff]
    %v2837 = vld [vmem:[#allocation9 + $0x160] sm:$0xff]
    %v2838 = vld [vmem:[#allocation9 + $0x168] sm:$0xff]
    %v2839 = vld [vmem:[#allocation9 + $0x170] sm:$0xff]
    %v2840 = vld [vmem:[#allocation9 + $0x178] sm:$0xff]
    %v2841 = vld [vmem:[#allocation9 + $0x180] sm:$0xff]
    %v2842 = vld [vmem:[#allocation9 + $0x188] sm:$0xff]
    %v2843 = vld [vmem:[#allocation9 + $0x190] sm:$0xff]
    %v2844 = vld [vmem:[#allocation9 + $0x198] sm:$0xff]
    %v2845 = vld [vmem:[#allocation9 + $0x1a0] sm:$0xff]
    %v2846 = vld [vmem:[#allocation9 + $0x1a8] sm:$0xff]
    %v2847 = vld [vmem:[#allocation9 + $0x1b0] sm:$0xff]
    %v2848 = vld [vmem:[#allocation9 + $0x1b8] sm:$0xff]
    %v2849 = vld [vmem:[#allocation9 + $0x1c0] sm:$0xff]
    %v2850 = vld [vmem:[#allocation9 + $0x1c8] sm:$0xff]
    %v2851 = vld [vmem:[#allocation9 + $0x1d0] sm:$0xff]
    %v2852 = vld [vmem:[#allocation9 + $0x1d8] sm:$0xff]
    %v2853 = vld [vmem:[#allocation9 + $0x1e0] sm:$0xff]
    %v2854 = vld [vmem:[#allocation9 + $0x1e8] sm:$0xff]
    %v2855 = vld [vmem:[#allocation9 + $0x1f0] sm:$0xff]
    %v2856 = vld [vmem:[#allocation9 + $0x1f8] sm:$0xff]
    %v2857 = vld [vmem:[#allocation9 + $0x200] sm:$0xff]
    %v2858 = vld [vmem:[#allocation9 + $0x208] sm:$0xff]
    %v2859 = vld [vmem:[#allocation9 + $0x210] sm:$0xff]
    %v2860 = vld [vmem:[#allocation9 + $0x218] sm:$0xff]
    %v2861 = vld [vmem:[#allocation9 + $0x220] sm:$0xff]
    %v2862 = vld [vmem:[#allocation9 + $0x228] sm:$0xff]
    %v2863 = vld [vmem:[#allocation9 + $0x230] sm:$0xff]
    %v2864 = vld [vmem:[#allocation9 + $0x238] sm:$0xff]
    %v2865 = vld [vmem:[#allocation9 + $0x240] sm:$0xff]
    %v2866 = vld [vmem:[#allocation9 + $0x248] sm:$0xff]
    %v2867 = vld [vmem:[#allocation9 + $0x250] sm:$0xff]
    %v2868 = vld [vmem:[#allocation9 + $0x258] sm:$0xff]
    %v2869 = vld [vmem:[#allocation9 + $0x260] sm:$0xff]
    %v2870 = vld [vmem:[#allocation9 + $0x268] sm:$0xff]
    %v2871 = vld [vmem:[#allocation9 + $0x270] sm:$0xff]
    %v2872 = vld [vmem:[#allocation9 + $0x278] sm:$0xff]
    %v2873 = vld [vmem:[#allocation9 + $0x280] sm:$0xff]
    %v2874 = vld [vmem:[#allocation9 + $0x288] sm:$0xff]
    %v2875 = vld [vmem:[#allocation9 + $0x290] sm:$0xff]
    %v2876 = vld [vmem:[#allocation9 + $0x298] sm:$0xff]
    %v2877 = vld [vmem:[#allocation9 + $0x2a0] sm:$0xff]
    %v2878 = vld [vmem:[#allocation9 + $0x2a8] sm:$0xff]
    %v2879 = vld [vmem:[#allocation9 + $0x2b0] sm:$0xff]
    %v2880 = vld [vmem:[#allocation9 + $0x2b8] sm:$0xff]
    %v2881 = vld [vmem:[#allocation9 + $0x2c0] sm:$0xff]
    %v2882 = vld [vmem:[#allocation9 + $0x2c8] sm:$0xff]
    %v2883 = vld [vmem:[#allocation9 + $0x2d0] sm:$0xff]
    %v2884 = vld [vmem:[#allocation9 + $0x2d8] sm:$0xff]
    %v2885 = vld [vmem:[#allocation9 + $0x2e0] sm:$0xff]
    %v2886 = vld [vmem:[#allocation9 + $0x2e8] sm:$0xff]
    %v2887 = vld [vmem:[#allocation9 + $0x2f0] sm:$0xff]
    %v2888 = vld [vmem:[#allocation9 + $0x2f8] sm:$0xff]
    %v2889 = vld [vmem:[#allocation9 + $0x300] sm:$0xff]
    %v2890 = vld [vmem:[#allocation9 + $0x308] sm:$0xff]
    %v2891 = vld [vmem:[#allocation9 + $0x310] sm:$0xff]
    %v2892 = vld [vmem:[#allocation9 + $0x318] sm:$0xff]
    %v2893 = vld [vmem:[#allocation9 + $0x320] sm:$0xff]
    %v2894 = vld [vmem:[#allocation9 + $0x328] sm:$0xff]
    %v2895 = vld [vmem:[#allocation9 + $0x330] sm:$0xff]
    %v2896 = vld [vmem:[#allocation9 + $0x338] sm:$0xff]
    %v2897 = vld [vmem:[#allocation9 + $0x340] sm:$0xff]
    %v2898 = vld [vmem:[#allocation9 + $0x348] sm:$0xff]
    %v2899 = vld [vmem:[#allocation9 + $0x350] sm:$0xff]
    %v2900 = vld [vmem:[#allocation9 + $0x358] sm:$0xff]
    %v2901 = vld [vmem:[#allocation9 + $0x360] sm:$0xff]
    %v2902 = vld [vmem:[#allocation9 + $0x368] sm:$0xff]
    %v2903 = vld [vmem:[#allocation9 + $0x370] sm:$0xff]
    %v2904 = vld [vmem:[#allocation9 + $0x378] sm:$0xff]
    %v2905 = vld [vmem:[#allocation9 + $0x380] sm:$0xff]
    %v2906 = vld [vmem:[#allocation9 + $0x388] sm:$0xff]
    %v2907 = vld [vmem:[#allocation9 + $0x390] sm:$0xff]
    %v2908 = vld [vmem:[#allocation9 + $0x398] sm:$0xff]
    %v2909 = vld [vmem:[#allocation9 + $0x3a0] sm:$0xff]
    %v2910 = vld [vmem:[#allocation9 + $0x3a8] sm:$0xff]
    %v2911 = vld [vmem:[#allocation9 + $0x3b0] sm:$0xff]
    %v2912 = vld [vmem:[#allocation9 + $0x3b8] sm:$0xff]
    %v2913 = vld [vmem:[#allocation9 + $0x3c0] sm:$0xff]
    %v2914 = vld [vmem:[#allocation9 + $0x3c8] sm:$0xff]
    %v2915 = vld [vmem:[#allocation9 + $0x3d0] sm:$0xff]
    %v2916 = vld [vmem:[#allocation9 + $0x3d8] sm:$0xff]
    %v2917 = vld [vmem:[#allocation9 + $0x3e0] sm:$0xff]
    %v2918 = vld [vmem:[#allocation9 + $0x3e8] sm:$0xff]
    %v2919 = vld [vmem:[#allocation9 + $0x3f0] sm:$0xff]
    %v2920 = vld [vmem:[#allocation9 + $0x3f8] sm:$0xff]
    %2921 = vmatpush.msra.mxu0 %v2853
    %2922 = vmatpush.msra.mxu0 %v2849
    %2923 = vmatpush.msra.mxu0 %v2845
    %2924 = vmatpush.msra.mxu0 %v2841
    %2925 = vmatpush.msra.mxu0 %v2837
    %2926 = vmatpush.msra.mxu0 %v2833
    %2927 = vmatpush.msra.mxu0 %v2829
    %2928 = vmatpush.msra.mxu0 %v2825
    %2929 = vmatpush.msra.mxu0 %v2821
    %2930 = vmatpush.msra.mxu0 %v2817
    %2931 = vmatpush.msra.mxu0 %v2813
    %2932 = vmatpush.msra.mxu0 %v2809
    %2933 = vmatpush.msra.mxu0 %v2805
    %2934 = vmatpush.msra.mxu0 %v2801
    %2935 = vmatpush.msra.mxu0 %v2797
    %2936 = vmatpush.msra.mxu0 %v2793
    %2937 = vmatmul.f32.gmra.mxu0 %v2792
    %v2938 = vpop.f32.mrf.mxu0
    %v2939 = vadd.f32 %v233, %v2938
    %2940 = vdwg.mxu0
    %2941 = vmatpush.msra.mxu0 %v2917
    %2942 = vmatpush.msra.mxu0 %v2913
    %2943 = vmatpush.msra.mxu0 %v2909
    %2944 = vmatpush.msra.mxu0 %v2905
    %2945 = vmatpush.msra.mxu0 %v2901
    %2946 = vmatpush.msra.mxu0 %v2897
    %2947 = vmatpush.msra.mxu0 %v2893
    %2948 = vmatpush.msra.mxu0 %v2889
    %2949 = vmatpush.msra.mxu0 %v2885
    %2950 = vmatpush.msra.mxu0 %v2881
    %2951 = vmatpush.msra.mxu0 %v2877
    %2952 = vmatpush.msra.mxu0 %v2873
    %2953 = vmatpush.msra.mxu0 %v2869
    %2954 = vmatpush.msra.mxu0 %v2865
    %2955 = vmatpush.msra.mxu0 %v2861
    %2956 = vmatpush.msra.mxu0 %v2857
    %2957 = vmatmul.f32.gmra.mxu0 %v2573
    %v2958 = vpop.f32.mrf.mxu0
    %v2959 = vadd.f32 %v2939, %v2958
    %2960 = vdwg.mxu0
    %2961 = vmatpush.msra.mxu0 %v2854
    %2962 = vmatpush.msra.mxu0 %v2850
    %2963 = vmatpush.msra.mxu0 %v2846
    %2964 = vmatpush.msra.mxu0 %v2842
    %2965 = vmatpush.msra.mxu0 %v2838
    %2966 = vmatpush.msra.mxu0 %v2834
    %2967 = vmatpush.msra.mxu0 %v2830
    %2968 = vmatpush.msra.mxu0 %v2826
    %2969 = vmatpush.msra.mxu0 %v2822
    %2970 = vmatpush.msra.mxu0 %v2818
    %2971 = vmatpush.msra.mxu0 %v2814
    %2972 = vmatpush.msra.mxu0 %v2810
    %2973 = vmatpush.msra.mxu0 %v2806
    %2974 = vmatpush.msra.mxu0 %v2802
    %2975 = vmatpush.msra.mxu0 %v2798
    %2976 = vmatpush.msra.mxu0 %v2794
    %2977 = vmatmul.f32.gmra.mxu0 %v2792
    %v2978 = vpop.f32.mrf.mxu0
    %v2979 = vadd.f32 %v234, %v2978
    %2980 = vdwg.mxu0
    %2981 = vmatpush.msra.mxu0 %v2918
    %2982 = vmatpush.msra.mxu0 %v2914
    %2983 = vmatpush.msra.mxu0 %v2910
    %2984 = vmatpush.msra.mxu0 %v2906
    %2985 = vmatpush.msra.mxu0 %v2902
    %2986 = vmatpush.msra.mxu0 %v2898
    %2987 = vmatpush.msra.mxu0 %v2894
    %2988 = vmatpush.msra.mxu0 %v2890
    %2989 = vmatpush.msra.mxu0 %v2886
    %2990 = vmatpush.msra.mxu0 %v2882
    %2991 = vmatpush.msra.mxu0 %v2878
    %2992 = vmatpush.msra.mxu0 %v2874
    %2993 = vmatpush.msra.mxu0 %v2870
    %2994 = vmatpush.msra.mxu0 %v2866
    %2995 = vmatpush.msra.mxu0 %v2862
    %2996 = vmatpush.msra.mxu0 %v2858
    %2997 = vmatmul.f32.gmra.mxu0 %v2573
    %v2998 = vpop.f32.mrf.mxu0
    %v2999 = vadd.f32 %v2979, %v2998
    %3000 = vdwg.mxu0
    %3001 = vmatpush.msra.mxu0 %v2855
    %3002 = vmatpush.msra.mxu0 %v2851
    %3003 = vmatpush.msra.mxu0 %v2847
    %3004 = vmatpush.msra.mxu0 %v2843
    %3005 = vmatpush.msra.mxu0 %v2839
    %3006 = vmatpush.msra.mxu0 %v2835
    %3007 = vmatpush.msra.mxu0 %v2831
    %3008 = vmatpush.msra.mxu0 %v2827
    %3009 = vmatpush.msra.mxu0 %v2823
    %3010 = vmatpush.msra.mxu0 %v2819
    %3011 = vmatpush.msra.mxu0 %v2815
    %3012 = vmatpush.msra.mxu0 %v2811
    %3013 = vmatpush.msra.mxu0 %v2807
    %3014 = vmatpush.msra.mxu0 %v2803
    %3015 = vmatpush.msra.mxu0 %v2799
    %3016 = vmatpush.msra.mxu0 %v2795
    %3017 = vmatmul.f32.gmra.mxu0 %v2792
    %v3018 = vpop.f32.mrf.mxu0
    %v3019 = vadd.f32 %v235, %v3018
    %3020 = vdwg.mxu0
    %3021 = vmatpush.msra.mxu0 %v2919
    %3022 = vmatpush.msra.mxu0 %v2915
    %3023 = vmatpush.msra.mxu0 %v2911
    %3024 = vmatpush.msra.mxu0 %v2907
    %3025 = vmatpush.msra.mxu0 %v2903
    %3026 = vmatpush.msra.mxu0 %v2899
    %3027 = vmatpush.msra.mxu0 %v2895
    %3028 = vmatpush.msra.mxu0 %v2891
    %3029 = vmatpush.msra.mxu0 %v2887
    %3030 = vmatpush.msra.mxu0 %v2883
    %3031 = vmatpush.msra.mxu0 %v2879
    %3032 = vmatpush.msra.mxu0 %v2875
    %3033 = vmatpush.msra.mxu0 %v2871
    %3034 = vmatpush.msra.mxu0 %v2867
    %3035 = vmatpush.msra.mxu0 %v2863
    %3036 = vmatpush.msra.mxu0 %v2859
    %3037 = vmatmul.f32.gmra.mxu0 %v2573
    %v3038 = vpop.f32.mrf.mxu0
    %v3039 = vadd.f32 %v3019, %v3038
    %3040 = vdwg.mxu0
    %3041 = vmatpush.msra.mxu0 %v2856
    %3042 = vmatpush.msra.mxu0 %v2852
    %3043 = vmatpush.msra.mxu0 %v2848
    %3044 = vmatpush.msra.mxu0 %v2844
    %3045 = vmatpush.msra.mxu0 %v2840
    %3046 = vmatpush.msra.mxu0 %v2836
    %3047 = vmatpush.msra.mxu0 %v2832
    %3048 = vmatpush.msra.mxu0 %v2828
    %3049 = vmatpush.msra.mxu0 %v2824
    %3050 = vmatpush.msra.mxu0 %v2820
    %3051 = vmatpush.msra.mxu0 %v2816
    %3052 = vmatpush.msra.mxu0 %v2812
    %3053 = vmatpush.msra.mxu0 %v2808
    %3054 = vmatpush.msra.mxu0 %v2804
    %3055 = vmatpush.msra.mxu0 %v2800
    %3056 = vmatpush.msra.mxu0 %v2796
    %3057 = vmatmul.f32.gmra.mxu0 %v2792
    %v3058 = vpop.f32.mrf.mxu0
    %v3059 = vadd.f32 %v236, %v3058
    %3060 = vdwg.mxu0
    %3061 = vmatpush.msra.mxu0 %v2920
    %3062 = vmatpush.msra.mxu0 %v2916
    %3063 = vmatpush.msra.mxu0 %v2912
    %3064 = vmatpush.msra.mxu0 %v2908
    %3065 = vmatpush.msra.mxu0 %v2904
    %3066 = vmatpush.msra.mxu0 %v2900
    %3067 = vmatpush.msra.mxu0 %v2896
    %3068 = vmatpush.msra.mxu0 %v2892
    %3069 = vmatpush.msra.mxu0 %v2888
    %3070 = vmatpush.msra.mxu0 %v2884
    %3071 = vmatpush.msra.mxu0 %v2880
    %3072 = vmatpush.msra.mxu0 %v2876
    %3073 = vmatpush.msra.mxu0 %v2872
    %3074 = vmatpush.msra.mxu0 %v2868
    %3075 = vmatpush.msra.mxu0 %v2864
    %3076 = vmatpush.msra.mxu0 %v2860
    %3077 = vmatmul.f32.gmra.mxu0 %v2573
    %v3078 = vpop.f32.mrf.mxu0
    %v3079 = vadd.f32 %v3059, %v3078
    %3080 = vdwg.mxu0
    %v3081 = vxor.u32 %v2959, 2147483648
    %v3082 = vmul.f32 %v3081, 1.442695
    %v3083 = vpow.pop %v3082
    %v3084 = vadd.f32 %v3083, 1.0
    %v3085 = vrcp.pop %v3084
    %v3086 = vmul.f32 %v3084, %v3085
    %v3087 = vsub.f32 1.0, %v3086
    %v3088 = vmul.f32 %v3085, %v3087
    %v3089 = vadd.f32 %v3085, %v3088
    %vm3090 = vweird.f32 %v3084
    %vm3091 = vweird.f32 %v3085
    %vm3092 = vmor %vm3090, %vm3091
    %v3093 = vsel %vm3092, %v3085, %v3089
    %v3094 = vand.u32 2147483647, %v3084
    %vm3095 = vcmp.eq.f32.partialorder %v3094, 8.507059e+37
    %v3096 = vand.u32 %v3084, 2147483648
    %v3097 = vor.u32 1.1754944e-38, %v3096
    %v3098 = vsel %vm3095, %v3097, %v3093
    %v3099 = vmul.f32 1.0, %v3098
    %v3100 = vxor.u32 %v2999, 2147483648
    %v3101 = vmul.f32 %v3100, 1.442695
    %v3102 = vpow.pop %v3101
    %v3103 = vadd.f32 %v3102, 1.0
    %v3104 = vrcp.pop %v3103
    %v3105 = vmul.f32 %v3103, %v3104
    %v3106 = vsub.f32 1.0, %v3105
    %v3107 = vmul.f32 %v3104, %v3106
    %v3108 = vadd.f32 %v3104, %v3107
    %vm3109 = vweird.f32 %v3103
    %vm3110 = vweird.f32 %v3104
    %vm3111 = vmor %vm3109, %vm3110
    %v3112 = vsel %vm3111, %v3104, %v3108
    %v3113 = vand.u32 2147483647, %v3103
    %vm3114 = vcmp.eq.f32.partialorder %v3113, 8.507059e+37
    %v3115 = vand.u32 %v3103, 2147483648
    %v3116 = vor.u32 1.1754944e-38, %v3115
    %v3117 = vsel %vm3114, %v3116, %v3112
    %v3118 = vmul.f32 1.0, %v3117
    %v3119 = vtanh.pop %v3039
    %v3120 = vxor.u32 %v3079, 2147483648
    %v3121 = vmul.f32 %v3120, 1.442695
    %v3122 = vpow.pop %v3121
    %v3123 = vadd.f32 %v3122, 1.0
    %v3124 = vrcp.pop %v3123
    %v3125 = vmul.f32 %v3123, %v3124
    %v3126 = vsub.f32 1.0, %v3125
    %v3127 = vmul.f32 %v3124, %v3126
    %v3128 = vadd.f32 %v3124, %v3127
    %vm3129 = vweird.f32 %v3123
    %vm3130 = vweird.f32 %v3124
    %vm3131 = vmor %vm3129, %vm3130
    %v3132 = vsel %vm3131, %v3124, %v3128
    %v3133 = vand.u32 2147483647, %v3123
    %vm3134 = vcmp.eq.f32.partialorder %v3133, 8.507059e+37
    %v3135 = vand.u32 %v3123, 2147483648
    %v3136 = vor.u32 1.1754944e-38, %v3135
    %v3137 = vsel %vm3134, %v3136, %v3132
    %v3138 = vmul.f32 1.0, %v3137
    %v3139 = vmul.f32 %v3118, %v2571
    %v3140 = vmul.f32 %v3099, %v3119
    %v3141 = vadd.f32 %v3139, %v3140
    %v3142 = vtanh.pop %v3141
    %v3143 = vmul.f32 %v3138, %v3142
    %3144 = vst [vmem:[#allocation3 + $0x8] sm:$0x3] %v3143
    %v3145 = vld [vmem:[#allocation2 + $0x20] sm:$0xc]
    %v3146 = vld [vmem:[#allocation2 + $0x28] sm:$0xc]
    %v3147 = vld [vmem:[#allocation2 + $0x30] sm:$0xc]
    %v3148 = vld [vmem:[#allocation2 + $0x38] sm:$0xc]
    %v3149 = vld [vmem:[#allocation7] sm:$0xff]
    %v3150 = vld [vmem:[#allocation7 + $0x8] sm:$0xff]
    %v3151 = vld [vmem:[#allocation7 + $0x10] sm:$0xff]
    %v3152 = vld [vmem:[#allocation7 + $0x18] sm:$0xff]
    %v3153 = vld [vmem:[#allocation7 + $0x20] sm:$0xff]
    %v3154 = vld [vmem:[#allocation7 + $0x28] sm:$0xff]
    %v3155 = vld [vmem:[#allocation7 + $0x30] sm:$0xff]
    %v3156 = vld [vmem:[#allocation7 + $0x38] sm:$0xff]
    %v3157 = vld [vmem:[#allocation7 + $0x40] sm:$0xff]
    %v3158 = vld [vmem:[#allocation7 + $0x48] sm:$0xff]
    %v3159 = vld [vmem:[#allocation7 + $0x50] sm:$0xff]
    %v3160 = vld [vmem:[#allocation7 + $0x58] sm:$0xff]
    %v3161 = vld [vmem:[#allocation7 + $0x60] sm:$0xff]
    %v3162 = vld [vmem:[#allocation7 + $0x68] sm:$0xff]
    %v3163 = vld [vmem:[#allocation7 + $0x70] sm:$0xff]
    %v3164 = vld [vmem:[#allocation7 + $0x78] sm:$0xff]
    %v3165 = vld [vmem:[#allocation7 + $0x80] sm:$0xff]
    %v3166 = vld [vmem:[#allocation7 + $0x88] sm:$0xff]
    %v3167 = vld [vmem:[#allocation7 + $0x90] sm:$0xff]
    %v3168 = vld [vmem:[#allocation7 + $0x98] sm:$0xff]
    %v3169 = vld [vmem:[#allocation7 + $0xa0] sm:$0xff]
    %v3170 = vld [vmem:[#allocation7 + $0xa8] sm:$0xff]
    %v3171 = vld [vmem:[#allocation7 + $0xb0] sm:$0xff]
    %v3172 = vld [vmem:[#allocation7 + $0xb8] sm:$0xff]
    %v3173 = vld [vmem:[#allocation7 + $0xc0] sm:$0xff]
    %v3174 = vld [vmem:[#allocation7 + $0xc8] sm:$0xff]
    %v3175 = vld [vmem:[#allocation7 + $0xd0] sm:$0xff]
    %v3176 = vld [vmem:[#allocation7 + $0xd8] sm:$0xff]
    %v3177 = vld [vmem:[#allocation7 + $0xe0] sm:$0xff]
    %v3178 = vld [vmem:[#allocation7 + $0xe8] sm:$0xff]
    %v3179 = vld [vmem:[#allocation7 + $0xf0] sm:$0xff]
    %v3180 = vld [vmem:[#allocation7 + $0xf8] sm:$0xff]
    %v3181 = vld [vmem:[#allocation7 + $0x100] sm:$0xff]
    %v3182 = vld [vmem:[#allocation7 + $0x108] sm:$0xff]
    %v3183 = vld [vmem:[#allocation7 + $0x110] sm:$0xff]
    %v3184 = vld [vmem:[#allocation7 + $0x118] sm:$0xff]
    %v3185 = vld [vmem:[#allocation7 + $0x120] sm:$0xff]
    %v3186 = vld [vmem:[#allocation7 + $0x128] sm:$0xff]
    %v3187 = vld [vmem:[#allocation7 + $0x130] sm:$0xff]
    %v3188 = vld [vmem:[#allocation7 + $0x138] sm:$0xff]
    %v3189 = vld [vmem:[#allocation7 + $0x140] sm:$0xff]
    %v3190 = vld [vmem:[#allocation7 + $0x148] sm:$0xff]
    %v3191 = vld [vmem:[#allocation7 + $0x150] sm:$0xff]
    %v3192 = vld [vmem:[#allocation7 + $0x158] sm:$0xff]
    %v3193 = vld [vmem:[#allocation7 + $0x160] sm:$0xff]
    %v3194 = vld [vmem:[#allocation7 + $0x168] sm:$0xff]
    %v3195 = vld [vmem:[#allocation7 + $0x170] sm:$0xff]
    %v3196 = vld [vmem:[#allocation7 + $0x178] sm:$0xff]
    %v3197 = vld [vmem:[#allocation7 + $0x180] sm:$0xff]
    %v3198 = vld [vmem:[#allocation7 + $0x188] sm:$0xff]
    %v3199 = vld [vmem:[#allocation7 + $0x190] sm:$0xff]
    %v3200 = vld [vmem:[#allocation7 + $0x198] sm:$0xff]
    %v3201 = vld [vmem:[#allocation7 + $0x1a0] sm:$0xff]
    %v3202 = vld [vmem:[#allocation7 + $0x1a8] sm:$0xff]
    %v3203 = vld [vmem:[#allocation7 + $0x1b0] sm:$0xff]
    %v3204 = vld [vmem:[#allocation7 + $0x1b8] sm:$0xff]
    %v3205 = vld [vmem:[#allocation7 + $0x1c0] sm:$0xff]
    %v3206 = vld [vmem:[#allocation7 + $0x1c8] sm:$0xff]
    %v3207 = vld [vmem:[#allocation7 + $0x1d0] sm:$0xff]
    %v3208 = vld [vmem:[#allocation7 + $0x1d8] sm:$0xff]
    %v3209 = vld [vmem:[#allocation7 + $0x1e0] sm:$0xff]
    %v3210 = vld [vmem:[#allocation7 + $0x1e8] sm:$0xff]
    %v3211 = vld [vmem:[#allocation7 + $0x1f0] sm:$0xff]
    %v3212 = vld [vmem:[#allocation7 + $0x1f8] sm:$0xff]
    %3213 = vmatpush.msra.mxu0 %v3209
    %3214 = vmatpush.msra.mxu0 %v3205
    %3215 = vmatpush.msra.mxu0 %v3201
    %3216 = vmatpush.msra.mxu0 %v3197
    %3217 = vmatpush.msra.mxu0 %v3193
    %3218 = vmatpush.msra.mxu0 %v3189
    %3219 = vmatpush.msra.mxu0 %v3185
    %3220 = vmatpush.msra.mxu0 %v3181
    %3221 = vmatpush.msra.mxu0 %v3177
    %3222 = vmatpush.msra.mxu0 %v3173
    %3223 = vmatpush.msra.mxu0 %v3169
    %3224 = vmatpush.msra.mxu0 %v3165
    %3225 = vmatpush.msra.mxu0 %v3161
    %3226 = vmatpush.msra.mxu0 %v3157
    %3227 = vmatpush.msra.mxu0 %v3153
    %3228 = vmatpush.msra.mxu0 %v3149
    %3229 = vmatmul.f32.gmra.mxu0 %v2792
    %v3230 = vpop.f32.mrf.mxu0
    %v3231 = vadd.f32 0.0, %v3230
    %3232 = vdwg.mxu0
    %3233 = vmatpush.msra.mxu0 %v3210
    %3234 = vmatpush.msra.mxu0 %v3206
    %3235 = vmatpush.msra.mxu0 %v3202
    %3236 = vmatpush.msra.mxu0 %v3198
    %3237 = vmatpush.msra.mxu0 %v3194
    %3238 = vmatpush.msra.mxu0 %v3190
    %3239 = vmatpush.msra.mxu0 %v3186
    %3240 = vmatpush.msra.mxu0 %v3182
    %3241 = vmatpush.msra.mxu0 %v3178
    %3242 = vmatpush.msra.mxu0 %v3174
    %3243 = vmatpush.msra.mxu0 %v3170
    %3244 = vmatpush.msra.mxu0 %v3166
    %3245 = vmatpush.msra.mxu0 %v3162
    %3246 = vmatpush.msra.mxu0 %v3158
    %3247 = vmatpush.msra.mxu0 %v3154
    %3248 = vmatpush.msra.mxu0 %v3150
    %3249 = vmatmul.f32.gmra.mxu0 %v2792
    %v3250 = vpop.f32.mrf.mxu0
    %v3251 = vadd.f32 0.0, %v3250
    %3252 = vdwg.mxu0
    %3253 = vmatpush.msra.mxu0 %v3211
    %3254 = vmatpush.msra.mxu0 %v3207
    %3255 = vmatpush.msra.mxu0 %v3203
    %3256 = vmatpush.msra.mxu0 %v3199
    %3257 = vmatpush.msra.mxu0 %v3195
    %3258 = vmatpush.msra.mxu0 %v3191
    %3259 = vmatpush.msra.mxu0 %v3187
    %3260 = vmatpush.msra.mxu0 %v3183
    %3261 = vmatpush.msra.mxu0 %v3179
    %3262 = vmatpush.msra.mxu0 %v3175
    %3263 = vmatpush.msra.mxu0 %v3171
    %3264 = vmatpush.msra.mxu0 %v3167
    %3265 = vmatpush.msra.mxu0 %v3163
    %3266 = vmatpush.msra.mxu0 %v3159
    %3267 = vmatpush.msra.mxu0 %v3155
    %3268 = vmatpush.msra.mxu0 %v3151
    %3269 = vmatmul.f32.gmra.mxu0 %v2792
    %v3270 = vpop.f32.mrf.mxu0
    %v3271 = vadd.f32 0.0, %v3270
    %3272 = vdwg.mxu0
    %3273 = vmatpush.msra.mxu0 %v3212
    %3274 = vmatpush.msra.mxu0 %v3208
    %3275 = vmatpush.msra.mxu0 %v3204
    %3276 = vmatpush.msra.mxu0 %v3200
    %3277 = vmatpush.msra.mxu0 %v3196
    %3278 = vmatpush.msra.mxu0 %v3192
    %3279 = vmatpush.msra.mxu0 %v3188
    %3280 = vmatpush.msra.mxu0 %v3184
    %3281 = vmatpush.msra.mxu0 %v3180
    %3282 = vmatpush.msra.mxu0 %v3176
    %3283 = vmatpush.msra.mxu0 %v3172
    %3284 = vmatpush.msra.mxu0 %v3168
    %3285 = vmatpush.msra.mxu0 %v3164
    %3286 = vmatpush.msra.mxu0 %v3160
    %3287 = vmatpush.msra.mxu0 %v3156
    %3288 = vmatpush.msra.mxu0 %v3152
    %3289 = vmatmul.f32.gmra.mxu0 %v2792
    %v3290 = vpop.f32.mrf.mxu0
    %v3291 = vadd.f32 0.0, %v3290
    %3292 = vdwg.mxu0
    %v3297 = vrot.slane %v3231, 6
    %v3298 = vrot.slane %v3251, 6
    %v3299 = vrot.slane %v3271, 6
    %v3300 = vrot.slane %v3291, 6
    %v3305 = vadd.f32 %v3145, %v3297
    %v3306 = vadd.f32 %v3146, %v3298
    %v3307 = vadd.f32 %v3147, %v3299
    %v3308 = vadd.f32 %v3148, %v3300
    %v3309 = vxor.u32 %v3305, 2147483648
    %v3310 = vmul.f32 %v3309, 1.442695
    %v3311 = vpow.pop %v3310
    %v3312 = vadd.f32 %v3311, 1.0
    %v3313 = vrcp.pop %v3312
    %v3314 = vmul.f32 %v3312, %v3313
    %v3315 = vsub.f32 1.0, %v3314
    %v3316 = vmul.f32 %v3313, %v3315
    %v3317 = vadd.f32 %v3313, %v3316
    %vm3318 = vweird.f32 %v3312
    %vm3319 = vweird.f32 %v3313
    %vm3320 = vmor %vm3318, %vm3319
    %v3321 = vsel %vm3320, %v3313, %v3317
    %v3322 = vand.u32 2147483647, %v3312
    %vm3323 = vcmp.eq.f32.partialorder %v3322, 8.507059e+37
    %v3324 = vand.u32 %v3312, 2147483648
    %v3325 = vor.u32 1.1754944e-38, %v3324
    %v3326 = vsel %vm3323, %v3325, %v3321
    %v3327 = vmul.f32 1.0, %v3326
    %v3328 = vxor.u32 %v3306, 2147483648
    %v3329 = vmul.f32 %v3328, 1.442695
    %v3330 = vpow.pop %v3329
    %v3331 = vadd.f32 %v3330, 1.0
    %v3332 = vrcp.pop %v3331
    %v3333 = vmul.f32 %v3331, %v3332
    %v3334 = vsub.f32 1.0, %v3333
    %v3335 = vmul.f32 %v3332, %v3334
    %v3336 = vadd.f32 %v3332, %v3335
    %vm3337 = vweird.f32 %v3331
    %vm3338 = vweird.f32 %v3332
    %vm3339 = vmor %vm3337, %vm3338
    %v3340 = vsel %vm3339, %v3332, %v3336
    %v3341 = vand.u32 2147483647, %v3331
    %vm3342 = vcmp.eq.f32.partialorder %v3341, 8.507059e+37
    %v3343 = vand.u32 %v3331, 2147483648
    %v3344 = vor.u32 1.1754944e-38, %v3343
    %v3345 = vsel %vm3342, %v3344, %v3340
    %v3346 = vmul.f32 1.0, %v3345
    %v3347 = vtanh.pop %v3307
    %v3348 = vxor.u32 %v3308, 2147483648
    %v3349 = vmul.f32 %v3348, 1.442695
    %v3350 = vpow.pop %v3349
    %v3351 = vadd.f32 %v3350, 1.0
    %v3352 = vrcp.pop %v3351
    %v3353 = vmul.f32 %v3351, %v3352
    %v3354 = vsub.f32 1.0, %v3353
    %v3355 = vmul.f32 %v3352, %v3354
    %v3356 = vadd.f32 %v3352, %v3355
    %vm3357 = vweird.f32 %v3351
    %vm3358 = vweird.f32 %v3352
    %vm3359 = vmor %vm3357, %vm3358
    %v3360 = vsel %vm3359, %v3352, %v3356
    %v3361 = vand.u32 2147483647, %v3351
    %vm3362 = vcmp.eq.f32.partialorder %v3361, 8.507059e+37
    %v3363 = vand.u32 %v3351, 2147483648
    %v3364 = vor.u32 1.1754944e-38, %v3363
    %v3365 = vsel %vm3362, %v3364, %v3360
    %v3366 = vmul.f32 1.0, %v3365
    %v3368 = vrot.slane %v2790, 6
    %v3370 = vmul.f32 %v3346, %v3368
    %v3371 = vmul.f32 %v3327, %v3347
    %v3372 = vadd.f32 %v3370, %v3371
    %v3373 = vtanh.pop %v3372
    %v3374 = vmul.f32 %v3366, %v3373
    %v3376 = vrot.slane %v3143, 6
    %v3377 = vld [vmem:[#allocation9] sm:$0xff]
    %v3378 = vld [vmem:[#allocation9 + $0x8] sm:$0xff]
    %v3379 = vld [vmem:[#allocation9 + $0x10] sm:$0xff]
    %v3380 = vld [vmem:[#allocation9 + $0x18] sm:$0xff]
    %v3381 = vld [vmem:[#allocation9 + $0x20] sm:$0xff]
    %v3382 = vld [vmem:[#allocation9 + $0x28] sm:$0xff]
    %v3383 = vld [vmem:[#allocation9 + $0x30] sm:$0xff]
    %v3384 = vld [vmem:[#allocation9 + $0x38] sm:$0xff]
    %v3385 = vld [vmem:[#allocation9 + $0x40] sm:$0xff]
    %v3386 = vld [vmem:[#allocation9 + $0x48] sm:$0xff]
    %v3387 = vld [vmem:[#allocation9 + $0x50] sm:$0xff]
    %v3388 = vld [vmem:[#allocation9 + $0x58] sm:$0xff]
    %v3389 = vld [vmem:[#allocation9 + $0x60] sm:$0xff]
    %v3390 = vld [vmem:[#allocation9 + $0x68] sm:$0xff]
    %v3391 = vld [vmem:[#allocation9 + $0x70] sm:$0xff]
    %v3392 = vld [vmem:[#allocation9 + $0x78] sm:$0xff]
    %v3393 = vld [vmem:[#allocation9 + $0x80] sm:$0xff]
    %v3394 = vld [vmem:[#allocation9 + $0x88] sm:$0xff]
    %v3395 = vld [vmem:[#allocation9 + $0x90] sm:$0xff]
    %v3396 = vld [vmem:[#allocation9 + $0x98] sm:$0xff]
    %v3397 = vld [vmem:[#allocation9 + $0xa0] sm:$0xff]
    %v3398 = vld [vmem:[#allocation9 + $0xa8] sm:$0xff]
    %v3399 = vld [vmem:[#allocation9 + $0xb0] sm:$0xff]
    %v3400 = vld [vmem:[#allocation9 + $0xb8] sm:$0xff]
    %v3401 = vld [vmem:[#allocation9 + $0xc0] sm:$0xff]
    %v3402 = vld [vmem:[#allocation9 + $0xc8] sm:$0xff]
    %v3403 = vld [vmem:[#allocation9 + $0xd0] sm:$0xff]
    %v3404 = vld [vmem:[#allocation9 + $0xd8] sm:$0xff]
    %v3405 = vld [vmem:[#allocation9 + $0xe0] sm:$0xff]
    %v3406 = vld [vmem:[#allocation9 + $0xe8] sm:$0xff]
    %v3407 = vld [vmem:[#allocation9 + $0xf0] sm:$0xff]
    %v3408 = vld [vmem:[#allocation9 + $0xf8] sm:$0xff]
    %v3409 = vld [vmem:[#allocation9 + $0x100] sm:$0xff]
    %v3410 = vld [vmem:[#allocation9 + $0x108] sm:$0xff]
    %v3411 = vld [vmem:[#allocation9 + $0x110] sm:$0xff]
    %v3412 = vld [vmem:[#allocation9 + $0x118] sm:$0xff]
    %v3413 = vld [vmem:[#allocation9 + $0x120] sm:$0xff]
    %v3414 = vld [vmem:[#allocation9 + $0x128] sm:$0xff]
    %v3415 = vld [vmem:[#allocation9 + $0x130] sm:$0xff]
    %v3416 = vld [vmem:[#allocation9 + $0x138] sm:$0xff]
    %v3417 = vld [vmem:[#allocation9 + $0x140] sm:$0xff]
    %v3418 = vld [vmem:[#allocation9 + $0x148] sm:$0xff]
    %v3419 = vld [vmem:[#allocation9 + $0x150] sm:$0xff]
    %v3420 = vld [vmem:[#allocation9 + $0x158] sm:$0xff]
    %v3421 = vld [vmem:[#allocation9 + $0x160] sm:$0xff]
    %v3422 = vld [vmem:[#allocation9 + $0x168] sm:$0xff]
    %v3423 = vld [vmem:[#allocation9 + $0x170] sm:$0xff]
    %v3424 = vld [vmem:[#allocation9 + $0x178] sm:$0xff]
    %v3425 = vld [vmem:[#allocation9 + $0x180] sm:$0xff]
    %v3426 = vld [vmem:[#allocation9 + $0x188] sm:$0xff]
    %v3427 = vld [vmem:[#allocation9 + $0x190] sm:$0xff]
    %v3428 = vld [vmem:[#allocation9 + $0x198] sm:$0xff]
    %v3429 = vld [vmem:[#allocation9 + $0x1a0] sm:$0xff]
    %v3430 = vld [vmem:[#allocation9 + $0x1a8] sm:$0xff]
    %v3431 = vld [vmem:[#allocation9 + $0x1b0] sm:$0xff]
    %v3432 = vld [vmem:[#allocation9 + $0x1b8] sm:$0xff]
    %v3433 = vld [vmem:[#allocation9 + $0x1c0] sm:$0xff]
    %v3434 = vld [vmem:[#allocation9 + $0x1c8] sm:$0xff]
    %v3435 = vld [vmem:[#allocation9 + $0x1d0] sm:$0xff]
    %v3436 = vld [vmem:[#allocation9 + $0x1d8] sm:$0xff]
    %v3437 = vld [vmem:[#allocation9 + $0x1e0] sm:$0xff]
    %v3438 = vld [vmem:[#allocation9 + $0x1e8] sm:$0xff]
    %v3439 = vld [vmem:[#allocation9 + $0x1f0] sm:$0xff]
    %v3440 = vld [vmem:[#allocation9 + $0x1f8] sm:$0xff]
    %v3441 = vld [vmem:[#allocation9 + $0x200] sm:$0xff]
    %v3442 = vld [vmem:[#allocation9 + $0x208] sm:$0xff]
    %v3443 = vld [vmem:[#allocation9 + $0x210] sm:$0xff]
    %v3444 = vld [vmem:[#allocation9 + $0x218] sm:$0xff]
    %v3445 = vld [vmem:[#allocation9 + $0x220] sm:$0xff]
    %v3446 = vld [vmem:[#allocation9 + $0x228] sm:$0xff]
    %v3447 = vld [vmem:[#allocation9 + $0x230] sm:$0xff]
    %v3448 = vld [vmem:[#allocation9 + $0x238] sm:$0xff]
    %v3449 = vld [vmem:[#allocation9 + $0x240] sm:$0xff]
    %v3450 = vld [vmem:[#allocation9 + $0x248] sm:$0xff]
    %v3451 = vld [vmem:[#allocation9 + $0x250] sm:$0xff]
    %v3452 = vld [vmem:[#allocation9 + $0x258] sm:$0xff]
    %v3453 = vld [vmem:[#allocation9 + $0x260] sm:$0xff]
    %v3454 = vld [vmem:[#allocation9 + $0x268] sm:$0xff]
    %v3455 = vld [vmem:[#allocation9 + $0x270] sm:$0xff]
    %v3456 = vld [vmem:[#allocation9 + $0x278] sm:$0xff]
    %v3457 = vld [vmem:[#allocation9 + $0x280] sm:$0xff]
    %v3458 = vld [vmem:[#allocation9 + $0x288] sm:$0xff]
    %v3459 = vld [vmem:[#allocation9 + $0x290] sm:$0xff]
    %v3460 = vld [vmem:[#allocation9 + $0x298] sm:$0xff]
    %v3461 = vld [vmem:[#allocation9 + $0x2a0] sm:$0xff]
    %v3462 = vld [vmem:[#allocation9 + $0x2a8] sm:$0xff]
    %v3463 = vld [vmem:[#allocation9 + $0x2b0] sm:$0xff]
    %v3464 = vld [vmem:[#allocation9 + $0x2b8] sm:$0xff]
    %v3465 = vld [vmem:[#allocation9 + $0x2c0] sm:$0xff]
    %v3466 = vld [vmem:[#allocation9 + $0x2c8] sm:$0xff]
    %v3467 = vld [vmem:[#allocation9 + $0x2d0] sm:$0xff]
    %v3468 = vld [vmem:[#allocation9 + $0x2d8] sm:$0xff]
    %v3469 = vld [vmem:[#allocation9 + $0x2e0] sm:$0xff]
    %v3470 = vld [vmem:[#allocation9 + $0x2e8] sm:$0xff]
    %v3471 = vld [vmem:[#allocation9 + $0x2f0] sm:$0xff]
    %v3472 = vld [vmem:[#allocation9 + $0x2f8] sm:$0xff]
    %v3473 = vld [vmem:[#allocation9 + $0x300] sm:$0xff]
    %v3474 = vld [vmem:[#allocation9 + $0x308] sm:$0xff]
    %v3475 = vld [vmem:[#allocation9 + $0x310] sm:$0xff]
    %v3476 = vld [vmem:[#allocation9 + $0x318] sm:$0xff]
    %v3477 = vld [vmem:[#allocation9 + $0x320] sm:$0xff]
    %v3478 = vld [vmem:[#allocation9 + $0x328] sm:$0xff]
    %v3479 = vld [vmem:[#allocation9 + $0x330] sm:$0xff]
    %v3480 = vld [vmem:[#allocation9 + $0x338] sm:$0xff]
    %v3481 = vld [vmem:[#allocation9 + $0x340] sm:$0xff]
    %v3482 = vld [vmem:[#allocation9 + $0x348] sm:$0xff]
    %v3483 = vld [vmem:[#allocation9 + $0x350] sm:$0xff]
    %v3484 = vld [vmem:[#allocation9 + $0x358] sm:$0xff]
    %v3485 = vld [vmem:[#allocation9 + $0x360] sm:$0xff]
    %v3486 = vld [vmem:[#allocation9 + $0x368] sm:$0xff]
    %v3487 = vld [vmem:[#allocation9 + $0x370] sm:$0xff]
    %v3488 = vld [vmem:[#allocation9 + $0x378] sm:$0xff]
    %v3489 = vld [vmem:[#allocation9 + $0x380] sm:$0xff]
    %v3490 = vld [vmem:[#allocation9 + $0x388] sm:$0xff]
    %v3491 = vld [vmem:[#allocation9 + $0x390] sm:$0xff]
    %v3492 = vld [vmem:[#allocation9 + $0x398] sm:$0xff]
    %v3493 = vld [vmem:[#allocation9 + $0x3a0] sm:$0xff]
    %v3494 = vld [vmem:[#allocation9 + $0x3a8] sm:$0xff]
    %v3495 = vld [vmem:[#allocation9 + $0x3b0] sm:$0xff]
    %v3496 = vld [vmem:[#allocation9 + $0x3b8] sm:$0xff]
    %v3497 = vld [vmem:[#allocation9 + $0x3c0] sm:$0xff]
    %v3498 = vld [vmem:[#allocation9 + $0x3c8] sm:$0xff]
    %v3499 = vld [vmem:[#allocation9 + $0x3d0] sm:$0xff]
    %v3500 = vld [vmem:[#allocation9 + $0x3d8] sm:$0xff]
    %v3501 = vld [vmem:[#allocation9 + $0x3e0] sm:$0xff]
    %v3502 = vld [vmem:[#allocation9 + $0x3e8] sm:$0xff]
    %v3503 = vld [vmem:[#allocation9 + $0x3f0] sm:$0xff]
    %v3504 = vld [vmem:[#allocation9 + $0x3f8] sm:$0xff]
    %v3506 = vrot.slane %v3374, 2
    %v3507 = vrot.slane %v3376, 2
    %3510 = vmatpush.msra.mxu0 %v3437
    %3511 = vmatpush.msra.mxu0 %v3433
    %3512 = vmatpush.msra.mxu0 %v3429
    %3513 = vmatpush.msra.mxu0 %v3425
    %3514 = vmatpush.msra.mxu0 %v3421
    %3515 = vmatpush.msra.mxu0 %v3417
    %3516 = vmatpush.msra.mxu0 %v3413
    %3517 = vmatpush.msra.mxu0 %v3409
    %3518 = vmatpush.msra.mxu0 %v3405
    %3519 = vmatpush.msra.mxu0 %v3401
    %3520 = vmatpush.msra.mxu0 %v3397
    %3521 = vmatpush.msra.mxu0 %v3393
    %3522 = vmatpush.msra.mxu0 %v3389
    %3523 = vmatpush.msra.mxu0 %v3385
    %3524 = vmatpush.msra.mxu0 %v3381
    %3525 = vmatpush.msra.mxu0 %v3377
    %3526 = vmatmul.f32.gmra.mxu0 %v3506
    %v3527 = vpop.f32.mrf.mxu0
    %v3528 = vadd.f32 %v233, %v3527
    %3529 = vdwg.mxu0
    %3530 = vmatpush.msra.mxu0 %v3501
    %3531 = vmatpush.msra.mxu0 %v3497
    %3532 = vmatpush.msra.mxu0 %v3493
    %3533 = vmatpush.msra.mxu0 %v3489
    %3534 = vmatpush.msra.mxu0 %v3485
    %3535 = vmatpush.msra.mxu0 %v3481
    %3536 = vmatpush.msra.mxu0 %v3477
    %3537 = vmatpush.msra.mxu0 %v3473
    %3538 = vmatpush.msra.mxu0 %v3469
    %3539 = vmatpush.msra.mxu0 %v3465
    %3540 = vmatpush.msra.mxu0 %v3461
    %3541 = vmatpush.msra.mxu0 %v3457
    %3542 = vmatpush.msra.mxu0 %v3453
    %3543 = vmatpush.msra.mxu0 %v3449
    %3544 = vmatpush.msra.mxu0 %v3445
    %3545 = vmatpush.msra.mxu0 %v3441
    %3546 = vmatmul.f32.gmra.mxu0 %v3507
    %v3547 = vpop.f32.mrf.mxu0
    %v3548 = vadd.f32 %v3528, %v3547
    %3549 = vdwg.mxu0
    %3550 = vmatpush.msra.mxu0 %v3438
    %3551 = vmatpush.msra.mxu0 %v3434
    %3552 = vmatpush.msra.mxu0 %v3430
    %3553 = vmatpush.msra.mxu0 %v3426
    %3554 = vmatpush.msra.mxu0 %v3422
    %3555 = vmatpush.msra.mxu0 %v3418
    %3556 = vmatpush.msra.mxu0 %v3414
    %3557 = vmatpush.msra.mxu0 %v3410
    %3558 = vmatpush.msra.mxu0 %v3406
    %3559 = vmatpush.msra.mxu0 %v3402
    %3560 = vmatpush.msra.mxu0 %v3398
    %3561 = vmatpush.msra.mxu0 %v3394
    %3562 = vmatpush.msra.mxu0 %v3390
    %3563 = vmatpush.msra.mxu0 %v3386
    %3564 = vmatpush.msra.mxu0 %v3382
    %3565 = vmatpush.msra.mxu0 %v3378
    %3566 = vmatmul.f32.gmra.mxu0 %v3506
    %v3567 = vpop.f32.mrf.mxu0
    %v3568 = vadd.f32 %v234, %v3567
    %3569 = vdwg.mxu0
    %3570 = vmatpush.msra.mxu0 %v3502
    %3571 = vmatpush.msra.mxu0 %v3498
    %3572 = vmatpush.msra.mxu0 %v3494
    %3573 = vmatpush.msra.mxu0 %v3490
    %3574 = vmatpush.msra.mxu0 %v3486
    %3575 = vmatpush.msra.mxu0 %v3482
    %3576 = vmatpush.msra.mxu0 %v3478
    %3577 = vmatpush.msra.mxu0 %v3474
    %3578 = vmatpush.msra.mxu0 %v3470
    %3579 = vmatpush.msra.mxu0 %v3466
    %3580 = vmatpush.msra.mxu0 %v3462
    %3581 = vmatpush.msra.mxu0 %v3458
    %3582 = vmatpush.msra.mxu0 %v3454
    %3583 = vmatpush.msra.mxu0 %v3450
    %3584 = vmatpush.msra.mxu0 %v3446
    %3585 = vmatpush.msra.mxu0 %v3442
    %3586 = vmatmul.f32.gmra.mxu0 %v3507
    %v3587 = vpop.f32.mrf.mxu0
    %v3588 = vadd.f32 %v3568, %v3587
    %3589 = vdwg.mxu0
    %3590 = vmatpush.msra.mxu0 %v3439
    %3591 = vmatpush.msra.mxu0 %v3435
    %3592 = vmatpush.msra.mxu0 %v3431
    %3593 = vmatpush.msra.mxu0 %v3427
    %3594 = vmatpush.msra.mxu0 %v3423
    %3595 = vmatpush.msra.mxu0 %v3419
    %3596 = vmatpush.msra.mxu0 %v3415
    %3597 = vmatpush.msra.mxu0 %v3411
    %3598 = vmatpush.msra.mxu0 %v3407
    %3599 = vmatpush.msra.mxu0 %v3403
    %3600 = vmatpush.msra.mxu0 %v3399
    %3601 = vmatpush.msra.mxu0 %v3395
    %3602 = vmatpush.msra.mxu0 %v3391
    %3603 = vmatpush.msra.mxu0 %v3387
    %3604 = vmatpush.msra.mxu0 %v3383
    %3605 = vmatpush.msra.mxu0 %v3379
    %3606 = vmatmul.f32.gmra.mxu0 %v3506
    %v3607 = vpop.f32.mrf.mxu0
    %v3608 = vadd.f32 %v235, %v3607
    %3609 = vdwg.mxu0
    %3610 = vmatpush.msra.mxu0 %v3503
    %3611 = vmatpush.msra.mxu0 %v3499
    %3612 = vmatpush.msra.mxu0 %v3495
    %3613 = vmatpush.msra.mxu0 %v3491
    %3614 = vmatpush.msra.mxu0 %v3487
    %3615 = vmatpush.msra.mxu0 %v3483
    %3616 = vmatpush.msra.mxu0 %v3479
    %3617 = vmatpush.msra.mxu0 %v3475
    %3618 = vmatpush.msra.mxu0 %v3471
    %3619 = vmatpush.msra.mxu0 %v3467
    %3620 = vmatpush.msra.mxu0 %v3463
    %3621 = vmatpush.msra.mxu0 %v3459
    %3622 = vmatpush.msra.mxu0 %v3455
    %3623 = vmatpush.msra.mxu0 %v3451
    %3624 = vmatpush.msra.mxu0 %v3447
    %3625 = vmatpush.msra.mxu0 %v3443
    %3626 = vmatmul.f32.gmra.mxu0 %v3507
    %v3627 = vpop.f32.mrf.mxu0
    %v3628 = vadd.f32 %v3608, %v3627
    %3629 = vdwg.mxu0
    %3630 = vmatpush.msra.mxu0 %v3440
    %3631 = vmatpush.msra.mxu0 %v3436
    %3632 = vmatpush.msra.mxu0 %v3432
    %3633 = vmatpush.msra.mxu0 %v3428
    %3634 = vmatpush.msra.mxu0 %v3424
    %3635 = vmatpush.msra.mxu0 %v3420
    %3636 = vmatpush.msra.mxu0 %v3416
    %3637 = vmatpush.msra.mxu0 %v3412
    %3638 = vmatpush.msra.mxu0 %v3408
    %3639 = vmatpush.msra.mxu0 %v3404
    %3640 = vmatpush.msra.mxu0 %v3400
    %3641 = vmatpush.msra.mxu0 %v3396
    %3642 = vmatpush.msra.mxu0 %v3392
    %3643 = vmatpush.msra.mxu0 %v3388
    %3644 = vmatpush.msra.mxu0 %v3384
    %3645 = vmatpush.msra.mxu0 %v3380
    %3646 = vmatmul.f32.gmra.mxu0 %v3506
    %v3647 = vpop.f32.mrf.mxu0
    %v3648 = vadd.f32 %v236, %v3647
    %3649 = vdwg.mxu0
    %3650 = vmatpush.msra.mxu0 %v3504
    %3651 = vmatpush.msra.mxu0 %v3500
    %3652 = vmatpush.msra.mxu0 %v3496
    %3653 = vmatpush.msra.mxu0 %v3492
    %3654 = vmatpush.msra.mxu0 %v3488
    %3655 = vmatpush.msra.mxu0 %v3484
    %3656 = vmatpush.msra.mxu0 %v3480
    %3657 = vmatpush.msra.mxu0 %v3476
    %3658 = vmatpush.msra.mxu0 %v3472
    %3659 = vmatpush.msra.mxu0 %v3468
    %3660 = vmatpush.msra.mxu0 %v3464
    %3661 = vmatpush.msra.mxu0 %v3460
    %3662 = vmatpush.msra.mxu0 %v3456
    %3663 = vmatpush.msra.mxu0 %v3452
    %3664 = vmatpush.msra.mxu0 %v3448
    %3665 = vmatpush.msra.mxu0 %v3444
    %3666 = vmatmul.f32.gmra.mxu0 %v3507
    %v3667 = vpop.f32.mrf.mxu0
    %v3668 = vadd.f32 %v3648, %v3667
    %3669 = vdwg.mxu0
    %v3670 = vxor.u32 %v3548, 2147483648
    %v3671 = vmul.f32 %v3670, 1.442695
    %v3672 = vpow.pop %v3671
    %v3673 = vadd.f32 %v3672, 1.0
    %v3674 = vrcp.pop %v3673
    %v3675 = vmul.f32 %v3673, %v3674
    %v3676 = vsub.f32 1.0, %v3675
    %v3677 = vmul.f32 %v3674, %v3676
    %v3678 = vadd.f32 %v3674, %v3677
    %vm3679 = vweird.f32 %v3673
    %vm3680 = vweird.f32 %v3674
    %vm3681 = vmor %vm3679, %vm3680
    %v3682 = vsel %vm3681, %v3674, %v3678
    %v3683 = vand.u32 2147483647, %v3673
    %vm3684 = vcmp.eq.f32.partialorder %v3683, 8.507059e+37
    %v3685 = vand.u32 %v3673, 2147483648
    %v3686 = vor.u32 1.1754944e-38, %v3685
    %v3687 = vsel %vm3684, %v3686, %v3682
    %v3688 = vmul.f32 1.0, %v3687
    %v3689 = vxor.u32 %v3588, 2147483648
    %v3690 = vmul.f32 %v3689, 1.442695
    %v3691 = vpow.pop %v3690
    %v3692 = vadd.f32 %v3691, 1.0
    %v3693 = vrcp.pop %v3692
    %v3694 = vmul.f32 %v3692, %v3693
    %v3695 = vsub.f32 1.0, %v3694
    %v3696 = vmul.f32 %v3693, %v3695
    %v3697 = vadd.f32 %v3693, %v3696
    %vm3698 = vweird.f32 %v3692
    %vm3699 = vweird.f32 %v3693
    %vm3700 = vmor %vm3698, %vm3699
    %v3701 = vsel %vm3700, %v3693, %v3697
    %v3702 = vand.u32 2147483647, %v3692
    %vm3703 = vcmp.eq.f32.partialorder %v3702, 8.507059e+37
    %v3704 = vand.u32 %v3692, 2147483648
    %v3705 = vor.u32 1.1754944e-38, %v3704
    %v3706 = vsel %vm3703, %v3705, %v3701
    %v3707 = vmul.f32 1.0, %v3706
    %v3708 = vtanh.pop %v3628
    %v3709 = vxor.u32 %v3668, 2147483648
    %v3710 = vmul.f32 %v3709, 1.442695
    %v3711 = vpow.pop %v3710
    %v3712 = vadd.f32 %v3711, 1.0
    %v3713 = vrcp.pop %v3712
    %v3714 = vmul.f32 %v3712, %v3713
    %v3715 = vsub.f32 1.0, %v3714
    %v3716 = vmul.f32 %v3713, %v3715
    %v3717 = vadd.f32 %v3713, %v3716
    %vm3718 = vweird.f32 %v3712
    %vm3719 = vweird.f32 %v3713
    %vm3720 = vmor %vm3718, %vm3719
    %v3721 = vsel %vm3720, %v3713, %v3717
    %v3722 = vand.u32 2147483647, %v3712
    %vm3723 = vcmp.eq.f32.partialorder %v3722, 8.507059e+37
    %v3724 = vand.u32 %v3712, 2147483648
    %v3725 = vor.u32 1.1754944e-38, %v3724
    %v3726 = vsel %vm3723, %v3725, %v3721
    %v3727 = vmul.f32 1.0, %v3726
    %v3728 = vmul.f32 %v3707, %v3141
    %v3729 = vmul.f32 %v3688, %v3708
    %v3730 = vadd.f32 %v3728, %v3729
    %v3731 = vtanh.pop %v3730
    %v3732 = vmul.f32 %v3727, %v3731
    %3733 = vst [vmem:[#allocation3 + $0xa] sm:$0x3] %v3732
    %v3734 = vld [vmem:[#allocation2 + $0x20] sm:$0x30]
    %v3735 = vld [vmem:[#allocation2 + $0x28] sm:$0x30]
    %v3736 = vld [vmem:[#allocation2 + $0x30] sm:$0x30]
    %v3737 = vld [vmem:[#allocation2 + $0x38] sm:$0x30]
    %v3738 = vld [vmem:[#allocation7] sm:$0xff]
    %v3739 = vld [vmem:[#allocation7 + $0x8] sm:$0xff]
    %v3740 = vld [vmem:[#allocation7 + $0x10] sm:$0xff]
    %v3741 = vld [vmem:[#allocation7 + $0x18] sm:$0xff]
    %v3742 = vld [vmem:[#allocation7 + $0x20] sm:$0xff]
    %v3743 = vld [vmem:[#allocation7 + $0x28] sm:$0xff]
    %v3744 = vld [vmem:[#allocation7 + $0x30] sm:$0xff]
    %v3745 = vld [vmem:[#allocation7 + $0x38] sm:$0xff]
    %v3746 = vld [vmem:[#allocation7 + $0x40] sm:$0xff]
    %v3747 = vld [vmem:[#allocation7 + $0x48] sm:$0xff]
    %v3748 = vld [vmem:[#allocation7 + $0x50] sm:$0xff]
    %v3749 = vld [vmem:[#allocation7 + $0x58] sm:$0xff]
    %v3750 = vld [vmem:[#allocation7 + $0x60] sm:$0xff]
    %v3751 = vld [vmem:[#allocation7 + $0x68] sm:$0xff]
    %v3752 = vld [vmem:[#allocation7 + $0x70] sm:$0xff]
    %v3753 = vld [vmem:[#allocation7 + $0x78] sm:$0xff]
    %v3754 = vld [vmem:[#allocation7 + $0x80] sm:$0xff]
    %v3755 = vld [vmem:[#allocation7 + $0x88] sm:$0xff]
    %v3756 = vld [vmem:[#allocation7 + $0x90] sm:$0xff]
    %v3757 = vld [vmem:[#allocation7 + $0x98] sm:$0xff]
    %v3758 = vld [vmem:[#allocation7 + $0xa0] sm:$0xff]
    %v3759 = vld [vmem:[#allocation7 + $0xa8] sm:$0xff]
    %v3760 = vld [vmem:[#allocation7 + $0xb0] sm:$0xff]
    %v3761 = vld [vmem:[#allocation7 + $0xb8] sm:$0xff]
    %v3762 = vld [vmem:[#allocation7 + $0xc0] sm:$0xff]
    %v3763 = vld [vmem:[#allocation7 + $0xc8] sm:$0xff]
    %v3764 = vld [vmem:[#allocation7 + $0xd0] sm:$0xff]
    %v3765 = vld [vmem:[#allocation7 + $0xd8] sm:$0xff]
    %v3766 = vld [vmem:[#allocation7 + $0xe0] sm:$0xff]
    %v3767 = vld [vmem:[#allocation7 + $0xe8] sm:$0xff]
    %v3768 = vld [vmem:[#allocation7 + $0xf0] sm:$0xff]
    %v3769 = vld [vmem:[#allocation7 + $0xf8] sm:$0xff]
    %v3770 = vld [vmem:[#allocation7 + $0x100] sm:$0xff]
    %v3771 = vld [vmem:[#allocation7 + $0x108] sm:$0xff]
    %v3772 = vld [vmem:[#allocation7 + $0x110] sm:$0xff]
    %v3773 = vld [vmem:[#allocation7 + $0x118] sm:$0xff]
    %v3774 = vld [vmem:[#allocation7 + $0x120] sm:$0xff]
    %v3775 = vld [vmem:[#allocation7 + $0x128] sm:$0xff]
    %v3776 = vld [vmem:[#allocation7 + $0x130] sm:$0xff]
    %v3777 = vld [vmem:[#allocation7 + $0x138] sm:$0xff]
    %v3778 = vld [vmem:[#allocation7 + $0x140] sm:$0xff]
    %v3779 = vld [vmem:[#allocation7 + $0x148] sm:$0xff]
    %v3780 = vld [vmem:[#allocation7 + $0x150] sm:$0xff]
    %v3781 = vld [vmem:[#allocation7 + $0x158] sm:$0xff]
    %v3782 = vld [vmem:[#allocation7 + $0x160] sm:$0xff]
    %v3783 = vld [vmem:[#allocation7 + $0x168] sm:$0xff]
    %v3784 = vld [vmem:[#allocation7 + $0x170] sm:$0xff]
    %v3785 = vld [vmem:[#allocation7 + $0x178] sm:$0xff]
    %v3786 = vld [vmem:[#allocation7 + $0x180] sm:$0xff]
    %v3787 = vld [vmem:[#allocation7 + $0x188] sm:$0xff]
    %v3788 = vld [vmem:[#allocation7 + $0x190] sm:$0xff]
    %v3789 = vld [vmem:[#allocation7 + $0x198] sm:$0xff]
    %v3790 = vld [vmem:[#allocation7 + $0x1a0] sm:$0xff]
    %v3791 = vld [vmem:[#allocation7 + $0x1a8] sm:$0xff]
    %v3792 = vld [vmem:[#allocation7 + $0x1b0] sm:$0xff]
    %v3793 = vld [vmem:[#allocation7 + $0x1b8] sm:$0xff]
    %v3794 = vld [vmem:[#allocation7 + $0x1c0] sm:$0xff]
    %v3795 = vld [vmem:[#allocation7 + $0x1c8] sm:$0xff]
    %v3796 = vld [vmem:[#allocation7 + $0x1d0] sm:$0xff]
    %v3797 = vld [vmem:[#allocation7 + $0x1d8] sm:$0xff]
    %v3798 = vld [vmem:[#allocation7 + $0x1e0] sm:$0xff]
    %v3799 = vld [vmem:[#allocation7 + $0x1e8] sm:$0xff]
    %v3800 = vld [vmem:[#allocation7 + $0x1f0] sm:$0xff]
    %v3801 = vld [vmem:[#allocation7 + $0x1f8] sm:$0xff]
    %3802 = vmatpush.msra.mxu0 %v3798
    %3803 = vmatpush.msra.mxu0 %v3794
    %3804 = vmatpush.msra.mxu0 %v3790
    %3805 = vmatpush.msra.mxu0 %v3786
    %3806 = vmatpush.msra.mxu0 %v3782
    %3807 = vmatpush.msra.mxu0 %v3778
    %3808 = vmatpush.msra.mxu0 %v3774
    %3809 = vmatpush.msra.mxu0 %v3770
    %3810 = vmatpush.msra.mxu0 %v3766
    %3811 = vmatpush.msra.mxu0 %v3762
    %3812 = vmatpush.msra.mxu0 %v3758
    %3813 = vmatpush.msra.mxu0 %v3754
    %3814 = vmatpush.msra.mxu0 %v3750
    %3815 = vmatpush.msra.mxu0 %v3746
    %3816 = vmatpush.msra.mxu0 %v3742
    %3817 = vmatpush.msra.mxu0 %v3738
    %3818 = vmatmul.f32.gmra.mxu0 %v3506
    %v3819 = vpop.f32.mrf.mxu0
    %v3820 = vadd.f32 0.0, %v3819
    %3821 = vdwg.mxu0
    %3822 = vmatpush.msra.mxu0 %v3799
    %3823 = vmatpush.msra.mxu0 %v3795
    %3824 = vmatpush.msra.mxu0 %v3791
    %3825 = vmatpush.msra.mxu0 %v3787
    %3826 = vmatpush.msra.mxu0 %v3783
    %3827 = vmatpush.msra.mxu0 %v3779
    %3828 = vmatpush.msra.mxu0 %v3775
    %3829 = vmatpush.msra.mxu0 %v3771
    %3830 = vmatpush.msra.mxu0 %v3767
    %3831 = vmatpush.msra.mxu0 %v3763
    %3832 = vmatpush.msra.mxu0 %v3759
    %3833 = vmatpush.msra.mxu0 %v3755
    %3834 = vmatpush.msra.mxu0 %v3751
    %3835 = vmatpush.msra.mxu0 %v3747
    %3836 = vmatpush.msra.mxu0 %v3743
    %3837 = vmatpush.msra.mxu0 %v3739
    %3838 = vmatmul.f32.gmra.mxu0 %v3506
    %v3839 = vpop.f32.mrf.mxu0
    %v3840 = vadd.f32 0.0, %v3839
    %3841 = vdwg.mxu0
    %3842 = vmatpush.msra.mxu0 %v3800
    %3843 = vmatpush.msra.mxu0 %v3796
    %3844 = vmatpush.msra.mxu0 %v3792
    %3845 = vmatpush.msra.mxu0 %v3788
    %3846 = vmatpush.msra.mxu0 %v3784
    %3847 = vmatpush.msra.mxu0 %v3780
    %3848 = vmatpush.msra.mxu0 %v3776
    %3849 = vmatpush.msra.mxu0 %v3772
    %3850 = vmatpush.msra.mxu0 %v3768
    %3851 = vmatpush.msra.mxu0 %v3764
    %3852 = vmatpush.msra.mxu0 %v3760
    %3853 = vmatpush.msra.mxu0 %v3756
    %3854 = vmatpush.msra.mxu0 %v3752
    %3855 = vmatpush.msra.mxu0 %v3748
    %3856 = vmatpush.msra.mxu0 %v3744
    %3857 = vmatpush.msra.mxu0 %v3740
    %3858 = vmatmul.f32.gmra.mxu0 %v3506
    %v3859 = vpop.f32.mrf.mxu0
    %v3860 = vadd.f32 0.0, %v3859
    %3861 = vdwg.mxu0
    %3862 = vmatpush.msra.mxu0 %v3801
    %3863 = vmatpush.msra.mxu0 %v3797
    %3864 = vmatpush.msra.mxu0 %v3793
    %3865 = vmatpush.msra.mxu0 %v3789
    %3866 = vmatpush.msra.mxu0 %v3785
    %3867 = vmatpush.msra.mxu0 %v3781
    %3868 = vmatpush.msra.mxu0 %v3777
    %3869 = vmatpush.msra.mxu0 %v3773
    %3870 = vmatpush.msra.mxu0 %v3769
    %3871 = vmatpush.msra.mxu0 %v3765
    %3872 = vmatpush.msra.mxu0 %v3761
    %3873 = vmatpush.msra.mxu0 %v3757
    %3874 = vmatpush.msra.mxu0 %v3753
    %3875 = vmatpush.msra.mxu0 %v3749
    %3876 = vmatpush.msra.mxu0 %v3745
    %3877 = vmatpush.msra.mxu0 %v3741
    %3878 = vmatmul.f32.gmra.mxu0 %v3506
    %v3879 = vpop.f32.mrf.mxu0
    %v3880 = vadd.f32 0.0, %v3879
    %3881 = vdwg.mxu0
    %v3886 = vrot.slane %v3820, 4
    %v3887 = vrot.slane %v3840, 4
    %v3888 = vrot.slane %v3860, 4
    %v3889 = vrot.slane %v3880, 4
    %v3894 = vadd.f32 %v3734, %v3886
    %v3895 = vadd.f32 %v3735, %v3887
    %v3896 = vadd.f32 %v3736, %v3888
    %v3897 = vadd.f32 %v3737, %v3889
    %v3898 = vxor.u32 %v3894, 2147483648
    %v3899 = vmul.f32 %v3898, 1.442695
    %v3900 = vpow.pop %v3899
    %v3901 = vadd.f32 %v3900, 1.0
    %v3902 = vrcp.pop %v3901
    %v3903 = vmul.f32 %v3901, %v3902
    %v3904 = vsub.f32 1.0, %v3903
    %v3905 = vmul.f32 %v3902, %v3904
    %v3906 = vadd.f32 %v3902, %v3905
    %vm3907 = vweird.f32 %v3901
    %vm3908 = vweird.f32 %v3902
    %vm3909 = vmor %vm3907, %vm3908
    %v3910 = vsel %vm3909, %v3902, %v3906
    %v3911 = vand.u32 2147483647, %v3901
    %vm3912 = vcmp.eq.f32.partialorder %v3911, 8.507059e+37
    %v3913 = vand.u32 %v3901, 2147483648
    %v3914 = vor.u32 1.1754944e-38, %v3913
    %v3915 = vsel %vm3912, %v3914, %v3910
    %v3916 = vmul.f32 1.0, %v3915
    %v3917 = vxor.u32 %v3895, 2147483648
    %v3918 = vmul.f32 %v3917, 1.442695
    %v3919 = vpow.pop %v3918
    %v3920 = vadd.f32 %v3919, 1.0
    %v3921 = vrcp.pop %v3920
    %v3922 = vmul.f32 %v3920, %v3921
    %v3923 = vsub.f32 1.0, %v3922
    %v3924 = vmul.f32 %v3921, %v3923
    %v3925 = vadd.f32 %v3921, %v3924
    %vm3926 = vweird.f32 %v3920
    %vm3927 = vweird.f32 %v3921
    %vm3928 = vmor %vm3926, %vm3927
    %v3929 = vsel %vm3928, %v3921, %v3925
    %v3930 = vand.u32 2147483647, %v3920
    %vm3931 = vcmp.eq.f32.partialorder %v3930, 8.507059e+37
    %v3932 = vand.u32 %v3920, 2147483648
    %v3933 = vor.u32 1.1754944e-38, %v3932
    %v3934 = vsel %vm3931, %v3933, %v3929
    %v3935 = vmul.f32 1.0, %v3934
    %v3936 = vtanh.pop %v3896
    %v3937 = vxor.u32 %v3897, 2147483648
    %v3938 = vmul.f32 %v3937, 1.442695
    %v3939 = vpow.pop %v3938
    %v3940 = vadd.f32 %v3939, 1.0
    %v3941 = vrcp.pop %v3940
    %v3942 = vmul.f32 %v3940, %v3941
    %v3943 = vsub.f32 1.0, %v3942
    %v3944 = vmul.f32 %v3941, %v3943
    %v3945 = vadd.f32 %v3941, %v3944
    %vm3946 = vweird.f32 %v3940
    %vm3947 = vweird.f32 %v3941
    %vm3948 = vmor %vm3946, %vm3947
    %v3949 = vsel %vm3948, %v3941, %v3945
    %v3950 = vand.u32 2147483647, %v3940
    %vm3951 = vcmp.eq.f32.partialorder %v3950, 8.507059e+37
    %v3952 = vand.u32 %v3940, 2147483648
    %v3953 = vor.u32 1.1754944e-38, %v3952
    %v3954 = vsel %vm3951, %v3953, %v3949
    %v3955 = vmul.f32 1.0, %v3954
    %v3957 = vrot.slane %v3372, 6
    %v3959 = vmul.f32 %v3935, %v3957
    %v3960 = vmul.f32 %v3916, %v3936
    %v3961 = vadd.f32 %v3959, %v3960
    %v3962 = vtanh.pop %v3961
    %v3963 = vmul.f32 %v3955, %v3962
    %v3965 = vrot.slane %v3732, 4
    %v3966 = vld [vmem:[#allocation9] sm:$0xff]
    %v3967 = vld [vmem:[#allocation9 + $0x8] sm:$0xff]
    %v3968 = vld [vmem:[#allocation9 + $0x10] sm:$0xff]
    %v3969 = vld [vmem:[#allocation9 + $0x18] sm:$0xff]
    %v3970 = vld [vmem:[#allocation9 + $0x20] sm:$0xff]
    %v3971 = vld [vmem:[#allocation9 + $0x28] sm:$0xff]
    %v3972 = vld [vmem:[#allocation9 + $0x30] sm:$0xff]
    %v3973 = vld [vmem:[#allocation9 + $0x38] sm:$0xff]
    %v3974 = vld [vmem:[#allocation9 + $0x40] sm:$0xff]
    %v3975 = vld [vmem:[#allocation9 + $0x48] sm:$0xff]
    %v3976 = vld [vmem:[#allocation9 + $0x50] sm:$0xff]
    %v3977 = vld [vmem:[#allocation9 + $0x58] sm:$0xff]
    %v3978 = vld [vmem:[#allocation9 + $0x60] sm:$0xff]
    %v3979 = vld [vmem:[#allocation9 + $0x68] sm:$0xff]
    %v3980 = vld [vmem:[#allocation9 + $0x70] sm:$0xff]
    %v3981 = vld [vmem:[#allocation9 + $0x78] sm:$0xff]
    %v3982 = vld [vmem:[#allocation9 + $0x80] sm:$0xff]
    %v3983 = vld [vmem:[#allocation9 + $0x88] sm:$0xff]
    %v3984 = vld [vmem:[#allocation9 + $0x90] sm:$0xff]
    %v3985 = vld [vmem:[#allocation9 + $0x98] sm:$0xff]
    %v3986 = vld [vmem:[#allocation9 + $0xa0] sm:$0xff]
    %v3987 = vld [vmem:[#allocation9 + $0xa8] sm:$0xff]
    %v3988 = vld [vmem:[#allocation9 + $0xb0] sm:$0xff]
    %v3989 = vld [vmem:[#allocation9 + $0xb8] sm:$0xff]
    %v3990 = vld [vmem:[#allocation9 + $0xc0] sm:$0xff]
    %v3991 = vld [vmem:[#allocation9 + $0xc8] sm:$0xff]
    %v3992 = vld [vmem:[#allocation9 + $0xd0] sm:$0xff]
    %v3993 = vld [vmem:[#allocation9 + $0xd8] sm:$0xff]
    %v3994 = vld [vmem:[#allocation9 + $0xe0] sm:$0xff]
    %v3995 = vld [vmem:[#allocation9 + $0xe8] sm:$0xff]
    %v3996 = vld [vmem:[#allocation9 + $0xf0] sm:$0xff]
    %v3997 = vld [vmem:[#allocation9 + $0xf8] sm:$0xff]
    %v3998 = vld [vmem:[#allocation9 + $0x100] sm:$0xff]
    %v3999 = vld [vmem:[#allocation9 + $0x108] sm:$0xff]
    %v4000 = vld [vmem:[#allocation9 + $0x110] sm:$0xff]
    %v4001 = vld [vmem:[#allocation9 + $0x118] sm:$0xff]
    %v4002 = vld [vmem:[#allocation9 + $0x120] sm:$0xff]
    %v4003 = vld [vmem:[#allocation9 + $0x128] sm:$0xff]
    %v4004 = vld [vmem:[#allocation9 + $0x130] sm:$0xff]
    %v4005 = vld [vmem:[#allocation9 + $0x138] sm:$0xff]
    %v4006 = vld [vmem:[#allocation9 + $0x140] sm:$0xff]
    %v4007 = vld [vmem:[#allocation9 + $0x148] sm:$0xff]
    %v4008 = vld [vmem:[#allocation9 + $0x150] sm:$0xff]
    %v4009 = vld [vmem:[#allocation9 + $0x158] sm:$0xff]
    %v4010 = vld [vmem:[#allocation9 + $0x160] sm:$0xff]
    %v4011 = vld [vmem:[#allocation9 + $0x168] sm:$0xff]
    %v4012 = vld [vmem:[#allocation9 + $0x170] sm:$0xff]
    %v4013 = vld [vmem:[#allocation9 + $0x178] sm:$0xff]
    %v4014 = vld [vmem:[#allocation9 + $0x180] sm:$0xff]
    %v4015 = vld [vmem:[#allocation9 + $0x188] sm:$0xff]
    %v4016 = vld [vmem:[#allocation9 + $0x190] sm:$0xff]
    %v4017 = vld [vmem:[#allocation9 + $0x198] sm:$0xff]
    %v4018 = vld [vmem:[#allocation9 + $0x1a0] sm:$0xff]
    %v4019 = vld [vmem:[#allocation9 + $0x1a8] sm:$0xff]
    %v4020 = vld [vmem:[#allocation9 + $0x1b0] sm:$0xff]
    %v4021 = vld [vmem:[#allocation9 + $0x1b8] sm:$0xff]
    %v4022 = vld [vmem:[#allocation9 + $0x1c0] sm:$0xff]
    %v4023 = vld [vmem:[#allocation9 + $0x1c8] sm:$0xff]
    %v4024 = vld [vmem:[#allocation9 + $0x1d0] sm:$0xff]
    %v4025 = vld [vmem:[#allocation9 + $0x1d8] sm:$0xff]
    %v4026 = vld [vmem:[#allocation9 + $0x1e0] sm:$0xff]
    %v4027 = vld [vmem:[#allocation9 + $0x1e8] sm:$0xff]
    %v4028 = vld [vmem:[#allocation9 + $0x1f0] sm:$0xff]
    %v4029 = vld [vmem:[#allocation9 + $0x1f8] sm:$0xff]
    %v4030 = vld [vmem:[#allocation9 + $0x200] sm:$0xff]
    %v4031 = vld [vmem:[#allocation9 + $0x208] sm:$0xff]
    %v4032 = vld [vmem:[#allocation9 + $0x210] sm:$0xff]
    %v4033 = vld [vmem:[#allocation9 + $0x218] sm:$0xff]
    %v4034 = vld [vmem:[#allocation9 + $0x220] sm:$0xff]
    %v4035 = vld [vmem:[#allocation9 + $0x228] sm:$0xff]
    %v4036 = vld [vmem:[#allocation9 + $0x230] sm:$0xff]
    %v4037 = vld [vmem:[#allocation9 + $0x238] sm:$0xff]
    %v4038 = vld [vmem:[#allocation9 + $0x240] sm:$0xff]
    %v4039 = vld [vmem:[#allocation9 + $0x248] sm:$0xff]
    %v4040 = vld [vmem:[#allocation9 + $0x250] sm:$0xff]
    %v4041 = vld [vmem:[#allocation9 + $0x258] sm:$0xff]
    %v4042 = vld [vmem:[#allocation9 + $0x260] sm:$0xff]
    %v4043 = vld [vmem:[#allocation9 + $0x268] sm:$0xff]
    %v4044 = vld [vmem:[#allocation9 + $0x270] sm:$0xff]
    %v4045 = vld [vmem:[#allocation9 + $0x278] sm:$0xff]
    %v4046 = vld [vmem:[#allocation9 + $0x280] sm:$0xff]
    %v4047 = vld [vmem:[#allocation9 + $0x288] sm:$0xff]
    %v4048 = vld [vmem:[#allocation9 + $0x290] sm:$0xff]
    %v4049 = vld [vmem:[#allocation9 + $0x298] sm:$0xff]
    %v4050 = vld [vmem:[#allocation9 + $0x2a0] sm:$0xff]
    %v4051 = vld [vmem:[#allocation9 + $0x2a8] sm:$0xff]
    %v4052 = vld [vmem:[#allocation9 + $0x2b0] sm:$0xff]
    %v4053 = vld [vmem:[#allocation9 + $0x2b8] sm:$0xff]
    %v4054 = vld [vmem:[#allocation9 + $0x2c0] sm:$0xff]
    %v4055 = vld [vmem:[#allocation9 + $0x2c8] sm:$0xff]
    %v4056 = vld [vmem:[#allocation9 + $0x2d0] sm:$0xff]
    %v4057 = vld [vmem:[#allocation9 + $0x2d8] sm:$0xff]
    %v4058 = vld [vmem:[#allocation9 + $0x2e0] sm:$0xff]
    %v4059 = vld [vmem:[#allocation9 + $0x2e8] sm:$0xff]
    %v4060 = vld [vmem:[#allocation9 + $0x2f0] sm:$0xff]
    %v4061 = vld [vmem:[#allocation9 + $0x2f8] sm:$0xff]
    %v4062 = vld [vmem:[#allocation9 + $0x300] sm:$0xff]
    %v4063 = vld [vmem:[#allocation9 + $0x308] sm:$0xff]
    %v4064 = vld [vmem:[#allocation9 + $0x310] sm:$0xff]
    %v4065 = vld [vmem:[#allocation9 + $0x318] sm:$0xff]
    %v4066 = vld [vmem:[#allocation9 + $0x320] sm:$0xff]
    %v4067 = vld [vmem:[#allocation9 + $0x328] sm:$0xff]
    %v4068 = vld [vmem:[#allocation9 + $0x330] sm:$0xff]
    %v4069 = vld [vmem:[#allocation9 + $0x338] sm:$0xff]
    %v4070 = vld [vmem:[#allocation9 + $0x340] sm:$0xff]
    %v4071 = vld [vmem:[#allocation9 + $0x348] sm:$0xff]
    %v4072 = vld [vmem:[#allocation9 + $0x350] sm:$0xff]
    %v4073 = vld [vmem:[#allocation9 + $0x358] sm:$0xff]
    %v4074 = vld [vmem:[#allocation9 + $0x360] sm:$0xff]
    %v4075 = vld [vmem:[#allocation9 + $0x368] sm:$0xff]
    %v4076 = vld [vmem:[#allocation9 + $0x370] sm:$0xff]
    %v4077 = vld [vmem:[#allocation9 + $0x378] sm:$0xff]
    %v4078 = vld [vmem:[#allocation9 + $0x380] sm:$0xff]
    %v4079 = vld [vmem:[#allocation9 + $0x388] sm:$0xff]
    %v4080 = vld [vmem:[#allocation9 + $0x390] sm:$0xff]
    %v4081 = vld [vmem:[#allocation9 + $0x398] sm:$0xff]
    %v4082 = vld [vmem:[#allocation9 + $0x3a0] sm:$0xff]
    %v4083 = vld [vmem:[#allocation9 + $0x3a8] sm:$0xff]
    %v4084 = vld [vmem:[#allocation9 + $0x3b0] sm:$0xff]
    %v4085 = vld [vmem:[#allocation9 + $0x3b8] sm:$0xff]
    %v4086 = vld [vmem:[#allocation9 + $0x3c0] sm:$0xff]
    %v4087 = vld [vmem:[#allocation9 + $0x3c8] sm:$0xff]
    %v4088 = vld [vmem:[#allocation9 + $0x3d0] sm:$0xff]
    %v4089 = vld [vmem:[#allocation9 + $0x3d8] sm:$0xff]
    %v4090 = vld [vmem:[#allocation9 + $0x3e0] sm:$0xff]
    %v4091 = vld [vmem:[#allocation9 + $0x3e8] sm:$0xff]
    %v4092 = vld [vmem:[#allocation9 + $0x3f0] sm:$0xff]
    %v4093 = vld [vmem:[#allocation9 + $0x3f8] sm:$0xff]
    %v4095 = vrot.slane %v3963, 4
    %v4096 = vrot.slane %v3965, 4
    %4099 = vmatpush.msra.mxu0 %v4026
    %4100 = vmatpush.msra.mxu0 %v4022
    %4101 = vmatpush.msra.mxu0 %v4018
    %4102 = vmatpush.msra.mxu0 %v4014
    %4103 = vmatpush.msra.mxu0 %v4010
    %4104 = vmatpush.msra.mxu0 %v4006
    %4105 = vmatpush.msra.mxu0 %v4002
    %4106 = vmatpush.msra.mxu0 %v3998
    %4107 = vmatpush.msra.mxu0 %v3994
    %4108 = vmatpush.msra.mxu0 %v3990
    %4109 = vmatpush.msra.mxu0 %v3986
    %4110 = vmatpush.msra.mxu0 %v3982
    %4111 = vmatpush.msra.mxu0 %v3978
    %4112 = vmatpush.msra.mxu0 %v3974
    %4113 = vmatpush.msra.mxu0 %v3970
    %4114 = vmatpush.msra.mxu0 %v3966
    %4115 = vmatmul.f32.gmra.mxu0 %v4095
    %v4116 = vpop.f32.mrf.mxu0
    %v4117 = vadd.f32 %v233, %v4116
    %4118 = vdwg.mxu0
    %4119 = vmatpush.msra.mxu0 %v4090
    %4120 = vmatpush.msra.mxu0 %v4086
    %4121 = vmatpush.msra.mxu0 %v4082
    %4122 = vmatpush.msra.mxu0 %v4078
    %4123 = vmatpush.msra.mxu0 %v4074
    %4124 = vmatpush.msra.mxu0 %v4070
    %4125 = vmatpush.msra.mxu0 %v4066
    %4126 = vmatpush.msra.mxu0 %v4062
    %4127 = vmatpush.msra.mxu0 %v4058
    %4128 = vmatpush.msra.mxu0 %v4054
    %4129 = vmatpush.msra.mxu0 %v4050
    %4130 = vmatpush.msra.mxu0 %v4046
    %4131 = vmatpush.msra.mxu0 %v4042
    %4132 = vmatpush.msra.mxu0 %v4038
    %4133 = vmatpush.msra.mxu0 %v4034
    %4134 = vmatpush.msra.mxu0 %v4030
    %4135 = vmatmul.f32.gmra.mxu0 %v4096
    %v4136 = vpop.f32.mrf.mxu0
    %v4137 = vadd.f32 %v4117, %v4136
    %4138 = vdwg.mxu0
    %4139 = vmatpush.msra.mxu0 %v4027
    %4140 = vmatpush.msra.mxu0 %v4023
    %4141 = vmatpush.msra.mxu0 %v4019
    %4142 = vmatpush.msra.mxu0 %v4015
    %4143 = vmatpush.msra.mxu0 %v4011
    %4144 = vmatpush.msra.mxu0 %v4007
    %4145 = vmatpush.msra.mxu0 %v4003
    %4146 = vmatpush.msra.mxu0 %v3999
    %4147 = vmatpush.msra.mxu0 %v3995
    %4148 = vmatpush.msra.mxu0 %v3991
    %4149 = vmatpush.msra.mxu0 %v3987
    %4150 = vmatpush.msra.mxu0 %v3983
    %4151 = vmatpush.msra.mxu0 %v3979
    %4152 = vmatpush.msra.mxu0 %v3975
    %4153 = vmatpush.msra.mxu0 %v3971
    %4154 = vmatpush.msra.mxu0 %v3967
    %4155 = vmatmul.f32.gmra.mxu0 %v4095
    %v4156 = vpop.f32.mrf.mxu0
    %v4157 = vadd.f32 %v234, %v4156
    %4158 = vdwg.mxu0
    %4159 = vmatpush.msra.mxu0 %v4091
    %4160 = vmatpush.msra.mxu0 %v4087
    %4161 = vmatpush.msra.mxu0 %v4083
    %4162 = vmatpush.msra.mxu0 %v4079
    %4163 = vmatpush.msra.mxu0 %v4075
    %4164 = vmatpush.msra.mxu0 %v4071
    %4165 = vmatpush.msra.mxu0 %v4067
    %4166 = vmatpush.msra.mxu0 %v4063
    %4167 = vmatpush.msra.mxu0 %v4059
    %4168 = vmatpush.msra.mxu0 %v4055
    %4169 = vmatpush.msra.mxu0 %v4051
    %4170 = vmatpush.msra.mxu0 %v4047
    %4171 = vmatpush.msra.mxu0 %v4043
    %4172 = vmatpush.msra.mxu0 %v4039
    %4173 = vmatpush.msra.mxu0 %v4035
    %4174 = vmatpush.msra.mxu0 %v4031
    %4175 = vmatmul.f32.gmra.mxu0 %v4096
    %v4176 = vpop.f32.mrf.mxu0
    %v4177 = vadd.f32 %v4157, %v4176
    %4178 = vdwg.mxu0
    %4179 = vmatpush.msra.mxu0 %v4028
    %4180 = vmatpush.msra.mxu0 %v4024
    %4181 = vmatpush.msra.mxu0 %v4020
    %4182 = vmatpush.msra.mxu0 %v4016
    %4183 = vmatpush.msra.mxu0 %v4012
    %4184 = vmatpush.msra.mxu0 %v4008
    %4185 = vmatpush.msra.mxu0 %v4004
    %4186 = vmatpush.msra.mxu0 %v4000
    %4187 = vmatpush.msra.mxu0 %v3996
    %4188 = vmatpush.msra.mxu0 %v3992
    %4189 = vmatpush.msra.mxu0 %v3988
    %4190 = vmatpush.msra.mxu0 %v3984
    %4191 = vmatpush.msra.mxu0 %v3980
    %4192 = vmatpush.msra.mxu0 %v3976
    %4193 = vmatpush.msra.mxu0 %v3972
    %4194 = vmatpush.msra.mxu0 %v3968
    %4195 = vmatmul.f32.gmra.mxu0 %v4095
    %v4196 = vpop.f32.mrf.mxu0
    %v4197 = vadd.f32 %v235, %v4196
    %4198 = vdwg.mxu0
    %4199 = vmatpush.msra.mxu0 %v4092
    %4200 = vmatpush.msra.mxu0 %v4088
    %4201 = vmatpush.msra.mxu0 %v4084
    %4202 = vmatpush.msra.mxu0 %v4080
    %4203 = vmatpush.msra.mxu0 %v4076
    %4204 = vmatpush.msra.mxu0 %v4072
    %4205 = vmatpush.msra.mxu0 %v4068
    %4206 = vmatpush.msra.mxu0 %v4064
    %4207 = vmatpush.msra.mxu0 %v4060
    %4208 = vmatpush.msra.mxu0 %v4056
    %4209 = vmatpush.msra.mxu0 %v4052
    %4210 = vmatpush.msra.mxu0 %v4048
    %4211 = vmatpush.msra.mxu0 %v4044
    %4212 = vmatpush.msra.mxu0 %v4040
    %4213 = vmatpush.msra.mxu0 %v4036
    %4214 = vmatpush.msra.mxu0 %v4032
    %4215 = vmatmul.f32.gmra.mxu0 %v4096
    %v4216 = vpop.f32.mrf.mxu0
    %v4217 = vadd.f32 %v4197, %v4216
    %4218 = vdwg.mxu0
    %4219 = vmatpush.msra.mxu0 %v4029
    %4220 = vmatpush.msra.mxu0 %v4025
    %4221 = vmatpush.msra.mxu0 %v4021
    %4222 = vmatpush.msra.mxu0 %v4017
    %4223 = vmatpush.msra.mxu0 %v4013
    %4224 = vmatpush.msra.mxu0 %v4009
    %4225 = vmatpush.msra.mxu0 %v4005
    %4226 = vmatpush.msra.mxu0 %v4001
    %4227 = vmatpush.msra.mxu0 %v3997
    %4228 = vmatpush.msra.mxu0 %v3993
    %4229 = vmatpush.msra.mxu0 %v3989
    %4230 = vmatpush.msra.mxu0 %v3985
    %4231 = vmatpush.msra.mxu0 %v3981
    %4232 = vmatpush.msra.mxu0 %v3977
    %4233 = vmatpush.msra.mxu0 %v3973
    %4234 = vmatpush.msra.mxu0 %v3969
    %4235 = vmatmul.f32.gmra.mxu0 %v4095
    %v4236 = vpop.f32.mrf.mxu0
    %v4237 = vadd.f32 %v236, %v4236
    %4238 = vdwg.mxu0
    %4239 = vmatpush.msra.mxu0 %v4093
    %4240 = vmatpush.msra.mxu0 %v4089
    %4241 = vmatpush.msra.mxu0 %v4085
    %4242 = vmatpush.msra.mxu0 %v4081
    %4243 = vmatpush.msra.mxu0 %v4077
    %4244 = vmatpush.msra.mxu0 %v4073
    %4245 = vmatpush.msra.mxu0 %v4069
    %4246 = vmatpush.msra.mxu0 %v4065
    %4247 = vmatpush.msra.mxu0 %v4061
    %4248 = vmatpush.msra.mxu0 %v4057
    %4249 = vmatpush.msra.mxu0 %v4053
    %4250 = vmatpush.msra.mxu0 %v4049
    %4251 = vmatpush.msra.mxu0 %v4045
    %4252 = vmatpush.msra.mxu0 %v4041
    %4253 = vmatpush.msra.mxu0 %v4037
    %4254 = vmatpush.msra.mxu0 %v4033
    %4255 = vmatmul.f32.gmra.mxu0 %v4096
    %v4256 = vpop.f32.mrf.mxu0
    %v4257 = vadd.f32 %v4237, %v4256
    %4258 = vdwg.mxu0
    %v4259 = vxor.u32 %v4137, 2147483648
    %v4260 = vmul.f32 %v4259, 1.442695
    %v4261 = vpow.pop %v4260
    %v4262 = vadd.f32 %v4261, 1.0
    %v4263 = vrcp.pop %v4262
    %v4264 = vmul.f32 %v4262, %v4263
    %v4265 = vsub.f32 1.0, %v4264
    %v4266 = vmul.f32 %v4263, %v4265
    %v4267 = vadd.f32 %v4263, %v4266
    %vm4268 = vweird.f32 %v4262
    %vm4269 = vweird.f32 %v4263
    %vm4270 = vmor %vm4268, %vm4269
    %v4271 = vsel %vm4270, %v4263, %v4267
    %v4272 = vand.u32 2147483647, %v4262
    %vm4273 = vcmp.eq.f32.partialorder %v4272, 8.507059e+37
    %v4274 = vand.u32 %v4262, 2147483648
    %v4275 = vor.u32 1.1754944e-38, %v4274
    %v4276 = vsel %vm4273, %v4275, %v4271
    %v4277 = vmul.f32 1.0, %v4276
    %v4278 = vxor.u32 %v4177, 2147483648
    %v4279 = vmul.f32 %v4278, 1.442695
    %v4280 = vpow.pop %v4279
    %v4281 = vadd.f32 %v4280, 1.0
    %v4282 = vrcp.pop %v4281
    %v4283 = vmul.f32 %v4281, %v4282
    %v4284 = vsub.f32 1.0, %v4283
    %v4285 = vmul.f32 %v4282, %v4284
    %v4286 = vadd.f32 %v4282, %v4285
    %vm4287 = vweird.f32 %v4281
    %vm4288 = vweird.f32 %v4282
    %vm4289 = vmor %vm4287, %vm4288
    %v4290 = vsel %vm4289, %v4282, %v4286
    %v4291 = vand.u32 2147483647, %v4281
    %vm4292 = vcmp.eq.f32.partialorder %v4291, 8.507059e+37
    %v4293 = vand.u32 %v4281, 2147483648
    %v4294 = vor.u32 1.1754944e-38, %v4293
    %v4295 = vsel %vm4292, %v4294, %v4290
    %v4296 = vmul.f32 1.0, %v4295
    %v4297 = vtanh.pop %v4217
    %v4298 = vxor.u32 %v4257, 2147483648
    %v4299 = vmul.f32 %v4298, 1.442695
    %v4300 = vpow.pop %v4299
    %v4301 = vadd.f32 %v4300, 1.0
    %v4302 = vrcp.pop %v4301
    %v4303 = vmul.f32 %v4301, %v4302
    %v4304 = vsub.f32 1.0, %v4303
    %v4305 = vmul.f32 %v4302, %v4304
    %v4306 = vadd.f32 %v4302, %v4305
    %vm4307 = vweird.f32 %v4301
    %vm4308 = vweird.f32 %v4302
    %vm4309 = vmor %vm4307, %vm4308
    %v4310 = vsel %vm4309, %v4302, %v4306
    %v4311 = vand.u32 2147483647, %v4301
    %vm4312 = vcmp.eq.f32.partialorder %v4311, 8.507059e+37
    %v4313 = vand.u32 %v4301, 2147483648
    %v4314 = vor.u32 1.1754944e-38, %v4313
    %v4315 = vsel %vm4312, %v4314, %v4310
    %v4316 = vmul.f32 1.0, %v4315
    %v4317 = vmul.f32 %v4296, %v3730
    %v4318 = vmul.f32 %v4277, %v4297
    %v4319 = vadd.f32 %v4317, %v4318
    %v4320 = vtanh.pop %v4319
    %v4321 = vmul.f32 %v4316, %v4320
    %4322 = vst [vmem:[#allocation3 + $0xc] sm:$0x3] %v4321
    %v4323 = vld [vmem:[#allocation2 + $0x20] sm:$0xc0]
    %v4324 = vld [vmem:[#allocation2 + $0x28] sm:$0xc0]
    %v4325 = vld [vmem:[#allocation2 + $0x30] sm:$0xc0]
    %v4326 = vld [vmem:[#allocation2 + $0x38] sm:$0xc0]
    %v4327 = vld [vmem:[#allocation7] sm:$0xff]
    %v4328 = vld [vmem:[#allocation7 + $0x8] sm:$0xff]
    %v4329 = vld [vmem:[#allocation7 + $0x10] sm:$0xff]
    %v4330 = vld [vmem:[#allocation7 + $0x18] sm:$0xff]
    %v4331 = vld [vmem:[#allocation7 + $0x20] sm:$0xff]
    %v4332 = vld [vmem:[#allocation7 + $0x28] sm:$0xff]
    %v4333 = vld [vmem:[#allocation7 + $0x30] sm:$0xff]
    %v4334 = vld [vmem:[#allocation7 + $0x38] sm:$0xff]
    %v4335 = vld [vmem:[#allocation7 + $0x40] sm:$0xff]
    %v4336 = vld [vmem:[#allocation7 + $0x48] sm:$0xff]
    %v4337 = vld [vmem:[#allocation7 + $0x50] sm:$0xff]
    %v4338 = vld [vmem:[#allocation7 + $0x58] sm:$0xff]
    %v4339 = vld [vmem:[#allocation7 + $0x60] sm:$0xff]
    %v4340 = vld [vmem:[#allocation7 + $0x68] sm:$0xff]
    %v4341 = vld [vmem:[#allocation7 + $0x70] sm:$0xff]
    %v4342 = vld [vmem:[#allocation7 + $0x78] sm:$0xff]
    %v4343 = vld [vmem:[#allocation7 + $0x80] sm:$0xff]
    %v4344 = vld [vmem:[#allocation7 + $0x88] sm:$0xff]
    %v4345 = vld [vmem:[#allocation7 + $0x90] sm:$0xff]
    %v4346 = vld [vmem:[#allocation7 + $0x98] sm:$0xff]
    %v4347 = vld [vmem:[#allocation7 + $0xa0] sm:$0xff]
    %v4348 = vld [vmem:[#allocation7 + $0xa8] sm:$0xff]
    %v4349 = vld [vmem:[#allocation7 + $0xb0] sm:$0xff]
    %v4350 = vld [vmem:[#allocation7 + $0xb8] sm:$0xff]
    %v4351 = vld [vmem:[#allocation7 + $0xc0] sm:$0xff]
    %v4352 = vld [vmem:[#allocation7 + $0xc8] sm:$0xff]
    %v4353 = vld [vmem:[#allocation7 + $0xd0] sm:$0xff]
    %v4354 = vld [vmem:[#allocation7 + $0xd8] sm:$0xff]
    %v4355 = vld [vmem:[#allocation7 + $0xe0] sm:$0xff]
    %v4356 = vld [vmem:[#allocation7 + $0xe8] sm:$0xff]
    %v4357 = vld [vmem:[#allocation7 + $0xf0] sm:$0xff]
    %v4358 = vld [vmem:[#allocation7 + $0xf8] sm:$0xff]
    %v4359 = vld [vmem:[#allocation7 + $0x100] sm:$0xff]
    %v4360 = vld [vmem:[#allocation7 + $0x108] sm:$0xff]
    %v4361 = vld [vmem:[#allocation7 + $0x110] sm:$0xff]
    %v4362 = vld [vmem:[#allocation7 + $0x118] sm:$0xff]
    %v4363 = vld [vmem:[#allocation7 + $0x120] sm:$0xff]
    %v4364 = vld [vmem:[#allocation7 + $0x128] sm:$0xff]
    %v4365 = vld [vmem:[#allocation7 + $0x130] sm:$0xff]
    %v4366 = vld [vmem:[#allocation7 + $0x138] sm:$0xff]
    %v4367 = vld [vmem:[#allocation7 + $0x140] sm:$0xff]
    %v4368 = vld [vmem:[#allocation7 + $0x148] sm:$0xff]
    %v4369 = vld [vmem:[#allocation7 + $0x150] sm:$0xff]
    %v4370 = vld [vmem:[#allocation7 + $0x158] sm:$0xff]
    %v4371 = vld [vmem:[#allocation7 + $0x160] sm:$0xff]
    %v4372 = vld [vmem:[#allocation7 + $0x168] sm:$0xff]
    %v4373 = vld [vmem:[#allocation7 + $0x170] sm:$0xff]
    %v4374 = vld [vmem:[#allocation7 + $0x178] sm:$0xff]
    %v4375 = vld [vmem:[#allocation7 + $0x180] sm:$0xff]
    %v4376 = vld [vmem:[#allocation7 + $0x188] sm:$0xff]
    %v4377 = vld [vmem:[#allocation7 + $0x190] sm:$0xff]
    %v4378 = vld [vmem:[#allocation7 + $0x198] sm:$0xff]
    %v4379 = vld [vmem:[#allocation7 + $0x1a0] sm:$0xff]
    %v4380 = vld [vmem:[#allocation7 + $0x1a8] sm:$0xff]
    %v4381 = vld [vmem:[#allocation7 + $0x1b0] sm:$0xff]
    %v4382 = vld [vmem:[#allocation7 + $0x1b8] sm:$0xff]
    %v4383 = vld [vmem:[#allocation7 + $0x1c0] sm:$0xff]
    %v4384 = vld [vmem:[#allocation7 + $0x1c8] sm:$0xff]
    %v4385 = vld [vmem:[#allocation7 + $0x1d0] sm:$0xff]
    %v4386 = vld [vmem:[#allocation7 + $0x1d8] sm:$0xff]
    %v4387 = vld [vmem:[#allocation7 + $0x1e0] sm:$0xff]
    %v4388 = vld [vmem:[#allocation7 + $0x1e8] sm:$0xff]
    %v4389 = vld [vmem:[#allocation7 + $0x1f0] sm:$0xff]
    %v4390 = vld [vmem:[#allocation7 + $0x1f8] sm:$0xff]
    %4391 = vmatpush.msra.mxu0 %v4387
    %4392 = vmatpush.msra.mxu0 %v4383
    %4393 = vmatpush.msra.mxu0 %v4379
    %4394 = vmatpush.msra.mxu0 %v4375
    %4395 = vmatpush.msra.mxu0 %v4371
    %4396 = vmatpush.msra.mxu0 %v4367
    %4397 = vmatpush.msra.mxu0 %v4363
    %4398 = vmatpush.msra.mxu0 %v4359
    %4399 = vmatpush.msra.mxu0 %v4355
    %4400 = vmatpush.msra.mxu0 %v4351
    %4401 = vmatpush.msra.mxu0 %v4347
    %4402 = vmatpush.msra.mxu0 %v4343
    %4403 = vmatpush.msra.mxu0 %v4339
    %4404 = vmatpush.msra.mxu0 %v4335
    %4405 = vmatpush.msra.mxu0 %v4331
    %4406 = vmatpush.msra.mxu0 %v4327
    %4407 = vmatmul.f32.gmra.mxu0 %v4095
    %v4408 = vpop.f32.mrf.mxu0
    %v4409 = vadd.f32 0.0, %v4408
    %4410 = vdwg.mxu0
    %4411 = vmatpush.msra.mxu0 %v4388
    %4412 = vmatpush.msra.mxu0 %v4384
    %4413 = vmatpush.msra.mxu0 %v4380
    %4414 = vmatpush.msra.mxu0 %v4376
    %4415 = vmatpush.msra.mxu0 %v4372
    %4416 = vmatpush.msra.mxu0 %v4368
    %4417 = vmatpush.msra.mxu0 %v4364
    %4418 = vmatpush.msra.mxu0 %v4360
    %4419 = vmatpush.msra.mxu0 %v4356
    %4420 = vmatpush.msra.mxu0 %v4352
    %4421 = vmatpush.msra.mxu0 %v4348
    %4422 = vmatpush.msra.mxu0 %v4344
    %4423 = vmatpush.msra.mxu0 %v4340
    %4424 = vmatpush.msra.mxu0 %v4336
    %4425 = vmatpush.msra.mxu0 %v4332
    %4426 = vmatpush.msra.mxu0 %v4328
    %4427 = vmatmul.f32.gmra.mxu0 %v4095
    %v4428 = vpop.f32.mrf.mxu0
    %v4429 = vadd.f32 0.0, %v4428
    %4430 = vdwg.mxu0
    %4431 = vmatpush.msra.mxu0 %v4389
    %4432 = vmatpush.msra.mxu0 %v4385
    %4433 = vmatpush.msra.mxu0 %v4381
    %4434 = vmatpush.msra.mxu0 %v4377
    %4435 = vmatpush.msra.mxu0 %v4373
    %4436 = vmatpush.msra.mxu0 %v4369
    %4437 = vmatpush.msra.mxu0 %v4365
    %4438 = vmatpush.msra.mxu0 %v4361
    %4439 = vmatpush.msra.mxu0 %v4357
    %4440 = vmatpush.msra.mxu0 %v4353
    %4441 = vmatpush.msra.mxu0 %v4349
    %4442 = vmatpush.msra.mxu0 %v4345
    %4443 = vmatpush.msra.mxu0 %v4341
    %4444 = vmatpush.msra.mxu0 %v4337
    %4445 = vmatpush.msra.mxu0 %v4333
    %4446 = vmatpush.msra.mxu0 %v4329
    %4447 = vmatmul.f32.gmra.mxu0 %v4095
    %v4448 = vpop.f32.mrf.mxu0
    %v4449 = vadd.f32 0.0, %v4448
    %4450 = vdwg.mxu0
    %4451 = vmatpush.msra.mxu0 %v4390
    %4452 = vmatpush.msra.mxu0 %v4386
    %4453 = vmatpush.msra.mxu0 %v4382
    %4454 = vmatpush.msra.mxu0 %v4378
    %4455 = vmatpush.msra.mxu0 %v4374
    %4456 = vmatpush.msra.mxu0 %v4370
    %4457 = vmatpush.msra.mxu0 %v4366
    %4458 = vmatpush.msra.mxu0 %v4362
    %4459 = vmatpush.msra.mxu0 %v4358
    %4460 = vmatpush.msra.mxu0 %v4354
    %4461 = vmatpush.msra.mxu0 %v4350
    %4462 = vmatpush.msra.mxu0 %v4346
    %4463 = vmatpush.msra.mxu0 %v4342
    %4464 = vmatpush.msra.mxu0 %v4338
    %4465 = vmatpush.msra.mxu0 %v4334
    %4466 = vmatpush.msra.mxu0 %v4330
    %4467 = vmatmul.f32.gmra.mxu0 %v4095
    %v4468 = vpop.f32.mrf.mxu0
    %v4469 = vadd.f32 0.0, %v4468
    %4470 = vdwg.mxu0
    %v4475 = vrot.slane %v4409, 2
    %v4476 = vrot.slane %v4429, 2
    %v4477 = vrot.slane %v4449, 2
    %v4478 = vrot.slane %v4469, 2
    %v4483 = vadd.f32 %v4323, %v4475
    %v4484 = vadd.f32 %v4324, %v4476
    %v4485 = vadd.f32 %v4325, %v4477
    %v4486 = vadd.f32 %v4326, %v4478
    %v4487 = vxor.u32 %v4483, 2147483648
    %v4488 = vmul.f32 %v4487, 1.442695
    %v4489 = vpow.pop %v4488
    %v4490 = vadd.f32 %v4489, 1.0
    %v4491 = vrcp.pop %v4490
    %v4492 = vmul.f32 %v4490, %v4491
    %v4493 = vsub.f32 1.0, %v4492
    %v4494 = vmul.f32 %v4491, %v4493
    %v4495 = vadd.f32 %v4491, %v4494
    %vm4496 = vweird.f32 %v4490
    %vm4497 = vweird.f32 %v4491
    %vm4498 = vmor %vm4496, %vm4497
    %v4499 = vsel %vm4498, %v4491, %v4495
    %v4500 = vand.u32 2147483647, %v4490
    %vm4501 = vcmp.eq.f32.partialorder %v4500, 8.507059e+37
    %v4502 = vand.u32 %v4490, 2147483648
    %v4503 = vor.u32 1.1754944e-38, %v4502
    %v4504 = vsel %vm4501, %v4503, %v4499
    %v4505 = vmul.f32 1.0, %v4504
    %v4506 = vxor.u32 %v4484, 2147483648
    %v4507 = vmul.f32 %v4506, 1.442695
    %v4508 = vpow.pop %v4507
    %v4509 = vadd.f32 %v4508, 1.0
    %v4510 = vrcp.pop %v4509
    %v4511 = vmul.f32 %v4509, %v4510
    %v4512 = vsub.f32 1.0, %v4511
    %v4513 = vmul.f32 %v4510, %v4512
    %v4514 = vadd.f32 %v4510, %v4513
    %vm4515 = vweird.f32 %v4509
    %vm4516 = vweird.f32 %v4510
    %vm4517 = vmor %vm4515, %vm4516
    %v4518 = vsel %vm4517, %v4510, %v4514
    %v4519 = vand.u32 2147483647, %v4509
    %vm4520 = vcmp.eq.f32.partialorder %v4519, 8.507059e+37
    %v4521 = vand.u32 %v4509, 2147483648
    %v4522 = vor.u32 1.1754944e-38, %v4521
    %v4523 = vsel %vm4520, %v4522, %v4518
    %v4524 = vmul.f32 1.0, %v4523
    %v4525 = vtanh.pop %v4485
    %v4526 = vxor.u32 %v4486, 2147483648
    %v4527 = vmul.f32 %v4526, 1.442695
    %v4528 = vpow.pop %v4527
    %v4529 = vadd.f32 %v4528, 1.0
    %v4530 = vrcp.pop %v4529
    %v4531 = vmul.f32 %v4529, %v4530
    %v4532 = vsub.f32 1.0, %v4531
    %v4533 = vmul.f32 %v4530, %v4532
    %v4534 = vadd.f32 %v4530, %v4533
    %vm4535 = vweird.f32 %v4529
    %vm4536 = vweird.f32 %v4530
    %vm4537 = vmor %vm4535, %vm4536
    %v4538 = vsel %vm4537, %v4530, %v4534
    %v4539 = vand.u32 2147483647, %v4529
    %vm4540 = vcmp.eq.f32.partialorder %v4539, 8.507059e+37
    %v4541 = vand.u32 %v4529, 2147483648
    %v4542 = vor.u32 1.1754944e-38, %v4541
    %v4543 = vsel %vm4540, %v4542, %v4538
    %v4544 = vmul.f32 1.0, %v4543
    %v4546 = vrot.slane %v3961, 6
    %v4548 = vmul.f32 %v4524, %v4546
    %v4549 = vmul.f32 %v4505, %v4525
    %v4550 = vadd.f32 %v4548, %v4549
    %v4551 = vtanh.pop %v4550
    %v4552 = vmul.f32 %v4544, %v4551
    %v4554 = vrot.slane %v4321, 2
    %v4555 = vld [vmem:[#allocation9] sm:$0xff]
    %v4556 = vld [vmem:[#allocation9 + $0x8] sm:$0xff]
    %v4557 = vld [vmem:[#allocation9 + $0x10] sm:$0xff]
    %v4558 = vld [vmem:[#allocation9 + $0x18] sm:$0xff]
    %v4559 = vld [vmem:[#allocation9 + $0x20] sm:$0xff]
    %v4560 = vld [vmem:[#allocation9 + $0x28] sm:$0xff]
    %v4561 = vld [vmem:[#allocation9 + $0x30] sm:$0xff]
    %v4562 = vld [vmem:[#allocation9 + $0x38] sm:$0xff]
    %v4563 = vld [vmem:[#allocation9 + $0x40] sm:$0xff]
    %v4564 = vld [vmem:[#allocation9 + $0x48] sm:$0xff]
    %v4565 = vld [vmem:[#allocation9 + $0x50] sm:$0xff]
    %v4566 = vld [vmem:[#allocation9 + $0x58] sm:$0xff]
    %v4567 = vld [vmem:[#allocation9 + $0x60] sm:$0xff]
    %v4568 = vld [vmem:[#allocation9 + $0x68] sm:$0xff]
    %v4569 = vld [vmem:[#allocation9 + $0x70] sm:$0xff]
    %v4570 = vld [vmem:[#allocation9 + $0x78] sm:$0xff]
    %v4571 = vld [vmem:[#allocation9 + $0x80] sm:$0xff]
    %v4572 = vld [vmem:[#allocation9 + $0x88] sm:$0xff]
    %v4573 = vld [vmem:[#allocation9 + $0x90] sm:$0xff]
    %v4574 = vld [vmem:[#allocation9 + $0x98] sm:$0xff]
    %v4575 = vld [vmem:[#allocation9 + $0xa0] sm:$0xff]
    %v4576 = vld [vmem:[#allocation9 + $0xa8] sm:$0xff]
    %v4577 = vld [vmem:[#allocation9 + $0xb0] sm:$0xff]
    %v4578 = vld [vmem:[#allocation9 + $0xb8] sm:$0xff]
    %v4579 = vld [vmem:[#allocation9 + $0xc0] sm:$0xff]
    %v4580 = vld [vmem:[#allocation9 + $0xc8] sm:$0xff]
    %v4581 = vld [vmem:[#allocation9 + $0xd0] sm:$0xff]
    %v4582 = vld [vmem:[#allocation9 + $0xd8] sm:$0xff]
    %v4583 = vld [vmem:[#allocation9 + $0xe0] sm:$0xff]
    %v4584 = vld [vmem:[#allocation9 + $0xe8] sm:$0xff]
    %v4585 = vld [vmem:[#allocation9 + $0xf0] sm:$0xff]
    %v4586 = vld [vmem:[#allocation9 + $0xf8] sm:$0xff]
    %v4587 = vld [vmem:[#allocation9 + $0x100] sm:$0xff]
    %v4588 = vld [vmem:[#allocation9 + $0x108] sm:$0xff]
    %v4589 = vld [vmem:[#allocation9 + $0x110] sm:$0xff]
    %v4590 = vld [vmem:[#allocation9 + $0x118] sm:$0xff]
    %v4591 = vld [vmem:[#allocation9 + $0x120] sm:$0xff]
    %v4592 = vld [vmem:[#allocation9 + $0x128] sm:$0xff]
    %v4593 = vld [vmem:[#allocation9 + $0x130] sm:$0xff]
    %v4594 = vld [vmem:[#allocation9 + $0x138] sm:$0xff]
    %v4595 = vld [vmem:[#allocation9 + $0x140] sm:$0xff]
    %v4596 = vld [vmem:[#allocation9 + $0x148] sm:$0xff]
    %v4597 = vld [vmem:[#allocation9 + $0x150] sm:$0xff]
    %v4598 = vld [vmem:[#allocation9 + $0x158] sm:$0xff]
    %v4599 = vld [vmem:[#allocation9 + $0x160] sm:$0xff]
    %v4600 = vld [vmem:[#allocation9 + $0x168] sm:$0xff]
    %v4601 = vld [vmem:[#allocation9 + $0x170] sm:$0xff]
    %v4602 = vld [vmem:[#allocation9 + $0x178] sm:$0xff]
    %v4603 = vld [vmem:[#allocation9 + $0x180] sm:$0xff]
    %v4604 = vld [vmem:[#allocation9 + $0x188] sm:$0xff]
    %v4605 = vld [vmem:[#allocation9 + $0x190] sm:$0xff]
    %v4606 = vld [vmem:[#allocation9 + $0x198] sm:$0xff]
    %v4607 = vld [vmem:[#allocation9 + $0x1a0] sm:$0xff]
    %v4608 = vld [vmem:[#allocation9 + $0x1a8] sm:$0xff]
    %v4609 = vld [vmem:[#allocation9 + $0x1b0] sm:$0xff]
    %v4610 = vld [vmem:[#allocation9 + $0x1b8] sm:$0xff]
    %v4611 = vld [vmem:[#allocation9 + $0x1c0] sm:$0xff]
    %v4612 = vld [vmem:[#allocation9 + $0x1c8] sm:$0xff]
    %v4613 = vld [vmem:[#allocation9 + $0x1d0] sm:$0xff]
    %v4614 = vld [vmem:[#allocation9 + $0x1d8] sm:$0xff]
    %v4615 = vld [vmem:[#allocation9 + $0x1e0] sm:$0xff]
    %v4616 = vld [vmem:[#allocation9 + $0x1e8] sm:$0xff]
    %v4617 = vld [vmem:[#allocation9 + $0x1f0] sm:$0xff]
    %v4618 = vld [vmem:[#allocation9 + $0x1f8] sm:$0xff]
    %v4619 = vld [vmem:[#allocation9 + $0x200] sm:$0xff]
    %v4620 = vld [vmem:[#allocation9 + $0x208] sm:$0xff]
    %v4621 = vld [vmem:[#allocation9 + $0x210] sm:$0xff]
    %v4622 = vld [vmem:[#allocation9 + $0x218] sm:$0xff]
    %v4623 = vld [vmem:[#allocation9 + $0x220] sm:$0xff]
    %v4624 = vld [vmem:[#allocation9 + $0x228] sm:$0xff]
    %v4625 = vld [vmem:[#allocation9 + $0x230] sm:$0xff]
    %v4626 = vld [vmem:[#allocation9 + $0x238] sm:$0xff]
    %v4627 = vld [vmem:[#allocation9 + $0x240] sm:$0xff]
    %v4628 = vld [vmem:[#allocation9 + $0x248] sm:$0xff]
    %v4629 = vld [vmem:[#allocation9 + $0x250] sm:$0xff]
    %v4630 = vld [vmem:[#allocation9 + $0x258] sm:$0xff]
    %v4631 = vld [vmem:[#allocation9 + $0x260] sm:$0xff]
    %v4632 = vld [vmem:[#allocation9 + $0x268] sm:$0xff]
    %v4633 = vld [vmem:[#allocation9 + $0x270] sm:$0xff]
    %v4634 = vld [vmem:[#allocation9 + $0x278] sm:$0xff]
    %v4635 = vld [vmem:[#allocation9 + $0x280] sm:$0xff]
    %v4636 = vld [vmem:[#allocation9 + $0x288] sm:$0xff]
    %v4637 = vld [vmem:[#allocation9 + $0x290] sm:$0xff]
    %v4638 = vld [vmem:[#allocation9 + $0x298] sm:$0xff]
    %v4639 = vld [vmem:[#allocation9 + $0x2a0] sm:$0xff]
    %v4640 = vld [vmem:[#allocation9 + $0x2a8] sm:$0xff]
    %v4641 = vld [vmem:[#allocation9 + $0x2b0] sm:$0xff]
    %v4642 = vld [vmem:[#allocation9 + $0x2b8] sm:$0xff]
    %v4643 = vld [vmem:[#allocation9 + $0x2c0] sm:$0xff]
    %v4644 = vld [vmem:[#allocation9 + $0x2c8] sm:$0xff]
    %v4645 = vld [vmem:[#allocation9 + $0x2d0] sm:$0xff]
    %v4646 = vld [vmem:[#allocation9 + $0x2d8] sm:$0xff]
    %v4647 = vld [vmem:[#allocation9 + $0x2e0] sm:$0xff]
    %v4648 = vld [vmem:[#allocation9 + $0x2e8] sm:$0xff]
    %v4649 = vld [vmem:[#allocation9 + $0x2f0] sm:$0xff]
    %v4650 = vld [vmem:[#allocation9 + $0x2f8] sm:$0xff]
    %v4651 = vld [vmem:[#allocation9 + $0x300] sm:$0xff]
    %v4652 = vld [vmem:[#allocation9 + $0x308] sm:$0xff]
    %v4653 = vld [vmem:[#allocation9 + $0x310] sm:$0xff]
    %v4654 = vld [vmem:[#allocation9 + $0x318] sm:$0xff]
    %v4655 = vld [vmem:[#allocation9 + $0x320] sm:$0xff]
    %v4656 = vld [vmem:[#allocation9 + $0x328] sm:$0xff]
    %v4657 = vld [vmem:[#allocation9 + $0x330] sm:$0xff]
    %v4658 = vld [vmem:[#allocation9 + $0x338] sm:$0xff]
    %v4659 = vld [vmem:[#allocation9 + $0x340] sm:$0xff]
    %v4660 = vld [vmem:[#allocation9 + $0x348] sm:$0xff]
    %v4661 = vld [vmem:[#allocation9 + $0x350] sm:$0xff]
    %v4662 = vld [vmem:[#allocation9 + $0x358] sm:$0xff]
    %v4663 = vld [vmem:[#allocation9 + $0x360] sm:$0xff]
    %v4664 = vld [vmem:[#allocation9 + $0x368] sm:$0xff]
    %v4665 = vld [vmem:[#allocation9 + $0x370] sm:$0xff]
    %v4666 = vld [vmem:[#allocation9 + $0x378] sm:$0xff]
    %v4667 = vld [vmem:[#allocation9 + $0x380] sm:$0xff]
    %v4668 = vld [vmem:[#allocation9 + $0x388] sm:$0xff]
    %v4669 = vld [vmem:[#allocation9 + $0x390] sm:$0xff]
    %v4670 = vld [vmem:[#allocation9 + $0x398] sm:$0xff]
    %v4671 = vld [vmem:[#allocation9 + $0x3a0] sm:$0xff]
    %v4672 = vld [vmem:[#allocation9 + $0x3a8] sm:$0xff]
    %v4673 = vld [vmem:[#allocation9 + $0x3b0] sm:$0xff]
    %v4674 = vld [vmem:[#allocation9 + $0x3b8] sm:$0xff]
    %v4675 = vld [vmem:[#allocation9 + $0x3c0] sm:$0xff]
    %v4676 = vld [vmem:[#allocation9 + $0x3c8] sm:$0xff]
    %v4677 = vld [vmem:[#allocation9 + $0x3d0] sm:$0xff]
    %v4678 = vld [vmem:[#allocation9 + $0x3d8] sm:$0xff]
    %v4679 = vld [vmem:[#allocation9 + $0x3e0] sm:$0xff]
    %v4680 = vld [vmem:[#allocation9 + $0x3e8] sm:$0xff]
    %v4681 = vld [vmem:[#allocation9 + $0x3f0] sm:$0xff]
    %v4682 = vld [vmem:[#allocation9 + $0x3f8] sm:$0xff]
    %v4684 = vrot.slane %v4552, 6
    %v4685 = vrot.slane %v4554, 6
    %4688 = vmatpush.msra.mxu0 %v4615
    %4689 = vmatpush.msra.mxu0 %v4611
    %4690 = vmatpush.msra.mxu0 %v4607
    %4691 = vmatpush.msra.mxu0 %v4603
    %4692 = vmatpush.msra.mxu0 %v4599
    %4693 = vmatpush.msra.mxu0 %v4595
    %4694 = vmatpush.msra.mxu0 %v4591
    %4695 = vmatpush.msra.mxu0 %v4587
    %4696 = vmatpush.msra.mxu0 %v4583
    %4697 = vmatpush.msra.mxu0 %v4579
    %4698 = vmatpush.msra.mxu0 %v4575
    %4699 = vmatpush.msra.mxu0 %v4571
    %4700 = vmatpush.msra.mxu0 %v4567
    %4701 = vmatpush.msra.mxu0 %v4563
    %4702 = vmatpush.msra.mxu0 %v4559
    %4703 = vmatpush.msra.mxu0 %v4555
    %4704 = vmatmul.f32.gmra.mxu0 %v4684
    %v4705 = vpop.f32.mrf.mxu0
    %v4706 = vadd.f32 %v233, %v4705
    %4707 = vdwg.mxu0
    %4708 = vmatpush.msra.mxu0 %v4679
    %4709 = vmatpush.msra.mxu0 %v4675
    %4710 = vmatpush.msra.mxu0 %v4671
    %4711 = vmatpush.msra.mxu0 %v4667
    %4712 = vmatpush.msra.mxu0 %v4663
    %4713 = vmatpush.msra.mxu0 %v4659
    %4714 = vmatpush.msra.mxu0 %v4655
    %4715 = vmatpush.msra.mxu0 %v4651
    %4716 = vmatpush.msra.mxu0 %v4647
    %4717 = vmatpush.msra.mxu0 %v4643
    %4718 = vmatpush.msra.mxu0 %v4639
    %4719 = vmatpush.msra.mxu0 %v4635
    %4720 = vmatpush.msra.mxu0 %v4631
    %4721 = vmatpush.msra.mxu0 %v4627
    %4722 = vmatpush.msra.mxu0 %v4623
    %4723 = vmatpush.msra.mxu0 %v4619
    %4724 = vmatmul.f32.gmra.mxu0 %v4685
    %v4725 = vpop.f32.mrf.mxu0
    %v4726 = vadd.f32 %v4706, %v4725
    %4727 = vdwg.mxu0
    %4728 = vmatpush.msra.mxu0 %v4616
    %4729 = vmatpush.msra.mxu0 %v4612
    %4730 = vmatpush.msra.mxu0 %v4608
    %4731 = vmatpush.msra.mxu0 %v4604
    %4732 = vmatpush.msra.mxu0 %v4600
    %4733 = vmatpush.msra.mxu0 %v4596
    %4734 = vmatpush.msra.mxu0 %v4592
    %4735 = vmatpush.msra.mxu0 %v4588
    %4736 = vmatpush.msra.mxu0 %v4584
    %4737 = vmatpush.msra.mxu0 %v4580
    %4738 = vmatpush.msra.mxu0 %v4576
    %4739 = vmatpush.msra.mxu0 %v4572
    %4740 = vmatpush.msra.mxu0 %v4568
    %4741 = vmatpush.msra.mxu0 %v4564
    %4742 = vmatpush.msra.mxu0 %v4560
    %4743 = vmatpush.msra.mxu0 %v4556
    %4744 = vmatmul.f32.gmra.mxu0 %v4684
    %v4745 = vpop.f32.mrf.mxu0
    %v4746 = vadd.f32 %v234, %v4745
    %4747 = vdwg.mxu0
    %4748 = vmatpush.msra.mxu0 %v4680
    %4749 = vmatpush.msra.mxu0 %v4676
    %4750 = vmatpush.msra.mxu0 %v4672
    %4751 = vmatpush.msra.mxu0 %v4668
    %4752 = vmatpush.msra.mxu0 %v4664
    %4753 = vmatpush.msra.mxu0 %v4660
    %4754 = vmatpush.msra.mxu0 %v4656
    %4755 = vmatpush.msra.mxu0 %v4652
    %4756 = vmatpush.msra.mxu0 %v4648
    %4757 = vmatpush.msra.mxu0 %v4644
    %4758 = vmatpush.msra.mxu0 %v4640
    %4759 = vmatpush.msra.mxu0 %v4636
    %4760 = vmatpush.msra.mxu0 %v4632
    %4761 = vmatpush.msra.mxu0 %v4628
    %4762 = vmatpush.msra.mxu0 %v4624
    %4763 = vmatpush.msra.mxu0 %v4620
    %4764 = vmatmul.f32.gmra.mxu0 %v4685
    %v4765 = vpop.f32.mrf.mxu0
    %v4766 = vadd.f32 %v4746, %v4765
    %4767 = vdwg.mxu0
    %4768 = vmatpush.msra.mxu0 %v4617
    %4769 = vmatpush.msra.mxu0 %v4613
    %4770 = vmatpush.msra.mxu0 %v4609
    %4771 = vmatpush.msra.mxu0 %v4605
    %4772 = vmatpush.msra.mxu0 %v4601
    %4773 = vmatpush.msra.mxu0 %v4597
    %4774 = vmatpush.msra.mxu0 %v4593
    %4775 = vmatpush.msra.mxu0 %v4589
    %4776 = vmatpush.msra.mxu0 %v4585
    %4777 = vmatpush.msra.mxu0 %v4581
    %4778 = vmatpush.msra.mxu0 %v4577
    %4779 = vmatpush.msra.mxu0 %v4573
    %4780 = vmatpush.msra.mxu0 %v4569
    %4781 = vmatpush.msra.mxu0 %v4565
    %4782 = vmatpush.msra.mxu0 %v4561
    %4783 = vmatpush.msra.mxu0 %v4557
    %4784 = vmatmul.f32.gmra.mxu0 %v4684
    %v4785 = vpop.f32.mrf.mxu0
    %v4786 = vadd.f32 %v235, %v4785
    %4787 = vdwg.mxu0
    %4788 = vmatpush.msra.mxu0 %v4681
    %4789 = vmatpush.msra.mxu0 %v4677
    %4790 = vmatpush.msra.mxu0 %v4673
    %4791 = vmatpush.msra.mxu0 %v4669
    %4792 = vmatpush.msra.mxu0 %v4665
    %4793 = vmatpush.msra.mxu0 %v4661
    %4794 = vmatpush.msra.mxu0 %v4657
    %4795 = vmatpush.msra.mxu0 %v4653
    %4796 = vmatpush.msra.mxu0 %v4649
    %4797 = vmatpush.msra.mxu0 %v4645
    %4798 = vmatpush.msra.mxu0 %v4641
    %4799 = vmatpush.msra.mxu0 %v4637
    %4800 = vmatpush.msra.mxu0 %v4633
    %4801 = vmatpush.msra.mxu0 %v4629
    %4802 = vmatpush.msra.mxu0 %v4625
    %4803 = vmatpush.msra.mxu0 %v4621
    %4804 = vmatmul.f32.gmra.mxu0 %v4685
    %v4805 = vpop.f32.mrf.mxu0
    %v4806 = vadd.f32 %v4786, %v4805
    %4807 = vdwg.mxu0
    %4808 = vmatpush.msra.mxu0 %v4618
    %4809 = vmatpush.msra.mxu0 %v4614
    %4810 = vmatpush.msra.mxu0 %v4610
    %4811 = vmatpush.msra.mxu0 %v4606
    %4812 = vmatpush.msra.mxu0 %v4602
    %4813 = vmatpush.msra.mxu0 %v4598
    %4814 = vmatpush.msra.mxu0 %v4594
    %4815 = vmatpush.msra.mxu0 %v4590
    %4816 = vmatpush.msra.mxu0 %v4586
    %4817 = vmatpush.msra.mxu0 %v4582
    %4818 = vmatpush.msra.mxu0 %v4578
    %4819 = vmatpush.msra.mxu0 %v4574
    %4820 = vmatpush.msra.mxu0 %v4570
    %4821 = vmatpush.msra.mxu0 %v4566
    %4822 = vmatpush.msra.mxu0 %v4562
    %4823 = vmatpush.msra.mxu0 %v4558
    %4824 = vmatmul.f32.gmra.mxu0 %v4684
    %v4825 = vpop.f32.mrf.mxu0
    %v4826 = vadd.f32 %v236, %v4825
    %4827 = vdwg.mxu0
    %4828 = vmatpush.msra.mxu0 %v4682
    %4829 = vmatpush.msra.mxu0 %v4678
    %4830 = vmatpush.msra.mxu0 %v4674
    %4831 = vmatpush.msra.mxu0 %v4670
    %4832 = vmatpush.msra.mxu0 %v4666
    %4833 = vmatpush.msra.mxu0 %v4662
    %4834 = vmatpush.msra.mxu0 %v4658
    %4835 = vmatpush.msra.mxu0 %v4654
    %4836 = vmatpush.msra.mxu0 %v4650
    %4837 = vmatpush.msra.mxu0 %v4646
    %4838 = vmatpush.msra.mxu0 %v4642
    %4839 = vmatpush.msra.mxu0 %v4638
    %4840 = vmatpush.msra.mxu0 %v4634
    %4841 = vmatpush.msra.mxu0 %v4630
    %4842 = vmatpush.msra.mxu0 %v4626
    %4843 = vmatpush.msra.mxu0 %v4622
    %4844 = vmatmul.f32.gmra.mxu0 %v4685
    %v4845 = vpop.f32.mrf.mxu0
    %v4846 = vadd.f32 %v4826, %v4845
    %4847 = vdwg.mxu0
    %v4848 = vxor.u32 %v4726, 2147483648
    %v4849 = vmul.f32 %v4848, 1.442695
    %v4850 = vpow.pop %v4849
    %v4851 = vadd.f32 %v4850, 1.0
    %v4852 = vrcp.pop %v4851
    %v4853 = vmul.f32 %v4851, %v4852
    %v4854 = vsub.f32 1.0, %v4853
    %v4855 = vmul.f32 %v4852, %v4854
    %v4856 = vadd.f32 %v4852, %v4855
    %vm4857 = vweird.f32 %v4851
    %vm4858 = vweird.f32 %v4852
    %vm4859 = vmor %vm4857, %vm4858
    %v4860 = vsel %vm4859, %v4852, %v4856
    %v4861 = vand.u32 2147483647, %v4851
    %vm4862 = vcmp.eq.f32.partialorder %v4861, 8.507059e+37
    %v4863 = vand.u32 %v4851, 2147483648
    %v4864 = vor.u32 1.1754944e-38, %v4863
    %v4865 = vsel %vm4862, %v4864, %v4860
    %v4866 = vmul.f32 1.0, %v4865
    %v4867 = vxor.u32 %v4766, 2147483648
    %v4868 = vmul.f32 %v4867, 1.442695
    %v4869 = vpow.pop %v4868
    %v4870 = vadd.f32 %v4869, 1.0
    %v4871 = vrcp.pop %v4870
    %v4872 = vmul.f32 %v4870, %v4871
    %v4873 = vsub.f32 1.0, %v4872
    %v4874 = vmul.f32 %v4871, %v4873
    %v4875 = vadd.f32 %v4871, %v4874
    %vm4876 = vweird.f32 %v4870
    %vm4877 = vweird.f32 %v4871
    %vm4878 = vmor %vm4876, %vm4877
    %v4879 = vsel %vm4878, %v4871, %v4875
    %v4880 = vand.u32 2147483647, %v4870
    %vm4881 = vcmp.eq.f32.partialorder %v4880, 8.507059e+37
    %v4882 = vand.u32 %v4870, 2147483648
    %v4883 = vor.u32 1.1754944e-38, %v4882
    %v4884 = vsel %vm4881, %v4883, %v4879
    %v4885 = vmul.f32 1.0, %v4884
    %v4886 = vtanh.pop %v4806
    %v4887 = vxor.u32 %v4846, 2147483648
    %v4888 = vmul.f32 %v4887, 1.442695
    %v4889 = vpow.pop %v4888
    %v4890 = vadd.f32 %v4889, 1.0
    %v4891 = vrcp.pop %v4890
    %v4892 = vmul.f32 %v4890, %v4891
    %v4893 = vsub.f32 1.0, %v4892
    %v4894 = vmul.f32 %v4891, %v4893
    %v4895 = vadd.f32 %v4891, %v4894
    %vm4896 = vweird.f32 %v4890
    %vm4897 = vweird.f32 %v4891
    %vm4898 = vmor %vm4896, %vm4897
    %v4899 = vsel %vm4898, %v4891, %v4895
    %v4900 = vand.u32 2147483647, %v4890
    %vm4901 = vcmp.eq.f32.partialorder %v4900, 8.507059e+37
    %v4902 = vand.u32 %v4890, 2147483648
    %v4903 = vor.u32 1.1754944e-38, %v4902
    %v4904 = vsel %vm4901, %v4903, %v4899
    %v4905 = vmul.f32 1.0, %v4904
    %v4906 = vmul.f32 %v4885, %v4319
    %v4907 = vmul.f32 %v4866, %v4886
    %v4908 = vadd.f32 %v4906, %v4907
    %v4909 = vtanh.pop %v4908
    %v4910 = vmul.f32 %v4905, %v4909
    %4911 = vst [vmem:[#allocation3 + $0xe] sm:$0x3] %v4910
    %v4912 = vld [vmem:[#allocation3] sm:$0xff]
    %v4913 = vld [vmem:[#allocation3 + $0x8] sm:$0xff]
    %v4914 = vld [vmem:[%s1] sm:$0xff]
    %v4915 = vld [vmem:[%s1 + $0x8] sm:$0xff]
    %4917 = vset.pattern.permute.xlu0 0
    %4918 = vperm.xlu0 %4917, %v4914
    %v4919 = vpop.permute.xlu0 %4918
    %4922 = vset.pattern.permute.xlu0 0
    %4923 = vperm.xlu0 %4922, %v4915
    %v4924 = vpop.permute.xlu0 %4923
    %v4926 = vmul.f32 %v4912, %v4919
    %v4927 = vmul.f32 %v4913, %v4924
    %v4928 = vld [vmem:[%s7] sm:$0xff]
    %v4929 = vld [vmem:[%s7 + $0x8] sm:$0xff]
    %v4930 = vld [vmem:[%s7 + $0x10] sm:$0xff]
    %v4931 = vld [vmem:[%s7 + $0x18] sm:$0xff]
    %v4932 = vld [vmem:[%s7 + $0x20] sm:$0xff]
    %v4933 = vld [vmem:[%s7 + $0x28] sm:$0xff]
    %v4934 = vld [vmem:[%s7 + $0x30] sm:$0xff]
    %v4935 = vld [vmem:[%s7 + $0x38] sm:$0xff]
    %v4936 = vld [vmem:[%s7 + $0x40] sm:$0xff]
    %v4937 = vld [vmem:[%s7 + $0x48] sm:$0xff]
    %v4938 = vld [vmem:[%s7 + $0x50] sm:$0xff]
    %v4939 = vld [vmem:[%s7 + $0x58] sm:$0xff]
    %v4940 = vld [vmem:[%s7 + $0x60] sm:$0xff]
    %v4941 = vld [vmem:[%s7 + $0x68] sm:$0xff]
    %v4942 = vld [vmem:[%s7 + $0x70] sm:$0xff]
    %v4943 = vld [vmem:[%s7 + $0x78] sm:$0xff]
    %v4944 = vld [vmem:[%s8] sm:$0x1]
    %v4946 = vperm.slane %v4944, 0
    %4948 = vmatpush.msra.mxu0 %v4943
    %4949 = vmatpush.msra.mxu0 %v4942
    %4950 = vmatpush.msra.mxu0 %v4941
    %4951 = vmatpush.msra.mxu0 %v4940
    %4952 = vmatpush.msra.mxu0 %v4939
    %4953 = vmatpush.msra.mxu0 %v4938
    %4954 = vmatpush.msra.mxu0 %v4937
    %4955 = vmatpush.msra.mxu0 %v4936
    %4956 = vmatpush.msra.mxu0 %v4935
    %4957 = vmatpush.msra.mxu0 %v4934
    %4958 = vmatpush.msra.mxu0 %v4933
    %4959 = vmatpush.msra.mxu0 %v4932
    %4960 = vmatpush.msra.mxu0 %v4931
    %4961 = vmatpush.msra.mxu0 %v4930
    %4962 = vmatpush.msra.mxu0 %v4929
    %4963 = vmatpush.msra.mxu0 %v4928
    %4964 = vmatmul.f32.gmra.mxu0 %v4926
    %v4965 = vpop.f32.mrf.mxu0
    %v4966 = vadd.f32 %v4946, %v4965
    %4967 = vmatmul.f32.gmra.mxu0 %v4927
    %v4968 = vpop.f32.mrf.mxu0
    %v4969 = vadd.f32 %v4946, %v4968
    %4970 = vdwg.mxu0
    %vm4971 = vcmask 220160
    %4972 = vst.msk [vmem:[#allocation10] sm:$0xff] %vm4971, %v4966
    %4973 = vst.msk [vmem:[#allocation10 + $0x8] sm:$0xff] %vm4971, %v4969
    // Predicated region
    $region50: #{tpu_custom_call.1} parent=1 // pred_check
      _
    $region51: #{tpu_custom_call.1} parent=1 // pred_check_branch
      %4975 = sbr.rel (0) target = $region53
    $region52: #{tpu_custom_call.1} parent=1 // pred_region
      %4977 = vsyncadd [#allocation6], 0
      %s4978 = sshll.u32 [#allocation10], 4
      %s4979 = int_to_ptr.vmem [resolvable:$true] %s4978
      %s4980 = sshll.u32 %s9, 4
      %s4981 = int_to_ptr.hbm [resolvable:$true] %s4980
      %4986 = dma.vmem_to_hbm [thread:$0]  %s4979, 256, %s4981, [#allocation6], 128, 128, 8
    $region53: #{tpu_custom_call.1} parent=1 // pred_fallthru
      _
    // Predicated region
    $region54: #{tpu_custom_call.1} parent=1 // pred_check
      _
    $region55: #{tpu_custom_call.1} parent=1 // pred_check_branch
      %4988 = sbr.rel (0) target = $region57
    $region56: #{tpu_custom_call.1} parent=1 // pred_region
      %4990 = dma.done [#allocation6], 256
    $region57: #{tpu_custom_call.1} parent=1 // pred_fallthru
      _
    %4991 = vsyncpa [#allocation5], 1
    %4992 = vsyncpa [#allocation8], 1
    %4993 = vsyncpa [#allocation6], 1

</llo_original>
